<compile_context>
chip_gen: v6e
topology: v6e:2x2x1
jax: 0.10.0
libtpu: 0.0.40
codegen_flags: <defaults>
</compile_context>

<pallas_src>
import functools
import math

import jax
import jax.numpy as jnp
from jax.experimental import pallas as pl
from jax.experimental.pallas import tpu as pltpu


# ----------------------------------------------------------------------------
# Kernel 1: fused per-(batch, kv-head) QKV projection + RoPE + flash attention
# ----------------------------------------------------------------------------
def _flash_attn_kernel(xq_ref, xk_ref, wq_ref, wkv_ref, cos_ref, sin_ref,
                       o_ref, q_scr, m_scr, l_scr, acc_scr,
                       *, head_dim, n_rep, block_k):
    # xq_ref  : (1, S, D)        bf16  full-sequence x (for Q projection)
    # xk_ref  : (1, tk, D)       bf16  key-tile slice of x (for K/V projection)
    # wq_ref  : (1, D, n_rep*Hd) bf16  grouped Q weights (half-split RoPE basis,
    #                                  pre-scaled by 1/sqrt(Hd))
    # wkv_ref : (1, D, 2*Hd)     bf16  fused [Wk' | Wv] for this kv head
    # cos_ref : (S, Hd/2)        f32   rotary cos table
    # sin_ref : (S, Hd/2)        f32   rotary sin table
    # o_ref   : (1, S, n_rep*Hd)       this kv-group's slice of the concat output
    # q_scr   : (S, n_rep*Hd)    bf16  rotated Q (computed once per (b, g))
    # m_scr   : (n_rep, S, 1)    f32   running max
    # l_scr   : (n_rep, S, 1)    f32   running denominator
    # acc_scr : (n_rep, S, Hd)   f32   output accumulator
    half = head_dim // 2
    k_idx = pl.program_id(2)
    n_k = pl.num_programs(2)
    compute_dtype = q_scr.dtype

    def rope(t, c, s):
        # rotate-half in the half-split basis (exactly the original interleaved
        # RoPE after the column permutation folded into wq/wk).
        t1 = t[:, :half]
        t2 = t[:, half:]
        return jnp.concatenate([t1 * c - t2 * s, t2 * c + t1 * s], axis=1)

    @pl.when(k_idx == 0)
    def _():
        # Q projection + RoPE for the n_rep query heads of this kv group,
        # done once per (batch, group) and kept resident in VMEM scratch.
        cos_q = cos_ref[...]
        sin_q = sin_ref[...]
        q = jnp.dot(xq_ref[0], wq_ref[0],
                    preferred_element_type=jnp.float32)          # (S, n_rep*Hd) f32
        for r in range(n_rep):
            qh = rope(q[:, r * head_dim:(r + 1) * head_dim], cos_q, sin_q)
            q_scr[:, r * head_dim:(r + 1) * head_dim] = qh.astype(compute_dtype)
        m_scr[...] = jnp.full(m_scr.shape, -jnp.inf, dtype=m_scr.dtype)
        l_scr[...] = jnp.zeros(l_scr.shape, l_scr.dtype)
        acc_scr[...] = jnp.zeros(acc_scr.shape, acc_scr.dtype)

    # K / V projection for this key tile — computed ONCE and shared by all
    # n_rep query heads of the group (no duplicated GQA work).
    kv = jnp.dot(xk_ref[0], wkv_ref[0],
                 preferred_element_type=jnp.float32)              # (tk, 2*Hd) f32
    row0 = pl.multiple_of(k_idx * block_k, block_k)
    cos_k = cos_ref[pl.ds(row0, block_k), :]
    sin_k = sin_ref[pl.ds(row0, block_k), :]
    k_t = rope(kv[:, :head_dim], cos_k, sin_k).astype(compute_dtype)   # (tk, Hd) bf16
    v_t = kv[:, head_dim:].astype(compute_dtype)                        # (tk, Hd) bf16

    for r in range(n_rep):
        qh = q_scr[:, r * head_dim:(r + 1) * head_dim]            # (S, Hd) bf16
        # Contract over Hd directly (no materialized k.T), bf16 MXU inputs,
        # f32 accumulation.
        s = jax.lax.dot_general(qh, k_t, (((1,), (1,)), ((), ())),
                                preferred_element_type=jnp.float32)   # (S, tk)
        m_prev = m_scr[r]                                         # (S, 1)
        m_new = jnp.maximum(m_prev, jnp.max(s, axis=-1, keepdims=True))
        alpha = jnp.exp(m_prev - m_new)
        p = jnp.exp(s - m_new)                                    # (S, tk) f32
        l_scr[r] = alpha * l_scr[r] + jnp.sum(p, axis=-1, keepdims=True)
        acc_scr[r] = alpha * acc_scr[r] + jnp.dot(
            p.astype(compute_dtype), v_t, preferred_element_type=jnp.float32)
        m_scr[r] = m_new

    @pl.when(k_idx == n_k - 1)
    def _():
        outs = []
        for r in range(n_rep):
            inv = pl.reciprocal(l_scr[r], approx=True)            # EUP, not VPU divide
            outs.append(acc_scr[r] * inv)
        # Lane-dense store of the whole group slice at once.
        o_ref[0] = jnp.concatenate(outs, axis=1).astype(o_ref.dtype)


# ----------------------------------------------------------------------------
# Kernel 2: tiled output projection  y @ wo^T
# ----------------------------------------------------------------------------
def _out_proj_kernel(y_ref, wo_ref, o_ref):
    o_ref[...] = jnp.dot(
        y_ref[...], wo_ref[...], preferred_element_type=jnp.float32
    ).astype(o_ref.dtype)


# ----------------------------------------------------------------------------
# One-time weight preprocessing (hoisted out of the per-call path)
# ----------------------------------------------------------------------------
def prepare_attention_params(wq, wk, wv, wo, n_heads, n_kv_heads,
                             compute_dtype=jnp.bfloat16):
    out_dim, dim = wq.shape
    head_dim = out_dim // n_heads
    n_rep = n_heads // n_kv_heads
    assert head_dim % 2 == 0

    # Interleaved -> half-split column permutation (rotate-half RoPE basis).
    # Applied identically to q and k, so q.k^T is unchanged; v / wo untouched.
    perm = jnp.concatenate([jnp.arange(0, head_dim, 2),
                            jnp.arange(1, head_dim, 2)])

    wq_t = wq.T.reshape(dim, n_heads, head_dim).transpose(1, 0, 2)      # (H, D, Hd)
    wk_t = wk.T.reshape(dim, n_kv_heads, head_dim).transpose(1, 0, 2)   # (Hkv, D, Hd)
    wv_t = wv.T.reshape(dim, n_kv_heads, head_dim).transpose(1, 0, 2)

    wq_t = wq_t[:, :, perm] * (head_dim ** -0.5)   # fold 1/sqrt(Hd) into Wq
    wk_t = wk_t[:, :, perm]

    # Group the n_rep query heads sharing each kv head: (n_kv, D, n_rep*Hd).
    wq_g = (wq_t.reshape(n_kv_heads, n_rep, dim, head_dim)
                 .transpose(0, 2, 1, 3)
                 .reshape(n_kv_heads, dim, n_rep * head_dim)).astype(compute_dtype)
    # Fused K|V per kv head: (n_kv, D, 2*Hd).  No jnp.repeat — K/V are computed
    # once per kv head inside the kernel.
    wkv_g = jnp.concatenate([wk_t, wv_t], axis=-1).astype(compute_dtype)
    wo_t = wo.T.astype(compute_dtype)                                   # (H*Hd, dim)
    return wq_g, wkv_g, wo_t


# ----------------------------------------------------------------------------
# Forward wrapper
# ----------------------------------------------------------------------------
def attention_forward(x, freqs_cos, freqs_sin, params, n_heads, n_kv_heads, *,
                      block_k=None, block_m=256, block_n=512,
                      compute_dtype=jnp.bfloat16):
    """Eval-mode forward of the PyTorch Attention module.

    x         : (bsz, seq, dim) float32
    freqs_cos : (seq, head_dim // 2)
    freqs_sin : (seq, head_dim // 2)
    params    : output of prepare_attention_params (one-time weight prep)
    """
    wq_g, wkv_g, wo_t = params
    bsz, seq, dim = x.shape
    head_dim = dim // n_heads
    n_rep = n_heads // n_kv_heads
    half = head_dim // 2
    group_w = n_rep * head_dim

    if block_k is None:
        block_k = seq if seq <= 512 else 512
    block_k = min(block_k, seq)
    assert seq % block_k == 0, "seq must be a multiple of block_k"
    assert block_k % 8 == 0 or block_k == seq
    num_k = seq // block_k

    x_c = x.astype(compute_dtype)
    cos = freqs_cos.astype(jnp.float32)
    sin = freqs_sin.astype(jnp.float32)

    # Explicit VMEM budget (double-buffered blocks + persistent scratch).
    itemsize = jnp.dtype(compute_dtype).itemsize
    block_bytes = (seq * dim + block_k * dim + dim * group_w
                   + dim * 2 * head_dim + seq * group_w) * itemsize \
                  + 2 * seq * half * 4
    scratch_bytes = (seq * group_w * itemsize
                     + 2 * n_rep * seq * 128 * 4
                     + n_rep * seq * head_dim * 4)
    vmem_limit = int(min(max(2 * (2 * block_bytes + scratch_bytes), 16 * 2 ** 20),
                         64 * 2 ** 20))

    kernel1 = functools.partial(_flash_attn_kernel, head_dim=head_dim,
                                n_rep=n_rep, block_k=block_k)

    # TODO(synk): for very long sequences also tile the query axis (v5e VMEM),
    # and consider fusing the output projection here (head axis as a reduction
    # with an f32 (S, dim) accumulator) to drop the concat HBM round trip.
    concat = pl.pallas_call(
        kernel1,
        out_shape=jax.ShapeDtypeStruct((bsz, seq, n_heads * head_dim), compute_dtype),
        grid_spec=pltpu.PrefetchScalarGridSpec(
            num_scalar_prefetch=0,
            grid=(bsz, n_kv_heads, num_k),
            in_specs=[
                pl.BlockSpec((1, seq, dim), lambda b, g, k: (b, 0, 0)),        # x (queries)
                pl.BlockSpec((1, block_k, dim), lambda b, g, k: (b, k, 0)),    # x (key tile)
                pl.BlockSpec((1, dim, group_w), lambda b, g, k: (g, 0, 0)),    # grouped Wq
                pl.BlockSpec((1, dim, 2 * head_dim), lambda b, g, k: (g, 0, 0)),  # Wk|Wv
                pl.BlockSpec((seq, half), lambda b, g, k: (0, 0)),             # cos
                pl.BlockSpec((seq, half), lambda b, g, k: (0, 0)),             # sin
            ],
            out_specs=pl.BlockSpec((1, seq, group_w), lambda b, g, k: (b, 0, g)),
            scratch_shapes=[
                pltpu.VMEM((seq, group_w), compute_dtype),         # rotated Q
                pltpu.VMEM((n_rep, seq, 1), jnp.float32),          # running max
                pltpu.VMEM((n_rep, seq, 1), jnp.float32),          # running denom
                pltpu.VMEM((n_rep, seq, head_dim), jnp.float32),   # output acc
            ]),
        compiler_params=pltpu.CompilerParams(
            dimension_semantics=("parallel", "parallel", "arbitrary"),
            vmem_limit_bytes=vmem_limit),
    )(x_c, x_c, wq_g, wkv_g, cos, sin)

    # --- Kernel 2: tiled, pipelined output projection ---------------------------
    M = bsz * seq
    hhd = n_heads * head_dim
    y2d = concat.reshape(M, hhd)                       # free reshape (contiguous)
    tm = min(block_m, M)
    tn = min(block_n, dim)
    # TODO(synk): for very large hhd/dim add an "arbitrary" K axis over hhd with
    # an f32 VMEM accumulator so the strips fit v7x's 64 MiB.
    out2d = pl.pallas_call(
        _out_proj_kernel,
        out_shape=jax.ShapeDtypeStruct((M, dim), x.dtype),
        grid_spec=pltpu.PrefetchScalarGridSpec(
            num_scalar_prefetch=0,
            grid=(pl.cdiv(M, tm), pl.cdiv(dim, tn)),
            in_specs=[
                pl.BlockSpec((tm, hhd), lambda i, j: (i, 0)),
                pl.BlockSpec((hhd, tn), lambda i, j: (0, j)),
            ],
            out_specs=pl.BlockSpec((tm, tn), lambda i, j: (i, j)),
        ),
        compiler_params=pltpu.CompilerParams(
            dimension_semantics=("parallel", "parallel")),
    )(y2d, wo_t)

    return out2d.reshape(bsz, seq, dim)


# ----------------------------------------------------------------------------
# Pure-JAX reference (mirrors the PyTorch forward, eval mode, f32 throughout)
# ----------------------------------------------------------------------------
def ref_forward(x, wq, wk, wv, wo, freqs_cos, freqs_sin, n_heads, n_kv_heads):
    bsz, seq, dim = x.shape
    hd = dim // n_heads
    n_rep = n_heads // n_kv_heads
    xq = (x @ wq.T).reshape(bsz, seq, n_heads, hd)
    xk = (x @ wk.T).reshape(bsz, seq, n_kv_heads, hd)
    xv = (x @ wv.T).reshape(bsz, seq, n_kv_heads, hd)

    def rope(t, nh):
        tr = t.reshape(bsz, seq, nh, hd // 2, 2)
        r, i = tr[..., 0], tr[..., 1]
        c = freqs_cos[None, :, None, :]
        s = freqs_sin[None, :, None, :]
        return jnp.stack([r * c - i * s, r * s + i * c], axis=-1).reshape(bsz, seq, nh, hd)

    xq = rope(xq, n_heads)
    xk = rope(xk, n_kv_heads)
    xk = jnp.repeat(xk, n_rep, axis=2)
    xv = jnp.repeat(xv, n_rep, axis=2)
    xq = xq.transpose(0, 2, 1, 3)
    xk = xk.transpose(0, 2, 1, 3)
    xv = xv.transpose(0, 2, 1, 3)
    scores = (xq @ xk.transpose(0, 1, 3, 2)) / math.sqrt(hd)
    attn = jax.nn.softmax(scores, axis=-1)
    out = (attn @ xv).transpose(0, 2, 1, 3).reshape(bsz, seq, -1)
    return out @ wo.T


if __name__ == "__main__":
    # Small shapes consistent with the module: head_dim = 128 (lane-aligned),
    # GQA exercised (n_kv_heads < n_heads), freqs shaped (seq, head_dim // 2).
    bsz, seq, dim = 2, 128, 256
    n_heads, n_kv_heads = 2, 1
    head_dim = dim // n_heads           # 128

    key = jax.random.PRNGKey(0)
    kx, kq, kk, kv_, ko = jax.random.split(key, 5)
    x = jax.random.normal(kx, (bsz, seq, dim), jnp.float32)
    wq = 0.1 * jax.random.normal(kq, (n_heads * head_dim, dim), jnp.float32)
    wk = 0.1 * jax.random.normal(kk, (n_kv_heads * head_dim, dim), jnp.float32)
    wv = 0.1 * jax.random.normal(kv_, (n_kv_heads * head_dim, dim), jnp.float32)
    wo = 0.1 * jax.random.normal(ko, (dim, n_heads * head_dim), jnp.float32)

    # Precompute rotary frequencies (llama-style).
    inv_freq = 1.0 / (10000.0 ** (jnp.arange(0, head_dim, 2, dtype=jnp.float32) / head_dim))
    t = jnp.arange(seq, dtype=jnp.float32)
    freqs = jnp.outer(t, inv_freq)                   # (seq, head_dim // 2)
    freqs_cos = jnp.cos(freqs)
    freqs_sin = jnp.sin(freqs)

    # One-time weight prep (hoisted out of the per-call path).
    params = prepare_attention_params(wq, wk, wv, wo, n_heads, n_kv_heads)

    # block_k=64 -> 2 key tiles, exercising the online-softmax accumulation path.
    out = attention_forward(x, freqs_cos, freqs_sin, params, n_heads, n_kv_heads,
                            block_k=64)
    out = jax.block_until_ready(out)

    ref = ref_forward(x, wq, wk, wv, wo, freqs_cos, freqs_sin, n_heads, n_kv_heads)
    assert out.shape == (bsz, seq, dim)
    # bf16 MXU inputs everywhere -> loosened tolerance vs the pure-f32 reference.
    err = float(jnp.max(jnp.abs(out - ref)))
    rel = float(jnp.linalg.norm(out - ref) / jnp.linalg.norm(ref))
    assert rel < 2e-2, f"relative Frobenius error = {rel}"
    assert jnp.allclose(out, ref, atol=1e-1, rtol=1e-1), f"max abs err = {err}"

    print("KERNEL_OK")
</pallas_src>

<mosaic_0001>
module attributes {stable_mosaic.version = 11 : i64} {
  func.func @_flash_attn_kernel(%arg0: i32, %arg1: i32, %arg2: i32, %arg3: memref<1x128x256xbf16, #tpu.memory_space<vmem>>, %arg4: memref<1x64x256xbf16, #tpu.memory_space<vmem>>, %arg5: memref<1x256x256xbf16, #tpu.memory_space<vmem>>, %arg6: memref<1x256x256xbf16, #tpu.memory_space<vmem>>, %arg7: memref<128x64xf32, #tpu.memory_space<vmem>>, %arg8: memref<128x64xf32, #tpu.memory_space<vmem>>, %arg9: memref<1x128x256xbf16, #tpu.memory_space<vmem>>, %arg10: memref<128x256xbf16, #tpu.memory_space<vmem>>, %arg11: memref<2x128x1xf32, #tpu.memory_space<vmem>>, %arg12: memref<2x128x1xf32, #tpu.memory_space<vmem>>, %arg13: memref<2x128x128xf32, #tpu.memory_space<vmem>>) attributes {dimension_semantics = [#tpu.dimension_semantics<parallel>, #tpu.dimension_semantics<parallel>, #tpu.dimension_semantics<arbitrary>], iteration_bounds = array<i64: 2, 1, 2>, scalar_prefetch = 0 : i64, scratch_operands = 4 : i64, tpu.core_type = #tpu.core_type<tc>, window_params = [{transform_indices = @transform_0, window_bounds = array<i64: 1, 128, 256>}, {transform_indices = @transform_1, window_bounds = array<i64: 1, 64, 256>}, {transform_indices = @transform_2, window_bounds = array<i64: 1, 256, 256>}, {transform_indices = @transform_3, window_bounds = array<i64: 1, 256, 256>}, {pipeline_mode = #tpu.pipeline_mode<synchronous>, transform_indices = @transform_4, window_bounds = array<i64: 128, 64>}, {pipeline_mode = #tpu.pipeline_mode<synchronous>, transform_indices = @transform_5, window_bounds = array<i64: 128, 64>}, {transform_indices = @transform_6, window_bounds = array<i64: 1, 128, 256>}]} {
    %c0_i32 = arith.constant 0 : i32
    %0 = arith.cmpi eq, %arg2, %c0_i32 : i32
    %1 = arith.extui %0 : i1 to i32
    %c0_i32_0 = arith.constant 0 : i32
    %2 = arith.cmpi ne, %1, %c0_i32_0 : i32
    scf.if %2 {
      %c0_55 = arith.constant 0 : index
      %c0_56 = arith.constant 0 : index
      %98 = vector.load %arg7[%c0_55, %c0_56] : memref<128x64xf32, #tpu.memory_space<vmem>>, vector<128x64xf32>
      %c0_57 = arith.constant 0 : index
      %c0_58 = arith.constant 0 : index
      %99 = vector.load %arg8[%c0_57, %c0_58] : memref<128x64xf32, #tpu.memory_space<vmem>>, vector<128x64xf32>
      %c0_59 = arith.constant 0 : index
      %c0_60 = arith.constant 0 : index
      %c0_61 = arith.constant 0 : index
      %100 = vector.load %arg3[%c0_59, %c0_60, %c0_61] : memref<1x128x256xbf16, #tpu.memory_space<vmem>>, vector<1x128x256xbf16>
      %101 = vector.shape_cast %100 : vector<1x128x256xbf16> to vector<128x256xbf16>
      %c0_62 = arith.constant 0 : index
      %c0_63 = arith.constant 0 : index
      %c0_64 = arith.constant 0 : index
      %102 = vector.load %arg5[%c0_62, %c0_63, %c0_64] : memref<1x256x256xbf16, #tpu.memory_space<vmem>>, vector<1x256x256xbf16>
      %103 = vector.shape_cast %102 : vector<1x256x256xbf16> to vector<256x256xbf16>
      %cst_65 = arith.constant dense<0.000000e+00> : vector<128x256xf32>
      %104 = tpu.matmul %101, %103, %cst_65 {dimension_numbers = #tpu.dot_dimension_numbers<[1], [0], [0], [1], [0, 0, 1, 1], [], []>} : vector<128x256xbf16>, vector<256x256xbf16>, vector<128x256xf32> -> vector<128x256xf32>
      %105 = vector.extract_strided_slice %104 {offsets = [0, 0], sizes = [128, 128], strides = [1, 1]} : vector<128x256xf32> to vector<128x128xf32>
      %106 = vector.extract_strided_slice %105 {offsets = [0, 0], sizes = [128, 64], strides = [1, 1]} : vector<128x128xf32> to vector<128x64xf32>
      %107 = vector.extract_strided_slice %105 {offsets = [0, 64], sizes = [128, 64], strides = [1, 1]} : vector<128x128xf32> to vector<128x64xf32>
      %108 = arith.mulf %106, %98 : vector<128x64xf32>
      %109 = arith.mulf %107, %99 : vector<128x64xf32>
      %110 = arith.subf %108, %109 : vector<128x64xf32>
      %111 = arith.mulf %107, %98 : vector<128x64xf32>
      %112 = arith.mulf %106, %99 : vector<128x64xf32>
      %113 = arith.addf %111, %112 : vector<128x64xf32>
      %114 = tpu.concatenate %110, %113 in 1 : vector<128x64xf32>, vector<128x64xf32> -> vector<128x128xf32>
      %115 = arith.truncf %114 : vector<128x128xf32> to vector<128x128xbf16>
      %c0_66 = arith.constant 0 : index
      %c0_67 = arith.constant 0 : index
      %116 = vector.load %arg10[%c0_66, %c0_67] : memref<128x256xbf16, #tpu.memory_space<vmem>>, vector<128x128xbf16>
      tpu.vector_store %arg10[%c0_66, %c0_67], %115 {strides = array<i32>} : memref<128x256xbf16, #tpu.memory_space<vmem>>, vector<128x128xbf16>,
      %117 = vector.extract_strided_slice %104 {offsets = [0, 128], sizes = [128, 128], strides = [1, 1]} : vector<128x256xf32> to vector<128x128xf32>
      %118 = vector.extract_strided_slice %117 {offsets = [0, 0], sizes = [128, 64], strides = [1, 1]} : vector<128x128xf32> to vector<128x64xf32>
      %119 = vector.extract_strided_slice %117 {offsets = [0, 64], sizes = [128, 64], strides = [1, 1]} : vector<128x128xf32> to vector<128x64xf32>
      %120 = arith.mulf %118, %98 : vector<128x64xf32>
      %121 = arith.mulf %119, %99 : vector<128x64xf32>
      %122 = arith.subf %120, %121 : vector<128x64xf32>
      %123 = arith.mulf %119, %98 : vector<128x64xf32>
      %124 = arith.mulf %118, %99 : vector<128x64xf32>
      %125 = arith.addf %123, %124 : vector<128x64xf32>
      %126 = tpu.concatenate %122, %125 in 1 : vector<128x64xf32>, vector<128x64xf32> -> vector<128x128xf32>
      %127 = arith.truncf %126 : vector<128x128xf32> to vector<128x128xbf16>
      %c0_68 = arith.constant 0 : index
      %c128_69 = arith.constant 128 : index
      %128 = vector.load %arg10[%c0_68, %c128_69] : memref<128x256xbf16, #tpu.memory_space<vmem>>, vector<128x128xbf16>
      tpu.vector_store %arg10[%c0_68, %c128_69], %127 {strides = array<i32>} : memref<128x256xbf16, #tpu.memory_space<vmem>>, vector<128x128xbf16>,
      %cst_70 = arith.constant 0xFF800000 : f32
      %129 = vector.broadcast %cst_70 : f32 to vector<2x128x1xf32>
      %c0_71 = arith.constant 0 : index
      %c0_72 = arith.constant 0 : index
      %c0_73 = arith.constant 0 : index
      %130 = vector.load %arg11[%c0_71, %c0_72, %c0_73] : memref<2x128x1xf32, #tpu.memory_space<vmem>>, vector<2x128x1xf32>
      tpu.vector_store %arg11[%c0_71, %c0_72, %c0_73], %129 {strides = array<i32>} : memref<2x128x1xf32, #tpu.memory_space<vmem>>, vector<2x128x1xf32>,
      %cst_74 = arith.constant 0.000000e+00 : f32
      %131 = vector.broadcast %cst_74 : f32 to vector<2x128x1xf32>
      %c0_75 = arith.constant 0 : index
      %c0_76 = arith.constant 0 : index
      %c0_77 = arith.constant 0 : index
      %132 = vector.load %arg12[%c0_75, %c0_76, %c0_77] : memref<2x128x1xf32, #tpu.memory_space<vmem>>, vector<2x128x1xf32>
      tpu.vector_store %arg12[%c0_75, %c0_76, %c0_77], %131 {strides = array<i32>} : memref<2x128x1xf32, #tpu.memory_space<vmem>>, vector<2x128x1xf32>,
      %cst_78 = arith.constant 0.000000e+00 : f32
      %133 = vector.broadcast %cst_78 : f32 to vector<2x128x128xf32>
      %c0_79 = arith.constant 0 : index
      %c0_80 = arith.constant 0 : index
      %c0_81 = arith.constant 0 : index
      %134 = vector.load %arg13[%c0_79, %c0_80, %c0_81] : memref<2x128x128xf32, #tpu.memory_space<vmem>>, vector<2x128x128xf32>
      tpu.vector_store %arg13[%c0_79, %c0_80, %c0_81], %133 {strides = array<i32>} : memref<2x128x128xf32, #tpu.memory_space<vmem>>, vector<2x128x128xf32>,
    } else {
    }
    %c0 = arith.constant 0 : index
    %c0_1 = arith.constant 0 : index
    %c0_2 = arith.constant 0 : index
    %3 = vector.load %arg4[%c0, %c0_1, %c0_2] : memref<1x64x256xbf16, #tpu.memory_space<vmem>>, vector<1x64x256xbf16>
    %4 = vector.shape_cast %3 : vector<1x64x256xbf16> to vector<64x256xbf16>
    %c0_3 = arith.constant 0 : index
    %c0_4 = arith.constant 0 : index
    %c0_5 = arith.constant 0 : index
    %5 = vector.load %arg6[%c0_3, %c0_4, %c0_5] : memref<1x256x256xbf16, #tpu.memory_space<vmem>>, vector<1x256x256xbf16>
    %6 = vector.shape_cast %5 : vector<1x256x256xbf16> to vector<256x256xbf16>
    %cst = arith.constant dense<0.000000e+00> : vector<64x256xf32>
    %7 = tpu.matmul %4, %6, %cst {dimension_numbers = #tpu.dot_dimension_numbers<[1], [0], [0], [1], [0, 0, 1, 1], [], []>} : vector<64x256xbf16>, vector<256x256xbf16>, vector<64x256xf32> -> vector<64x256xf32>
    %c64_i32 = arith.constant 64 : i32
    %8 = arith.muli %arg2, %c64_i32 : i32
    %9 = tpu.assume_multiple %8, 64 : i32
    %10 = arith.index_cast %9 : i32 to index
    %c0_6 = arith.constant 0 : index
    %11 = vector.load %arg7[%10, %c0_6] : memref<128x64xf32, #tpu.memory_space<vmem>>, vector<64x64xf32>
    %12 = arith.index_cast %9 : i32 to index
    %c0_7 = arith.constant 0 : index
    %13 = vector.load %arg8[%12, %c0_7] : memref<128x64xf32, #tpu.memory_space<vmem>>, vector<64x64xf32>
    %14 = vector.extract_strided_slice %7 {offsets = [0, 0], sizes = [64, 128], strides = [1, 1]} : vector<64x256xf32> to vector<64x128xf32>
    %15 = vector.extract_strided_slice %14 {offsets = [0, 0], sizes = [64, 64], strides = [1, 1]} : vector<64x128xf32> to vector<64x64xf32>
    %16 = vector.extract_strided_slice %14 {offsets = [0, 64], sizes = [64, 64], strides = [1, 1]} : vector<64x128xf32> to vector<64x64xf32>
    %17 = arith.mulf %15, %11 : vector<64x64xf32>
    %18 = arith.mulf %16, %13 : vector<64x64xf32>
    %19 = arith.subf %17, %18 : vector<64x64xf32>
    %20 = arith.mulf %16, %11 : vector<64x64xf32>
    %21 = arith.mulf %15, %13 : vector<64x64xf32>
    %22 = arith.addf %20, %21 : vector<64x64xf32>
    %23 = tpu.concatenate %19, %22 in 1 : vector<64x64xf32>, vector<64x64xf32> -> vector<64x128xf32>
    %24 = arith.truncf %23 : vector<64x128xf32> to vector<64x128xbf16>
    %25 = vector.extract_strided_slice %7 {offsets = [0, 128], sizes = [64, 128], strides = [1, 1]} : vector<64x256xf32> to vector<64x128xf32>
    %26 = arith.truncf %25 : vector<64x128xf32> to vector<64x128xbf16>
    %c0_8 = arith.constant 0 : index
    %c0_9 = arith.constant 0 : index
    %27 = vector.load %arg10[%c0_8, %c0_9] : memref<128x256xbf16, #tpu.memory_space<vmem>>, vector<128x128xbf16>
    %cst_10 = arith.constant dense<0.000000e+00> : vector<128x64xf32>
    %28 = tpu.matmul %27, %24, %cst_10 {dimension_numbers = #tpu.dot_dimension_numbers<[1], [1], [0], [0], [0, 0, 1, 0], [], []>} : vector<128x128xbf16>, vector<64x128xbf16>, vector<128x64xf32> -> vector<128x64xf32>
    %c0_11 = arith.constant 0 : index
    %c0_12 = arith.constant 0 : index
    %c0_13 = arith.constant 0 : index
    %29 = vector.load %arg11[%c0_11, %c0_12, %c0_13] : memref<2x128x1xf32, #tpu.memory_space<vmem>>, vector<1x128x1xf32>
    %30 = vector.shape_cast %29 : vector<1x128x1xf32> to vector<128x1xf32>
    %cst_14 = arith.constant dense<0xFF800000> : vector<128xf32>
    %31 = vector.multi_reduction <maximumf>, %28, %cst_14 [1] : vector<128x64xf32> to vector<128xf32>
    %32 = vector.shape_cast %31 : vector<128xf32> to vector<128x1xf32>
    %33 = arith.maximumf %30, %32 : vector<128x1xf32>
    %34 = arith.subf %30, %33 : vector<128x1xf32>
    %35 = math.exp %34 : vector<128x1xf32>
    %36 = vector.broadcast %33 : vector<128x1xf32> to vector<128x64xf32>
    %37 = arith.subf %28, %36 : vector<128x64xf32>
    %38 = math.exp %37 : vector<128x64xf32>
    %c0_15 = arith.constant 0 : index
    %c0_16 = arith.constant 0 : index
    %c0_17 = arith.constant 0 : index
    %39 = vector.load %arg12[%c0_15, %c0_16, %c0_17] : memref<2x128x1xf32, #tpu.memory_space<vmem>>, vector<1x128x1xf32>
    %40 = vector.shape_cast %39 : vector<1x128x1xf32> to vector<128x1xf32>
    %41 = arith.mulf %35, %40 : vector<128x1xf32>
    %cst_18 = arith.constant dense<0.000000e+00> : vector<128xf32>
    %42 = vector.multi_reduction <add>, %38, %cst_18 [1] : vector<128x64xf32> to vector<128xf32>
    %43 = vector.shape_cast %42 : vector<128xf32> to vector<128x1xf32>
    %44 = arith.addf %41, %43 : vector<128x1xf32>
    %c0_19 = arith.constant 0 : index
    %c0_20 = arith.constant 0 : index
    %c0_21 = arith.constant 0 : index
    %45 = vector.load %arg12[%c0_19, %c0_20, %c0_21] : memref<2x128x1xf32, #tpu.memory_space<vmem>>, vector<1x128x1xf32>
    %46 = vector.shape_cast %45 : vector<1x128x1xf32> to vector<128x1xf32>
    %47 = vector.shape_cast %44 : vector<128x1xf32> to vector<1x128x1xf32>
    tpu.vector_store %arg12[%c0_19, %c0_20, %c0_21], %47 {strides = array<i32>} : memref<2x128x1xf32, #tpu.memory_space<vmem>>, vector<1x128x1xf32>,
    %c0_22 = arith.constant 0 : index
    %c0_23 = arith.constant 0 : index
    %c0_24 = arith.constant 0 : index
    %48 = vector.load %arg13[%c0_22, %c0_23, %c0_24] : memref<2x128x128xf32, #tpu.memory_space<vmem>>, vector<1x128x128xf32>
    %49 = vector.shape_cast %48 : vector<1x128x128xf32> to vector<128x128xf32>
    %50 = vector.broadcast %35 : vector<128x1xf32> to vector<128x128xf32>
    %51 = arith.mulf %50, %49 : vector<128x128xf32>
    %52 = arith.truncf %38 : vector<128x64xf32> to vector<128x64xbf16>
    %cst_25 = arith.constant dense<0.000000e+00> : vector<128x128xf32>
    %53 = tpu.matmul %52, %26, %cst_25 {dimension_numbers = #tpu.dot_dimension_numbers<[1], [0], [0], [1], [0, 0, 1, 1], [], []>} : vector<128x64xbf16>, vector<64x128xbf16>, vector<128x128xf32> -> vector<128x128xf32>
    %54 = arith.addf %51, %53 : vector<128x128xf32>
    %c0_26 = arith.constant 0 : index
    %c0_27 = arith.constant 0 : index
    %c0_28 = arith.constant 0 : index
    %55 = vector.load %arg13[%c0_26, %c0_27, %c0_28] : memref<2x128x128xf32, #tpu.memory_space<vmem>>, vector<1x128x128xf32>
    %56 = vector.shape_cast %55 : vector<1x128x128xf32> to vector<128x128xf32>
    %57 = vector.shape_cast %54 : vector<128x128xf32> to vector<1x128x128xf32>
    tpu.vector_store %arg13[%c0_26, %c0_27, %c0_28], %57 {strides = array<i32>} : memref<2x128x128xf32, #tpu.memory_space<vmem>>, vector<1x128x128xf32>,
    %c0_29 = arith.constant 0 : index
    %c0_30 = arith.constant 0 : index
    %c0_31 = arith.constant 0 : index
    %58 = vector.load %arg11[%c0_29, %c0_30, %c0_31] : memref<2x128x1xf32, #tpu.memory_space<vmem>>, vector<1x128x1xf32>
    %59 = vector.shape_cast %58 : vector<1x128x1xf32> to vector<128x1xf32>
    %60 = vector.shape_cast %33 : vector<128x1xf32> to vector<1x128x1xf32>
    tpu.vector_store %arg11[%c0_29, %c0_30, %c0_31], %60 {strides = array<i32>} : memref<2x128x1xf32, #tpu.memory_space<vmem>>, vector<1x128x1xf32>,
    %c0_32 = arith.constant 0 : index
    %c128 = arith.constant 128 : index
    %61 = vector.load %arg10[%c0_32, %c128] : memref<128x256xbf16, #tpu.memory_space<vmem>>, vector<128x128xbf16>
    %cst_33 = arith.constant dense<0.000000e+00> : vector<128x64xf32>
    %62 = tpu.matmul %61, %24, %cst_33 {dimension_numbers = #tpu.dot_dimension_numbers<[1], [1], [0], [0], [0, 0, 1, 0], [], []>} : vector<128x128xbf16>, vector<64x128xbf16>, vector<128x64xf32> -> vector<128x64xf32>
    %c1 = arith.constant 1 : index
    %c0_34 = arith.constant 0 : index
    %c0_35 = arith.constant 0 : index
    %63 = vector.load %arg11[%c1, %c0_34, %c0_35] : memref<2x128x1xf32, #tpu.memory_space<vmem>>, vector<1x128x1xf32>
    %64 = vector.shape_cast %63 : vector<1x128x1xf32> to vector<128x1xf32>
    %cst_36 = arith.constant dense<0xFF800000> : vector<128xf32>
    %65 = vector.multi_reduction <maximumf>, %62, %cst_36 [1] : vector<128x64xf32> to vector<128xf32>
    %66 = vector.shape_cast %65 : vector<128xf32> to vector<128x1xf32>
    %67 = arith.maximumf %64, %66 : vector<128x1xf32>
    %68 = arith.subf %64, %67 : vector<128x1xf32>
    %69 = math.exp %68 : vector<128x1xf32>
    %70 = vector.broadcast %67 : vector<128x1xf32> to vector<128x64xf32>
    %71 = arith.subf %62, %70 : vector<128x64xf32>
    %72 = math.exp %71 : vector<128x64xf32>
    %c1_37 = arith.constant 1 : index
    %c0_38 = arith.constant 0 : index
    %c0_39 = arith.constant 0 : index
    %73 = vector.load %arg12[%c1_37, %c0_38, %c0_39] : memref<2x128x1xf32, #tpu.memory_space<vmem>>, vector<1x128x1xf32>
    %74 = vector.shape_cast %73 : vector<1x128x1xf32> to vector<128x1xf32>
    %75 = arith.mulf %69, %74 : vector<128x1xf32>
    %cst_40 = arith.constant dense<0.000000e+00> : vector<128xf32>
    %76 = vector.multi_reduction <add>, %72, %cst_40 [1] : vector<128x64xf32> to vector<128xf32>
    %77 = vector.shape_cast %76 : vector<128xf32> to vector<128x1xf32>
    %78 = arith.addf %75, %77 : vector<128x1xf32>
    %c1_41 = arith.constant 1 : index
    %c0_42 = arith.constant 0 : index
    %c0_43 = arith.constant 0 : index
    %79 = vector.load %arg12[%c1_41, %c0_42, %c0_43] : memref<2x128x1xf32, #tpu.memory_space<vmem>>, vector<1x128x1xf32>
    %80 = vector.shape_cast %79 : vector<1x128x1xf32> to vector<128x1xf32>
    %81 = vector.shape_cast %78 : vector<128x1xf32> to vector<1x128x1xf32>
    tpu.vector_store %arg12[%c1_41, %c0_42, %c0_43], %81 {strides = array<i32>} : memref<2x128x1xf32, #tpu.memory_space<vmem>>, vector<1x128x1xf32>,
    %c1_44 = arith.constant 1 : index
    %c0_45 = arith.constant 0 : index
    %c0_46 = arith.constant 0 : index
    %82 = vector.load %arg13[%c1_44, %c0_45, %c0_46] : memref<2x128x128xf32, #tpu.memory_space<vmem>>, vector<1x128x128xf32>
    %83 = vector.shape_cast %82 : vector<1x128x128xf32> to vector<128x128xf32>
    %84 = vector.broadcast %69 : vector<128x1xf32> to vector<128x128xf32>
    %85 = arith.mulf %84, %83 : vector<128x128xf32>
    %86 = arith.truncf %72 : vector<128x64xf32> to vector<128x64xbf16>
    %cst_47 = arith.constant dense<0.000000e+00> : vector<128x128xf32>
    %87 = tpu.matmul %86, %26, %cst_47 {dimension_numbers = #tpu.dot_dimension_numbers<[1], [0], [0], [1], [0, 0, 1, 1], [], []>} : vector<128x64xbf16>, vector<64x128xbf16>, vector<128x128xf32> -> vector<128x128xf32>
    %88 = arith.addf %85, %87 : vector<128x128xf32>
    %c1_48 = arith.constant 1 : index
    %c0_49 = arith.constant 0 : index
    %c0_50 = arith.constant 0 : index
    %89 = vector.load %arg13[%c1_48, %c0_49, %c0_50] : memref<2x128x128xf32, #tpu.memory_space<vmem>>, vector<1x128x128xf32>
    %90 = vector.shape_cast %89 : vector<1x128x128xf32> to vector<128x128xf32>
    %91 = vector.shape_cast %88 : vector<128x128xf32> to vector<1x128x128xf32>
    tpu.vector_store %arg13[%c1_48, %c0_49, %c0_50], %91 {strides = array<i32>} : memref<2x128x128xf32, #tpu.memory_space<vmem>>, vector<1x128x128xf32>,
    %c1_51 = arith.constant 1 : index
    %c0_52 = arith.constant 0 : index
    %c0_53 = arith.constant 0 : index
    %92 = vector.load %arg11[%c1_51, %c0_52, %c0_53] : memref<2x128x1xf32, #tpu.memory_space<vmem>>, vector<1x128x1xf32>
    %93 = vector.shape_cast %92 : vector<1x128x1xf32> to vector<128x1xf32>
    %94 = vector.shape_cast %67 : vector<128x1xf32> to vector<1x128x1xf32>
    tpu.vector_store %arg11[%c1_51, %c0_52, %c0_53], %94 {strides = array<i32>} : memref<2x128x1xf32, #tpu.memory_space<vmem>>, vector<1x128x1xf32>,
    %c1_i32 = arith.constant 1 : i32
    %95 = arith.cmpi eq, %arg2, %c1_i32 : i32
    %96 = arith.extui %95 : i1 to i32
    %c0_i32_54 = arith.constant 0 : i32
    %97 = arith.cmpi ne, %96, %c0_i32_54 : i32
    scf.if %97 {
      %c0_55 = arith.constant 0 : index
      %c0_56 = arith.constant 0 : index
      %c0_57 = arith.constant 0 : index
      %98 = vector.load %arg12[%c0_55, %c0_56, %c0_57] : memref<2x128x1xf32, #tpu.memory_space<vmem>>, vector<1x128x1xf32>
      %99 = vector.shape_cast %98 : vector<1x128x1xf32> to vector<128x1xf32>
      %100 = tpu.reciprocal %99 {approx = true} : vector<128x1xf32> -> vector<128x1xf32>
      %c0_58 = arith.constant 0 : index
      %c0_59 = arith.constant 0 : index
      %c0_60 = arith.constant 0 : index
      %101 = vector.load %arg13[%c0_58, %c0_59, %c0_60] : memref<2x128x128xf32, #tpu.memory_space<vmem>>, vector<1x128x128xf32>
      %102 = vector.shape_cast %101 : vector<1x128x128xf32> to vector<128x128xf32>
      %103 = vector.broadcast %100 : vector<128x1xf32> to vector<128x128xf32>
      %104 = arith.mulf %102, %103 : vector<128x128xf32>
      %c1_61 = arith.constant 1 : index
      %c0_62 = arith.constant 0 : index
      %c0_63 = arith.constant 0 : index
      %105 = vector.load %arg12[%c1_61, %c0_62, %c0_63] : memref<2x128x1xf32, #tpu.memory_space<vmem>>, vector<1x128x1xf32>
      %106 = vector.shape_cast %105 : vector<1x128x1xf32> to vector<128x1xf32>
      %107 = tpu.reciprocal %106 {approx = true} : vector<128x1xf32> -> vector<128x1xf32>
      %c1_64 = arith.constant 1 : index
      %c0_65 = arith.constant 0 : index
      %c0_66 = arith.constant 0 : index
      %108 = vector.load %arg13[%c1_64, %c0_65, %c0_66] : memref<2x128x128xf32, #tpu.memory_space<vmem>>, vector<1x128x128xf32>
      %109 = vector.shape_cast %108 : vector<1x128x128xf32> to vector<128x128xf32>
      %110 = vector.broadcast %107 : vector<128x1xf32> to vector<128x128xf32>
      %111 = arith.mulf %109, %110 : vector<128x128xf32>
      %112 = tpu.concatenate %104, %111 in 1 : vector<128x128xf32>, vector<128x128xf32> -> vector<128x256xf32>
      %113 = arith.truncf %112 : vector<128x256xf32> to vector<128x256xbf16>
      %c0_67 = arith.constant 0 : index
      %c0_68 = arith.constant 0 : index
      %c0_69 = arith.constant 0 : index
      %114 = vector.load %arg9[%c0_67, %c0_68, %c0_69] : memref<1x128x256xbf16, #tpu.memory_space<vmem>>, vector<1x128x256xbf16>
      %115 = vector.shape_cast %114 : vector<1x128x256xbf16> to vector<128x256xbf16>
      %116 = vector.shape_cast %113 : vector<128x256xbf16> to vector<1x128x256xbf16>
      tpu.vector_store %arg9[%c0_67, %c0_68, %c0_69], %116 {strides = array<i32>} : memref<1x128x256xbf16, #tpu.memory_space<vmem>>, vector<1x128x256xbf16>,
    } else {
    }
    return
  }
  func.func @transform_0(%arg0: i32, %arg1: i32, %arg2: i32) -> (i32, i32, i32) {
    %c0_i32 = arith.constant 0 : i32
    %c0_i32_0 = arith.constant 0 : i32
    %c0_i32_1 = arith.constant 0 : i32
    return %arg0, %c0_i32, %c0_i32_0 : i32, i32, i32
  }
  func.func @transform_1(%arg0: i32, %arg1: i32, %arg2: i32) -> (i32, i32, i32) {
    %c0_i32 = arith.constant 0 : i32
    %c0_i32_0 = arith.constant 0 : i32
    return %arg0, %arg2, %c0_i32 : i32, i32, i32
  }
  func.func @transform_2(%arg0: i32, %arg1: i32, %arg2: i32) -> (i32, i32, i32) {
    %c0_i32 = arith.constant 0 : i32
    %c0_i32_0 = arith.constant 0 : i32
    %c0_i32_1 = arith.constant 0 : i32
    return %arg1, %c0_i32, %c0_i32_0 : i32, i32, i32
  }
  func.func @transform_3(%arg0: i32, %arg1: i32, %arg2: i32) -> (i32, i32, i32) {
    %c0_i32 = arith.constant 0 : i32
    %c0_i32_0 = arith.constant 0 : i32
    %c0_i32_1 = arith.constant 0 : i32
    return %arg1, %c0_i32, %c0_i32_0 : i32, i32, i32
  }
  func.func @transform_4(%arg0: i32, %arg1: i32, %arg2: i32) -> (i32, i32) {
    %c0_i32 = arith.constant 0 : i32
    %c0_i32_0 = arith.constant 0 : i32
    %c0_i32_1 = arith.constant 0 : i32
    return %c0_i32, %c0_i32_0 : i32, i32
  }
  func.func @transform_5(%arg0: i32, %arg1: i32, %arg2: i32) -> (i32, i32) {
    %c0_i32 = arith.constant 0 : i32
    %c0_i32_0 = arith.constant 0 : i32
    %c0_i32_1 = arith.constant 0 : i32
    return %c0_i32, %c0_i32_0 : i32, i32
  }
  func.func @transform_6(%arg0: i32, %arg1: i32, %arg2: i32) -> (i32, i32, i32) {
    %c0_i32 = arith.constant 0 : i32
    %c0_i32_0 = arith.constant 0 : i32
    return %arg0, %c0_i32, %arg1 : i32, i32, i32
  }
}

</mosaic_0001>

<llo_original>
// kernel: tpu_custom_call.1
$region0: #{tpu_custom_call.1}
  #allocation0 [shape = 'u32[]', space=smem, size = 0x4, offset = 0x4, fixed_abs, tag = 'smem constant byte address 0x4 - core index']
  #allocation1 [shape = 'u32[144,128]{1,0:T(1,128)}', space=vmem, size = 0x12000, scoped, tag = 'internal scratch']
  #allocation2 [shape = 'bf16[128,256]{1,0:T(8,128)(2,1)}', space=vmem, size = 0x10000, scoped, tag = 'scratch operand']
  #allocation3 [shape = 'f32[2,128,1]{2,1,0:T(8,128)}', space=vmem, size = 0x20000, scoped, tag = 'scratch operand']
  #allocation4 [shape = 'f32[2,128,1]{2,1,0:T(8,128)}', space=vmem, size = 0x20000, scoped, tag = 'scratch operand']
  #allocation5 [shape = 'f32[2,128,128]{2,1,0:T(8,128)}', space=vmem, size = 0x20000, scoped, tag = 'scratch operand']
  %s0 = inlined_call_operand.vmem [shape: bf16[2,128,256], index: 0, kind: input, shape index: {}]
  %s1 = inlined_call_operand.hbm [shape: bf16[2,128,256], index: 1, kind: input, shape index: {}]
  %s2 = inlined_call_operand.hbm [shape: bf16[1,256,256], index: 2, kind: input, shape index: {}]
  %s3 = inlined_call_operand.hbm [shape: bf16[1,256,256], index: 3, kind: input, shape index: {}]
  %s4 = inlined_call_operand.vmem [shape: f32[128,64], index: 4, kind: input, shape index: {}]
  %s5 = inlined_call_operand.vmem [shape: f32[128,64], index: 5, kind: input, shape index: {}]
  %s6 = inlined_call_operand.hbm [shape: bf16[2,128,256], index: 6, kind: output, shape index: {}]
  %s7 = sld [smem:[#allocation0]]
  $region77: #{tpu_custom_call.1} parent=0
    _
  %s9 = ssub.s32 1, %s7
  %s10 = scalar_select 0, %s9, %s7
  $region1: #{tpu_custom_call.1} parent=0
    #allocation6 [shape = 'u8[65536]{0}', space=vmem, size = 0x10000, scoped, tag = 'input window, operand 1']
    #allocation7 [shape = 's32[2]{0}', space=sflag, size = 0x8, scoped, tag = 'scoped memory for tpu_custom_call.1']
    #allocation8 [shape = 's32[2]{0}', space=sflag, size = 0x8, scoped, tag = 'scoped memory for tpu_custom_call.1']
    #allocation9 [shape = 'u8[131072]{0}', space=vmem, size = 0x20000, scoped, tag = 'input window, operand 2, single buffered']
    #allocation10 [shape = 's32[1]{0}', space=sflag, size = 0x4, scoped, tag = 'scoped memory for tpu_custom_call.1']
    #allocation11 [shape = 'u8[131072]{0}', space=vmem, size = 0x20000, scoped, tag = 'input window, operand 3, single buffered']
    #allocation12 [shape = 'u8[131072]{0}', space=vmem, size = 0x20000, scoped, tag = 'output window, operand 0']
    %11 = vsyncpa [#allocation7], 0
    %s12 = scalar_lea.sflag [#allocation7], 1
    %13 = vsyncpa %s12, 0
    %14 = vsyncpa [#allocation10], 0
    %15 = vsyncpa [#allocation8], 0
    %s16 = scalar_lea.sflag [#allocation8], 1
    %17 = vsyncpa %s16, 0
    loop: start=0, step=1, limit=6
    $region2: #{tpu_custom_call.1} parent=1 // loop_pre_header
      _
    $region3: #{tpu_custom_call.1} parent=1 // loop_header
      %s19 = sphi 0, %s23
      %p20 = scmp.ge.s32.totalorder %s19, 6
      %s26 = sphi 0, %s45
      %s27 = sphi 0, %s41
      %s28 = sphi 0, %s37
      %s29 = sphi 0, %s26
      %s30 = sphi 0, %s27
      %s31 = sphi 0, %s28
      %s32 = sphi 0, %s29
      %s33 = sphi 0, %s30
      %s34 = sphi 0, %s31
      %s48 = sphi 0, %s50
      %s51 = sphi 0, %s48
      %s52 = sphi 0, %s51
      %s68 = sphi 0, %s52
      %s76 = sphi 0, %s78
      %s79 = sphi 0, %s76
      %s80 = sphi 0, %s79
      %s96 = sphi 0, %s80
      %s102 = sphi 0, %s104
      %s105 = sphi 0, %s102
      %s106 = sphi 0, %s105
      %s122 = sphi 0, %s106
      %s128 = sphi 0, %s130
      %s131 = sphi 0, %s128
      %s132 = sphi 0, %s131
      %s148 = sphi 0, %s132
      %s152 = sphi 0, %s152
      %s154 = sphi 0, %s152
      %s155 = sphi 0, %s154
      %s169 = sphi 0, %s155
      %s173 = sphi 0, %s173
      %s175 = sphi 0, %s173
      %s176 = sphi 0, %s175
      %s190 = sphi 0, %s176
      %s198 = sphi 0, %s200
      %s201 = sphi 0, %s198
      %s202 = sphi 0, %s201
      %s218 = sphi 0, %s202
    $region4: #{tpu_custom_call.1} parent=1 // loop_header_branch
      %22 = sbr.rel (%p20) target = $region8
    $region5: #{tpu_custom_call.1} parent=1 // loop_body
      %s24 = ssub.s32 %s19, 1
      %s25 = ssub.s32 %s19, 2
      %s35 = sadd.s32 1, %s28
      %p36 = scmp.ge.s32.totalorder %s35, 2
      %s37 = scalar_select %p36, 0, %s35
      %s38 = sadd.s32 1, %s27
      %s39 = scalar_select %p36, %s38, %s27
      %p40 = scmp.ge.s32.totalorder %s39, 1
      %s41 = scalar_select %p40, 0, %s39
      %s42 = sadd.s32 1, %s26
      %s43 = scalar_select %p40, %s42, %s26
      %p44 = scmp.ge.s32.totalorder %s43, 2
      %s45 = scalar_select %p44, 0, %s43
      %s46 = ssub.s32 %s26, %s45
      %p47 = scmp.eq.s32.totalorder %s46, 0
      %s49 = sadd.s32 %s48, 1
      %s50 = scalar_select %p47, %s48, %s49
      %p53 = pneg %p47
      %p54 = scmp.eq.s32.totalorder %s19, 3
      %p55 = por %p53, %p54
      %p56 = scmp.ne.s32.totalorder %s48, %s51
      %p57 = scmp.eq.s32.totalorder %s19, 0
      %p58 = por %p56, %p57
      %p59 = scmp.ne.s32.totalorder %s48, %s51
      %p60 = scmp.eq.s32.totalorder %s24, 3
      %p61 = por %p59, %p60
      %p62 = scmp.ne.s32.totalorder %s51, %s52
      %p63 = scmp.eq.s32.totalorder %s24, 0
      %p64 = por %p62, %p63
      %p65 = scmp.ne.s32.totalorder %s51, %s52
      %p66 = scmp.eq.s32.totalorder %s25, 3
      %p67 = por %p65, %p66
      %p69 = scmp.ne.s32.totalorder %s52, %s68
      %p70 = scmp.eq.s32.totalorder %s25, 0
      %p71 = por %p69, %p70
      %s72 = ssub.s32 %s26, %s45
      %s73 = ssub.s32 %s28, %s37
      %s74 = sor.u32 %s72, %s73
      %p75 = scmp.eq.s32.totalorder %s74, 0
      %s77 = sadd.s32 %s76, 1
      %s78 = scalar_select %p75, %s76, %s77
      %p81 = pneg %p75
      %p82 = scmp.eq.s32.totalorder %s19, 3
      %p83 = por %p81, %p82
      %p84 = scmp.ne.s32.totalorder %s76, %s79
      %p85 = scmp.eq.s32.totalorder %s19, 0
      %p86 = por %p84, %p85
      %p87 = scmp.ne.s32.totalorder %s76, %s79
      %p88 = scmp.eq.s32.totalorder %s24, 3
      %p89 = por %p87, %p88
      %p90 = scmp.ne.s32.totalorder %s79, %s80
      %p91 = scmp.eq.s32.totalorder %s24, 0
      %p92 = por %p90, %p91
      %p93 = scmp.ne.s32.totalorder %s79, %s80
      %p94 = scmp.eq.s32.totalorder %s25, 3
      %p95 = por %p93, %p94
      %p97 = scmp.ne.s32.totalorder %s80, %s96
      %p98 = scmp.eq.s32.totalorder %s25, 0
      %p99 = por %p97, %p98
      %s100 = ssub.s32 %s27, %s41
      %p101 = scmp.eq.s32.totalorder %s100, 0
      %s103 = sadd.s32 %s102, 1
      %s104 = scalar_select %p101, %s102, %s103
      %p107 = pneg %p101
      %p108 = scmp.eq.s32.totalorder %s19, 3
      %p109 = por %p107, %p108
      %p110 = scmp.ne.s32.totalorder %s102, %s105
      %p111 = scmp.eq.s32.totalorder %s19, 0
      %p112 = por %p110, %p111
      %p113 = scmp.ne.s32.totalorder %s102, %s105
      %p114 = scmp.eq.s32.totalorder %s24, 3
      %p115 = por %p113, %p114
      %p116 = scmp.ne.s32.totalorder %s105, %s106
      %p117 = scmp.eq.s32.totalorder %s24, 0
      %p118 = por %p116, %p117
      %p119 = scmp.ne.s32.totalorder %s105, %s106
      %p120 = scmp.eq.s32.totalorder %s25, 3
      %p121 = por %p119, %p120
      %p123 = scmp.ne.s32.totalorder %s106, %s122
      %p124 = scmp.eq.s32.totalorder %s25, 0
      %p125 = por %p123, %p124
      %s126 = ssub.s32 %s27, %s41
      %p127 = scmp.eq.s32.totalorder %s126, 0
      %s129 = sadd.s32 %s128, 1
      %s130 = scalar_select %p127, %s128, %s129
      %p133 = pneg %p127
      %p134 = scmp.eq.s32.totalorder %s19, 3
      %p135 = por %p133, %p134
      %p136 = scmp.ne.s32.totalorder %s128, %s131
      %p137 = scmp.eq.s32.totalorder %s19, 0
      %p138 = por %p136, %p137
      %p139 = scmp.ne.s32.totalorder %s128, %s131
      %p140 = scmp.eq.s32.totalorder %s24, 3
      %p141 = por %p139, %p140
      %p142 = scmp.ne.s32.totalorder %s131, %s132
      %p143 = scmp.eq.s32.totalorder %s24, 0
      %p144 = por %p142, %p143
      %p145 = scmp.ne.s32.totalorder %s131, %s132
      %p146 = scmp.eq.s32.totalorder %s25, 3
      %p147 = por %p145, %p146
      %p149 = scmp.ne.s32.totalorder %s132, %s148
      %p150 = scmp.eq.s32.totalorder %s25, 0
      %p151 = por %p149, %p150
      %s153 = sadd.s32 %s152, 1
      %p156 = scmp.eq.s32.totalorder %s19, 3
      %p157 = scmp.ne.s32.totalorder %s152, %s154
      %p158 = scmp.eq.s32.totalorder %s19, 0
      %p159 = por %p157, %p158
      %p160 = scmp.ne.s32.totalorder %s152, %s154
      %p161 = scmp.eq.s32.totalorder %s24, 3
      %p162 = por %p160, %p161
      %p163 = scmp.ne.s32.totalorder %s154, %s155
      %p164 = scmp.eq.s32.totalorder %s24, 0
      %p165 = por %p163, %p164
      %p166 = scmp.ne.s32.totalorder %s154, %s155
      %p167 = scmp.eq.s32.totalorder %s25, 3
      %p168 = por %p166, %p167
      %p170 = scmp.ne.s32.totalorder %s155, %s169
      %p171 = scmp.eq.s32.totalorder %s25, 0
      %p172 = por %p170, %p171
      %s174 = sadd.s32 %s173, 1
      %p177 = scmp.eq.s32.totalorder %s19, 3
      %p178 = scmp.ne.s32.totalorder %s173, %s175
      %p179 = scmp.eq.s32.totalorder %s19, 0
      %p180 = por %p178, %p179
      %p181 = scmp.ne.s32.totalorder %s173, %s175
      %p182 = scmp.eq.s32.totalorder %s24, 3
      %p183 = por %p181, %p182
      %p184 = scmp.ne.s32.totalorder %s175, %s176
      %p185 = scmp.eq.s32.totalorder %s24, 0
      %p186 = por %p184, %p185
      %p187 = scmp.ne.s32.totalorder %s175, %s176
      %p188 = scmp.eq.s32.totalorder %s25, 3
      %p189 = por %p187, %p188
      %p191 = scmp.ne.s32.totalorder %s176, %s190
      %p192 = scmp.eq.s32.totalorder %s25, 0
      %p193 = por %p191, %p192
      %s194 = ssub.s32 %s26, %s45
      %s195 = ssub.s32 %s27, %s41
      %s196 = sor.u32 %s194, %s195
      %p197 = scmp.eq.s32.totalorder %s196, 0
      %s199 = sadd.s32 %s198, 1
      %s200 = scalar_select %p197, %s198, %s199
      %p203 = pneg %p197
      %p204 = scmp.eq.s32.totalorder %s19, 3
      %p205 = por %p203, %p204
      %p206 = scmp.ne.s32.totalorder %s198, %s201
      %p207 = scmp.eq.s32.totalorder %s19, 0
      %p208 = por %p206, %p207
      %p209 = scmp.ne.s32.totalorder %s198, %s201
      %p210 = scmp.eq.s32.totalorder %s24, 3
      %p211 = por %p209, %p210
      %p212 = scmp.ne.s32.totalorder %s201, %s202
      %p213 = scmp.eq.s32.totalorder %s24, 0
      %p214 = por %p212, %p213
      %p215 = scmp.ne.s32.totalorder %s201, %s202
      %p216 = scmp.eq.s32.totalorder %s25, 3
      %p217 = por %p215, %p216
      %p219 = scmp.ne.s32.totalorder %s202, %s218
      %p220 = scmp.eq.s32.totalorder %s25, 0
      %p221 = por %p219, %p220
      %p222 = scmp.le.s32.totalorder 1, %s19
      %p223 = scmp.lt.s32.totalorder %s19, 5
      %p224 = pnand %p222, %p223
      %p225 = pneg %p224
      // Predicated region
      $region9: #{tpu_custom_call.1} parent=5 // pred_check
        _
      $region10: #{tpu_custom_call.1} parent=5 // pred_check_branch
        %227 = sbr.rel (%p224) target = $region12
      $region11: #{tpu_custom_call.1} parent=5 // pred_region
        %s228 = ssub.s32 %s19, 1
        // Predicated region
        $region13: #{tpu_custom_call.1} parent=11 // pred_check
          %p229 = pneg %p118
        $region14: #{tpu_custom_call.1} parent=11 // pred_check_branch
          %231 = sbr.rel (%p229) target = $region16
        $region15: #{tpu_custom_call.1} parent=11 // pred_region
          %s233 = ssub.s32 4096, 4096
          %234 = vsyncadd [#allocation10], %s233
          %s235 = smul.addr %s30, 64
          %s236 = smul.addr %s235, 64
          %s237 = scalar_lea.hbm %s2, %s236
          %s238 = sshll.u32 [#allocation9], 4
          %s239 = int_to_ptr.vmem [resolvable:$true] %s238
          %244 = dma.hbm_to_vmem [thread:$0]  %s237, 4096, %s239, [#allocation10], 128, 128, 8
        $region16: #{tpu_custom_call.1} parent=11 // pred_fallthru
          _
        // Predicated region
        $region17: #{tpu_custom_call.1} parent=11 // pred_check
          %p245 = pneg %p144
        $region18: #{tpu_custom_call.1} parent=11 // pred_check_branch
          %247 = sbr.rel (%p245) target = $region20
        $region19: #{tpu_custom_call.1} parent=11 // pred_region
          %s249 = ssub.s32 4096, 4096
          %250 = vsyncadd [#allocation10], %s249
          %s251 = smul.addr %s30, 64
          %s252 = smul.addr %s251, 64
          %s253 = scalar_lea.hbm %s3, %s252
          %s254 = sshll.u32 [#allocation11], 4
          %s255 = int_to_ptr.vmem [resolvable:$true] %s254
          %260 = dma.hbm_to_vmem [thread:$0]  %s253, 4096, %s255, [#allocation10], 128, 128, 8
        $region20: #{tpu_custom_call.1} parent=11 // pred_fallthru
          _
        // Predicated region
        $region21: #{tpu_custom_call.1} parent=11 // pred_check
          %p261 = pneg %p165
        $region22: #{tpu_custom_call.1} parent=11 // pred_check_branch
          %263 = sbr.rel (%p261) target = $region24
        $region23: #{tpu_custom_call.1} parent=11 // pred_region
          _
        $region24: #{tpu_custom_call.1} parent=11 // pred_fallthru
          _
        // Predicated region
        $region25: #{tpu_custom_call.1} parent=11 // pred_check
          %p264 = pneg %p186
        $region26: #{tpu_custom_call.1} parent=11 // pred_check_branch
          %266 = sbr.rel (%p264) target = $region28
        $region27: #{tpu_custom_call.1} parent=11 // pred_region
          _
        $region28: #{tpu_custom_call.1} parent=11 // pred_fallthru
          _
      $region12: #{tpu_custom_call.1} parent=5 // pred_fallthru
        _
      %p267 = scmp.lt.s32.totalorder %s19, 4
      // Predicated region
      $region29: #{tpu_custom_call.1} parent=5 // pred_check
        %p268 = pneg %p267
      $region30: #{tpu_custom_call.1} parent=5 // pred_check_branch
        %270 = sbr.rel (%p268) target = $region32
      $region31: #{tpu_custom_call.1} parent=5 // pred_region
        // Predicated region
        $region33: #{tpu_custom_call.1} parent=31 // pred_check
          %p271 = pneg %p58
        $region34: #{tpu_custom_call.1} parent=31 // pred_check_branch
          %273 = sbr.rel (%p271) target = $region36
        $region35: #{tpu_custom_call.1} parent=31 // pred_region
          %p274 = scmp.lt.s32.totalorder %s26, 1
          %s275 = scalar_select %p274, %s26, 1
          %s276 = smul.addr %s275, 32
          %s277 = smul.addr %s276, 4
          %s278 = scalar_lea.vmem %s0, %s277
        $region36: #{tpu_custom_call.1} parent=31 // pred_fallthru
          _
        // Predicated region
        $region37: #{tpu_custom_call.1} parent=31 // pred_check
          %p279 = pneg %p86
        $region38: #{tpu_custom_call.1} parent=31 // pred_check_branch
          %281 = sbr.rel (%p279) target = $region40
        $region39: #{tpu_custom_call.1} parent=31 // pred_region
          %s282 = sand.u32 %s76, 1
          %s283 = scalar_lea.sflag [#allocation7], %s282
          %s284 = sand.u32 %s76, 1
          %s285 = smul.addr %s284, 64
          %s286 = scalar_lea.vmem [#allocation6], %s285
          %s287 = smul.u32 8, %s28
          %s289 = ssub.s32 1024, 1024
          %290 = vsyncadd %s283, %s289
          %s291 = smul.addr %s287, 2
          %s292 = smul.addr %s26, 32
          %s293 = sadd.s32 %s291, %s292
          %s294 = smul.addr %s293, 64
          %s295 = scalar_lea.hbm %s1, %s294
          %s296 = sshll.u32 %s286, 4
          %s297 = int_to_ptr.vmem [resolvable:$true] %s296
          %302 = dma.hbm_to_vmem [thread:$0]  %s295, 1024, %s297, %s283, 128, 128, 8
        $region40: #{tpu_custom_call.1} parent=31 // pred_fallthru
          _
      $region32: #{tpu_custom_call.1} parent=5 // pred_fallthru
        _
      %p303 = scmp.le.s32.totalorder 1, %s19
      %p304 = scmp.lt.s32.totalorder %s19, 5
      %p305 = pnand %p303, %p304
      %p306 = pneg %p305
      // Predicated region
      $region41: #{tpu_custom_call.1} parent=5 // pred_check
        _
      $region42: #{tpu_custom_call.1} parent=5 // pred_check_branch
        %308 = sbr.rel (%p305) target = $region44
      $region43: #{tpu_custom_call.1} parent=5 // pred_region
        %s309 = ssub.s32 %s19, 1
        %s310 = sand.u32 %s79, 1
        %s311 = scalar_lea.sflag [#allocation7], %s310
        %s312 = sand.u32 %s79, 1
        %s313 = smul.addr %s312, 64
        %s314 = scalar_lea.vmem [#allocation6], %s313
        // Predicated region
        $region45: #{tpu_custom_call.1} parent=43 // pred_check
          %p315 = pneg %p92
        $region46: #{tpu_custom_call.1} parent=43 // pred_check_branch
          %317 = sbr.rel (%p315) target = $region48
        $region47: #{tpu_custom_call.1} parent=43 // pred_region
          %318 = dma.done %s311, 1024
        $region48: #{tpu_custom_call.1} parent=43 // pred_fallthru
          _
        // Predicated region
        $region49: #{tpu_custom_call.1} parent=43 // pred_check
          %p319 = pneg %p118
        $region50: #{tpu_custom_call.1} parent=43 // pred_check_branch
          %321 = sbr.rel (%p319) target = $region52
        $region51: #{tpu_custom_call.1} parent=43 // pred_region
          %322 = dma.done [#allocation10], 4096
        $region52: #{tpu_custom_call.1} parent=43 // pred_fallthru
          _
        // Predicated region
        $region53: #{tpu_custom_call.1} parent=43 // pred_check
          %p323 = pneg %p144
        $region54: #{tpu_custom_call.1} parent=43 // pred_check_branch
          %325 = sbr.rel (%p323) target = $region56
        $region55: #{tpu_custom_call.1} parent=43 // pred_region
          %326 = dma.done [#allocation10], 4096
        $region56: #{tpu_custom_call.1} parent=43 // pred_fallthru
          _
        %p327 = scmp.lt.s32.totalorder %s29, 1
        %s328 = scalar_select %p327, %s29, 1
        %s329 = smul.addr %s328, 32
        %s330 = smul.addr %s329, 4
        %s331 = scalar_lea.vmem %s0, %s330
        %p332 = pneg %p64
        %p333 = pneg %p61
        %s334 = sand.u32 %s79, 1
        %s335 = scalar_lea.sflag [#allocation7], %s334
        %s336 = sand.u32 %s79, 1
        %s337 = smul.addr %s336, 64
        %s338 = scalar_lea.vmem [#allocation6], %s337
        %p339 = pneg %p92
        %p340 = pneg %p89
        %p341 = pneg %p118
        %p342 = pneg %p115
        %p343 = pneg %p144
        %p344 = pneg %p141
        %p345 = pneg %p165
        %p346 = pneg %p162
        %p347 = pneg %p186
        %p348 = pneg %p183
        %p349 = pneg %p214
        %p350 = pneg %p211
        %s351 = sand.u32 %s201, 1
        %s352 = scalar_lea.sflag [#allocation8], %s351
        %s353 = sand.u32 %s201, 1
        %s354 = smul.addr %s353, 128
        %s355 = scalar_lea.vmem [#allocation12], %s354
        %p356 = scmp.lt.s32.totalorder %s29, 1
        %s357 = scalar_select %p356, %s29, 1
        %s358 = smul.addr %s357, 32
        %s359 = smul.addr %s358, 4
        %s360 = scalar_lea.vmem %s0, %s359
        %s361 = smul.u32 8, %s31
        %s362 = smul.u32 2, %s30
        %p364 = scmp.eq.s32.totalorder %s31, 0
        // Predicated region
        $region57: #{tpu_custom_call.1} parent=43 // pred_check
          %p365 = pneg %p364
        $region58: #{tpu_custom_call.1} parent=43 // pred_check_branch
          %367 = sbr.rel (%p365) target = $region60
        $region59: #{tpu_custom_call.1} parent=43 // pred_region
          %v368 = vld [vmem:[%s4] sm:$0xff]
          %v369 = vld [vmem:[%s4 + $0x8] sm:$0xff]
          %v370 = vld [vmem:[%s4 + $0x10] sm:$0xff]
          %v371 = vld [vmem:[%s4 + $0x18] sm:$0xff]
          %v372 = vld [vmem:[%s4 + $0x20] sm:$0xff]
          %v373 = vld [vmem:[%s4 + $0x28] sm:$0xff]
          %v374 = vld [vmem:[%s4 + $0x30] sm:$0xff]
          %v375 = vld [vmem:[%s4 + $0x38] sm:$0xff]
          %v376 = vld [vmem:[%s4 + $0x40] sm:$0xff]
          %v377 = vld [vmem:[%s4 + $0x48] sm:$0xff]
          %v378 = vld [vmem:[%s4 + $0x50] sm:$0xff]
          %v379 = vld [vmem:[%s4 + $0x58] sm:$0xff]
          %v380 = vld [vmem:[%s4 + $0x60] sm:$0xff]
          %v381 = vld [vmem:[%s4 + $0x68] sm:$0xff]
          %v382 = vld [vmem:[%s4 + $0x70] sm:$0xff]
          %v383 = vld [vmem:[%s4 + $0x78] sm:$0xff]
          %v384 = vld [vmem:[%s5] sm:$0xff]
          %v385 = vld [vmem:[%s5 + $0x8] sm:$0xff]
          %v386 = vld [vmem:[%s5 + $0x10] sm:$0xff]
          %v387 = vld [vmem:[%s5 + $0x18] sm:$0xff]
          %v388 = vld [vmem:[%s5 + $0x20] sm:$0xff]
          %v389 = vld [vmem:[%s5 + $0x28] sm:$0xff]
          %v390 = vld [vmem:[%s5 + $0x30] sm:$0xff]
          %v391 = vld [vmem:[%s5 + $0x38] sm:$0xff]
          %v392 = vld [vmem:[%s5 + $0x40] sm:$0xff]
          %v393 = vld [vmem:[%s5 + $0x48] sm:$0xff]
          %v394 = vld [vmem:[%s5 + $0x50] sm:$0xff]
          %v395 = vld [vmem:[%s5 + $0x58] sm:$0xff]
          %v396 = vld [vmem:[%s5 + $0x60] sm:$0xff]
          %v397 = vld [vmem:[%s5 + $0x68] sm:$0xff]
          %v398 = vld [vmem:[%s5 + $0x70] sm:$0xff]
          %v399 = vld [vmem:[%s5 + $0x78] sm:$0xff]
          %v400 = vld [vmem:[%s360] sm:$0xff]
          %v401 = vld [vmem:[%s360 + $0x8] sm:$0xff]
          %v402 = vld [vmem:[%s360 + $0x10] sm:$0xff]
          %v403 = vld [vmem:[%s360 + $0x18] sm:$0xff]
          %v404 = vld [vmem:[%s360 + $0x20] sm:$0xff]
          %v405 = vld [vmem:[%s360 + $0x28] sm:$0xff]
          %v406 = vld [vmem:[%s360 + $0x30] sm:$0xff]
          %v407 = vld [vmem:[%s360 + $0x38] sm:$0xff]
          %v408 = vld [vmem:[%s360 + $0x40] sm:$0xff]
          %v409 = vld [vmem:[%s360 + $0x48] sm:$0xff]
          %v410 = vld [vmem:[%s360 + $0x50] sm:$0xff]
          %v411 = vld [vmem:[%s360 + $0x58] sm:$0xff]
          %v412 = vld [vmem:[%s360 + $0x60] sm:$0xff]
          %v413 = vld [vmem:[%s360 + $0x68] sm:$0xff]
          %v414 = vld [vmem:[%s360 + $0x70] sm:$0xff]
          %v415 = vld [vmem:[%s360 + $0x78] sm:$0xff]
          %v416 = vld [vmem:[#allocation9] sm:$0xff]
          %v417 = vld [vmem:[#allocation9 + $0x8] sm:$0xff]
          %v418 = vld [vmem:[#allocation9 + $0x10] sm:$0xff]
          %v419 = vld [vmem:[#allocation9 + $0x18] sm:$0xff]
          %v420 = vld [vmem:[#allocation9 + $0x20] sm:$0xff]
          %v421 = vld [vmem:[#allocation9 + $0x28] sm:$0xff]
          %v422 = vld [vmem:[#allocation9 + $0x30] sm:$0xff]
          %v423 = vld [vmem:[#allocation9 + $0x38] sm:$0xff]
          %v424 = vld [vmem:[#allocation9 + $0x40] sm:$0xff]
          %v425 = vld [vmem:[#allocation9 + $0x48] sm:$0xff]
          %v426 = vld [vmem:[#allocation9 + $0x50] sm:$0xff]
          %v427 = vld [vmem:[#allocation9 + $0x58] sm:$0xff]
          %v428 = vld [vmem:[#allocation9 + $0x60] sm:$0xff]
          %v429 = vld [vmem:[#allocation9 + $0x68] sm:$0xff]
          %v430 = vld [vmem:[#allocation9 + $0x70] sm:$0xff]
          %v431 = vld [vmem:[#allocation9 + $0x78] sm:$0xff]
          %v432 = vld [vmem:[#allocation9 + $0x80] sm:$0xff]
          %v433 = vld [vmem:[#allocation9 + $0x88] sm:$0xff]
          %v434 = vld [vmem:[#allocation9 + $0x90] sm:$0xff]
          %v435 = vld [vmem:[#allocation9 + $0x98] sm:$0xff]
          %v436 = vld [vmem:[#allocation9 + $0xa0] sm:$0xff]
          %v437 = vld [vmem:[#allocation9 + $0xa8] sm:$0xff]
          %v438 = vld [vmem:[#allocation9 + $0xb0] sm:$0xff]
          %v439 = vld [vmem:[#allocation9 + $0xb8] sm:$0xff]
          %v440 = vld [vmem:[#allocation9 + $0xc0] sm:$0xff]
          %v441 = vld [vmem:[#allocation9 + $0xc8] sm:$0xff]
          %v442 = vld [vmem:[#allocation9 + $0xd0] sm:$0xff]
          %v443 = vld [vmem:[#allocation9 + $0xd8] sm:$0xff]
          %v444 = vld [vmem:[#allocation9 + $0xe0] sm:$0xff]
          %v445 = vld [vmem:[#allocation9 + $0xe8] sm:$0xff]
          %v446 = vld [vmem:[#allocation9 + $0xf0] sm:$0xff]
          %v447 = vld [vmem:[#allocation9 + $0xf8] sm:$0xff]
          %v464 = vunpack.c.l.b16 %v400
          %v465 = vunpack.c.h.b16 %v400
          %v466 = vunpack.c.l.b16 %v401
          %v467 = vunpack.c.h.b16 %v401
          %v468 = vunpack.c.l.b16 %v402
          %v469 = vunpack.c.h.b16 %v402
          %v470 = vunpack.c.l.b16 %v403
          %v471 = vunpack.c.h.b16 %v403
          %v472 = vunpack.c.l.b16 %v404
          %v473 = vunpack.c.h.b16 %v404
          %v474 = vunpack.c.l.b16 %v405
          %v475 = vunpack.c.h.b16 %v405
          %v476 = vunpack.c.l.b16 %v406
          %v477 = vunpack.c.h.b16 %v406
          %v478 = vunpack.c.l.b16 %v407
          %v479 = vunpack.c.h.b16 %v407
          %v480 = vunpack.c.l.b16 %v408
          %v481 = vunpack.c.h.b16 %v408
          %v482 = vunpack.c.l.b16 %v409
          %v483 = vunpack.c.h.b16 %v409
          %v484 = vunpack.c.l.b16 %v410
          %v485 = vunpack.c.h.b16 %v410
          %v486 = vunpack.c.l.b16 %v411
          %v487 = vunpack.c.h.b16 %v411
          %v488 = vunpack.c.l.b16 %v412
          %v489 = vunpack.c.h.b16 %v412
          %v490 = vunpack.c.l.b16 %v413
          %v491 = vunpack.c.h.b16 %v413
          %v492 = vunpack.c.l.b16 %v414
          %v493 = vunpack.c.h.b16 %v414
          %v494 = vunpack.c.l.b16 %v415
          %v495 = vunpack.c.h.b16 %v415
          %v496 = vpack.c.b16 %v466, %v464
          %v497 = vpack.c.b16 %v467, %v465
          %v498 = vpack.c.b16 %v470, %v468
          %v499 = vpack.c.b16 %v471, %v469
          %v500 = vpack.c.b16 %v474, %v472
          %v501 = vpack.c.b16 %v475, %v473
          %v502 = vpack.c.b16 %v478, %v476
          %v503 = vpack.c.b16 %v479, %v477
          %v504 = vpack.c.b16 %v482, %v480
          %v505 = vpack.c.b16 %v483, %v481
          %v506 = vpack.c.b16 %v486, %v484
          %v507 = vpack.c.b16 %v487, %v485
          %v508 = vpack.c.b16 %v490, %v488
          %v509 = vpack.c.b16 %v491, %v489
          %v510 = vpack.c.b16 %v494, %v492
          %v511 = vpack.c.b16 %v495, %v493
          %v560 = vunpack.c.l.b16 %v416
          %v561 = vunpack.c.h.b16 %v416
          %v562 = vunpack.c.l.b16 %v417
          %v563 = vunpack.c.h.b16 %v417
          %v564 = vunpack.c.l.b16 %v418
          %v565 = vunpack.c.h.b16 %v418
          %v566 = vunpack.c.l.b16 %v419
          %v567 = vunpack.c.h.b16 %v419
          %v568 = vunpack.c.l.b16 %v420
          %v569 = vunpack.c.h.b16 %v420
          %v570 = vunpack.c.l.b16 %v421
          %v571 = vunpack.c.h.b16 %v421
          %v572 = vunpack.c.l.b16 %v422
          %v573 = vunpack.c.h.b16 %v422
          %v574 = vunpack.c.l.b16 %v423
          %v575 = vunpack.c.h.b16 %v423
          %v576 = vunpack.c.l.b16 %v424
          %v577 = vunpack.c.h.b16 %v424
          %v578 = vunpack.c.l.b16 %v425
          %v579 = vunpack.c.h.b16 %v425
          %v580 = vunpack.c.l.b16 %v426
          %v581 = vunpack.c.h.b16 %v426
          %v582 = vunpack.c.l.b16 %v427
          %v583 = vunpack.c.h.b16 %v427
          %v584 = vunpack.c.l.b16 %v428
          %v585 = vunpack.c.h.b16 %v428
          %v586 = vunpack.c.l.b16 %v429
          %v587 = vunpack.c.h.b16 %v429
          %v588 = vunpack.c.l.b16 %v430
          %v589 = vunpack.c.h.b16 %v430
          %v590 = vunpack.c.l.b16 %v431
          %v591 = vunpack.c.h.b16 %v431
          %v592 = vunpack.c.l.b16 %v432
          %v593 = vunpack.c.h.b16 %v432
          %v594 = vunpack.c.l.b16 %v433
          %v595 = vunpack.c.h.b16 %v433
          %v596 = vunpack.c.l.b16 %v434
          %v597 = vunpack.c.h.b16 %v434
          %v598 = vunpack.c.l.b16 %v435
          %v599 = vunpack.c.h.b16 %v435
          %v600 = vunpack.c.l.b16 %v436
          %v601 = vunpack.c.h.b16 %v436
          %v602 = vunpack.c.l.b16 %v437
          %v603 = vunpack.c.h.b16 %v437
          %v604 = vunpack.c.l.b16 %v438
          %v605 = vunpack.c.h.b16 %v438
          %v606 = vunpack.c.l.b16 %v439
          %v607 = vunpack.c.h.b16 %v439
          %v608 = vunpack.c.l.b16 %v440
          %v609 = vunpack.c.h.b16 %v440
          %v610 = vunpack.c.l.b16 %v441
          %v611 = vunpack.c.h.b16 %v441
          %v612 = vunpack.c.l.b16 %v442
          %v613 = vunpack.c.h.b16 %v442
          %v614 = vunpack.c.l.b16 %v443
          %v615 = vunpack.c.h.b16 %v443
          %v616 = vunpack.c.l.b16 %v444
          %v617 = vunpack.c.h.b16 %v444
          %v618 = vunpack.c.l.b16 %v445
          %v619 = vunpack.c.h.b16 %v445
          %v620 = vunpack.c.l.b16 %v446
          %v621 = vunpack.c.h.b16 %v446
          %v622 = vunpack.c.l.b16 %v447
          %v623 = vunpack.c.h.b16 %v447
          %v624 = vpack.c.b16 %v562, %v560
          %v625 = vpack.c.b16 %v563, %v561
          %v626 = vpack.c.b16 %v566, %v564
          %v627 = vpack.c.b16 %v567, %v565
          %v628 = vpack.c.b16 %v570, %v568
          %v629 = vpack.c.b16 %v571, %v569
          %v630 = vpack.c.b16 %v574, %v572
          %v631 = vpack.c.b16 %v575, %v573
          %v632 = vpack.c.b16 %v578, %v576
          %v633 = vpack.c.b16 %v579, %v577
          %v634 = vpack.c.b16 %v582, %v580
          %v635 = vpack.c.b16 %v583, %v581
          %v636 = vpack.c.b16 %v586, %v584
          %v637 = vpack.c.b16 %v587, %v585
          %v638 = vpack.c.b16 %v590, %v588
          %v639 = vpack.c.b16 %v591, %v589
          %v640 = vpack.c.b16 %v594, %v592
          %v641 = vpack.c.b16 %v595, %v593
          %v642 = vpack.c.b16 %v598, %v596
          %v643 = vpack.c.b16 %v599, %v597
          %v644 = vpack.c.b16 %v602, %v600
          %v645 = vpack.c.b16 %v603, %v601
          %v646 = vpack.c.b16 %v606, %v604
          %v647 = vpack.c.b16 %v607, %v605
          %v648 = vpack.c.b16 %v610, %v608
          %v649 = vpack.c.b16 %v611, %v609
          %v650 = vpack.c.b16 %v614, %v612
          %v651 = vpack.c.b16 %v615, %v613
          %v652 = vpack.c.b16 %v618, %v616
          %v653 = vpack.c.b16 %v619, %v617
          %v654 = vpack.c.b16 %v622, %v620
          %v655 = vpack.c.b16 %v623, %v621
          %688 = vmatprep.subr.bf16.mxu0 %v639
          %689 = vmatpush1.bf16.msra.mxu0 %v638
          %690 = vmatprep.subr.bf16.mxu0 %v637
          %691 = vmatpush1.bf16.msra.mxu0 %v636
          %692 = vmatprep.subr.bf16.mxu0 %v635
          %693 = vmatpush1.bf16.msra.mxu0 %v634
          %694 = vmatprep.subr.bf16.mxu0 %v633
          %695 = vmatpush1.bf16.msra.mxu0 %v632
          %696 = vmatprep.subr.bf16.mxu0 %v631
          %697 = vmatpush1.bf16.msra.mxu0 %v630
          %698 = vmatprep.subr.bf16.mxu0 %v629
          %699 = vmatpush1.bf16.msra.mxu0 %v628
          %700 = vmatprep.subr.bf16.mxu0 %v627
          %701 = vmatpush1.bf16.msra.mxu0 %v626
          %702 = vmatprep.subr.bf16.mxu0 %v625
          %703 = vmatpush1.bf16.msra.mxu0 %v624
          %704 = vmatprep.subr.bf16.mxu0 %v655
          %705 = vmatpush2.bf16.msra.mxu0 %v654
          %706 = vmatprep.subr.bf16.mxu0 %v653
          %707 = vmatpush2.bf16.msra.mxu0 %v652
          %708 = vmatprep.subr.bf16.mxu0 %v651
          %709 = vmatpush2.bf16.msra.mxu0 %v650
          %710 = vmatprep.subr.bf16.mxu0 %v649
          %711 = vmatpush2.bf16.msra.mxu0 %v648
          %712 = vmatprep.subr.bf16.mxu0 %v647
          %713 = vmatpush2.bf16.msra.mxu0 %v646
          %714 = vmatprep.subr.bf16.mxu0 %v645
          %715 = vmatpush2.bf16.msra.mxu0 %v644
          %716 = vmatprep.subr.bf16.mxu0 %v643
          %717 = vmatpush2.bf16.msra.mxu0 %v642
          %718 = vmatprep.subr.bf16.mxu0 %v641
          %719 = vmatpush2.bf16.msra.mxu0 %v640
          %720 = vmatprep.mubr.bf16.mxu0 %v497
          %721 = vmatmul.mubr.bf16.gmra.mxu0 %v496
          %v722 = vpop.f32.mrf.mxu0
          %v723 = vadd.f32 0.0, %v722
          %v724 = vpop.f32.mrf.mxu0
          %v725 = vadd.f32 0.0, %v724
          %v726 = vpop.f32.mrf.mxu0
          %v727 = vadd.f32 0.0, %v726
          %v728 = vpop.f32.mrf.mxu0
          %v729 = vadd.f32 0.0, %v728
          %730 = vmatprep.mubr.bf16.mxu0 %v499
          %731 = vmatmul.mubr.bf16.gmra.mxu0 %v498
          %v732 = vpop.f32.mrf.mxu0
          %v733 = vadd.f32 0.0, %v732
          %v734 = vpop.f32.mrf.mxu0
          %v735 = vadd.f32 0.0, %v734
          %v736 = vpop.f32.mrf.mxu0
          %v737 = vadd.f32 0.0, %v736
          %v738 = vpop.f32.mrf.mxu0
          %v739 = vadd.f32 0.0, %v738
          %740 = vmatprep.mubr.bf16.mxu0 %v501
          %741 = vmatmul.mubr.bf16.gmra.mxu0 %v500
          %v742 = vpop.f32.mrf.mxu0
          %v743 = vadd.f32 0.0, %v742
          %v744 = vpop.f32.mrf.mxu0
          %v745 = vadd.f32 0.0, %v744
          %v746 = vpop.f32.mrf.mxu0
          %v747 = vadd.f32 0.0, %v746
          %v748 = vpop.f32.mrf.mxu0
          %v749 = vadd.f32 0.0, %v748
          %750 = vmatprep.mubr.bf16.mxu0 %v503
          %751 = vmatmul.mubr.bf16.gmra.mxu0 %v502
          %v752 = vpop.f32.mrf.mxu0
          %v753 = vadd.f32 0.0, %v752
          %v754 = vpop.f32.mrf.mxu0
          %v755 = vadd.f32 0.0, %v754
          %v756 = vpop.f32.mrf.mxu0
          %v757 = vadd.f32 0.0, %v756
          %v758 = vpop.f32.mrf.mxu0
          %v759 = vadd.f32 0.0, %v758
          %760 = vmatprep.mubr.bf16.mxu0 %v505
          %761 = vmatmul.mubr.bf16.gmra.mxu0 %v504
          %v762 = vpop.f32.mrf.mxu0
          %v763 = vadd.f32 0.0, %v762
          %v764 = vpop.f32.mrf.mxu0
          %v765 = vadd.f32 0.0, %v764
          %v766 = vpop.f32.mrf.mxu0
          %v767 = vadd.f32 0.0, %v766
          %v768 = vpop.f32.mrf.mxu0
          %v769 = vadd.f32 0.0, %v768
          %770 = vmatprep.mubr.bf16.mxu0 %v507
          %771 = vmatmul.mubr.bf16.gmra.mxu0 %v506
          %v772 = vpop.f32.mrf.mxu0
          %v773 = vadd.f32 0.0, %v772
          %v774 = vpop.f32.mrf.mxu0
          %v775 = vadd.f32 0.0, %v774
          %v776 = vpop.f32.mrf.mxu0
          %v777 = vadd.f32 0.0, %v776
          %v778 = vpop.f32.mrf.mxu0
          %v779 = vadd.f32 0.0, %v778
          %780 = vmatprep.mubr.bf16.mxu0 %v509
          %781 = vmatmul.mubr.bf16.gmra.mxu0 %v508
          %v782 = vpop.f32.mrf.mxu0
          %v783 = vadd.f32 0.0, %v782
          %v784 = vpop.f32.mrf.mxu0
          %v785 = vadd.f32 0.0, %v784
          %v786 = vpop.f32.mrf.mxu0
          %v787 = vadd.f32 0.0, %v786
          %v788 = vpop.f32.mrf.mxu0
          %v789 = vadd.f32 0.0, %v788
          %790 = vmatprep.mubr.bf16.mxu0 %v511
          %791 = vmatmul.mubr.bf16.gmra.mxu0 %v510
          %v792 = vpop.f32.mrf.mxu0
          %v793 = vadd.f32 0.0, %v792
          %v794 = vpop.f32.mrf.mxu0
          %v795 = vadd.f32 0.0, %v794
          %v796 = vpop.f32.mrf.mxu0
          %v797 = vadd.f32 0.0, %v796
          %v798 = vpop.f32.mrf.mxu0
          %v799 = vadd.f32 0.0, %v798
          %800 = vdwg.mxu0
          %v801 = vmul.f32 %v723, %v368
          %v802 = vmul.f32 %v727, %v369
          %v803 = vmul.f32 %v733, %v370
          %v804 = vmul.f32 %v737, %v371
          %v805 = vmul.f32 %v743, %v372
          %v806 = vmul.f32 %v747, %v373
          %v807 = vmul.f32 %v753, %v374
          %v808 = vmul.f32 %v757, %v375
          %v809 = vmul.f32 %v763, %v376
          %v810 = vmul.f32 %v767, %v377
          %v811 = vmul.f32 %v773, %v378
          %v812 = vmul.f32 %v777, %v379
          %v813 = vmul.f32 %v783, %v380
          %v814 = vmul.f32 %v787, %v381
          %v815 = vmul.f32 %v793, %v382
          %v816 = vmul.f32 %v797, %v383
          %833 = vrot.lane.b32.xlu0 %v384, 64
          %v834 = vpop.permute.xlu0 %833
          %835 = vrot.lane.b32.xlu0 %v385, 64
          %v836 = vpop.permute.xlu0 %835
          %837 = vrot.lane.b32.xlu0 %v386, 64
          %v838 = vpop.permute.xlu0 %837
          %839 = vrot.lane.b32.xlu0 %v387, 64
          %v840 = vpop.permute.xlu0 %839
          %841 = vrot.lane.b32.xlu0 %v388, 64
          %v842 = vpop.permute.xlu0 %841
          %843 = vrot.lane.b32.xlu0 %v389, 64
          %v844 = vpop.permute.xlu0 %843
          %845 = vrot.lane.b32.xlu0 %v390, 64
          %v846 = vpop.permute.xlu0 %845
          %847 = vrot.lane.b32.xlu0 %v391, 64
          %v848 = vpop.permute.xlu0 %847
          %849 = vrot.lane.b32.xlu0 %v392, 64
          %v850 = vpop.permute.xlu0 %849
          %851 = vrot.lane.b32.xlu0 %v393, 64
          %v852 = vpop.permute.xlu0 %851
          %853 = vrot.lane.b32.xlu0 %v394, 64
          %v854 = vpop.permute.xlu0 %853
          %855 = vrot.lane.b32.xlu0 %v395, 64
          %v856 = vpop.permute.xlu0 %855
          %857 = vrot.lane.b32.xlu0 %v396, 64
          %v858 = vpop.permute.xlu0 %857
          %859 = vrot.lane.b32.xlu0 %v397, 64
          %v860 = vpop.permute.xlu0 %859
          %861 = vrot.lane.b32.xlu0 %v398, 64
          %v862 = vpop.permute.xlu0 %861
          %863 = vrot.lane.b32.xlu0 %v399, 64
          %v864 = vpop.permute.xlu0 %863
          %v881 = vmul.f32 %v723, %v834
          %v882 = vmul.f32 %v727, %v836
          %v883 = vmul.f32 %v733, %v838
          %v884 = vmul.f32 %v737, %v840
          %v885 = vmul.f32 %v743, %v842
          %v886 = vmul.f32 %v747, %v844
          %v887 = vmul.f32 %v753, %v846
          %v888 = vmul.f32 %v757, %v848
          %v889 = vmul.f32 %v763, %v850
          %v890 = vmul.f32 %v767, %v852
          %v891 = vmul.f32 %v773, %v854
          %v892 = vmul.f32 %v777, %v856
          %v893 = vmul.f32 %v783, %v858
          %v894 = vmul.f32 %v787, %v860
          %v895 = vmul.f32 %v793, %v862
          %v896 = vmul.f32 %v797, %v864
          %913 = vrot.lane.b32.xlu0 %v881, 64
          %v914 = vpop.permute.xlu0 %913
          %915 = vrot.lane.b32.xlu0 %v882, 64
          %v916 = vpop.permute.xlu0 %915
          %917 = vrot.lane.b32.xlu0 %v883, 64
          %v918 = vpop.permute.xlu0 %917
          %919 = vrot.lane.b32.xlu0 %v884, 64
          %v920 = vpop.permute.xlu0 %919
          %921 = vrot.lane.b32.xlu0 %v885, 64
          %v922 = vpop.permute.xlu0 %921
          %923 = vrot.lane.b32.xlu0 %v886, 64
          %v924 = vpop.permute.xlu0 %923
          %925 = vrot.lane.b32.xlu0 %v887, 64
          %v926 = vpop.permute.xlu0 %925
          %927 = vrot.lane.b32.xlu0 %v888, 64
          %v928 = vpop.permute.xlu0 %927
          %929 = vrot.lane.b32.xlu0 %v889, 64
          %v930 = vpop.permute.xlu0 %929
          %931 = vrot.lane.b32.xlu0 %v890, 64
          %v932 = vpop.permute.xlu0 %931
          %933 = vrot.lane.b32.xlu0 %v891, 64
          %v934 = vpop.permute.xlu0 %933
          %935 = vrot.lane.b32.xlu0 %v892, 64
          %v936 = vpop.permute.xlu0 %935
          %937 = vrot.lane.b32.xlu0 %v893, 64
          %v938 = vpop.permute.xlu0 %937
          %939 = vrot.lane.b32.xlu0 %v894, 64
          %v940 = vpop.permute.xlu0 %939
          %941 = vrot.lane.b32.xlu0 %v895, 64
          %v942 = vpop.permute.xlu0 %941
          %943 = vrot.lane.b32.xlu0 %v896, 64
          %v944 = vpop.permute.xlu0 %943
          %v961 = vsub.f32 %v801, %v914
          %v962 = vsub.f32 %v802, %v916
          %v963 = vsub.f32 %v803, %v918
          %v964 = vsub.f32 %v804, %v920
          %v965 = vsub.f32 %v805, %v922
          %v966 = vsub.f32 %v806, %v924
          %v967 = vsub.f32 %v807, %v926
          %v968 = vsub.f32 %v808, %v928
          %v969 = vsub.f32 %v809, %v930
          %v970 = vsub.f32 %v810, %v932
          %v971 = vsub.f32 %v811, %v934
          %v972 = vsub.f32 %v812, %v936
          %v973 = vsub.f32 %v813, %v938
          %v974 = vsub.f32 %v814, %v940
          %v975 = vsub.f32 %v815, %v942
          %v976 = vsub.f32 %v816, %v944
          %993 = vrot.lane.b32.xlu0 %v368, 64
          %v994 = vpop.permute.xlu0 %993
          %995 = vrot.lane.b32.xlu0 %v369, 64
          %v996 = vpop.permute.xlu0 %995
          %997 = vrot.lane.b32.xlu0 %v370, 64
          %v998 = vpop.permute.xlu0 %997
          %999 = vrot.lane.b32.xlu0 %v371, 64
          %v1000 = vpop.permute.xlu0 %999
          %1001 = vrot.lane.b32.xlu0 %v372, 64
          %v1002 = vpop.permute.xlu0 %1001
          %1003 = vrot.lane.b32.xlu0 %v373, 64
          %v1004 = vpop.permute.xlu0 %1003
          %1005 = vrot.lane.b32.xlu0 %v374, 64
          %v1006 = vpop.permute.xlu0 %1005
          %1007 = vrot.lane.b32.xlu0 %v375, 64
          %v1008 = vpop.permute.xlu0 %1007
          %1009 = vrot.lane.b32.xlu0 %v376, 64
          %v1010 = vpop.permute.xlu0 %1009
          %1011 = vrot.lane.b32.xlu0 %v377, 64
          %v1012 = vpop.permute.xlu0 %1011
          %1013 = vrot.lane.b32.xlu0 %v378, 64
          %v1014 = vpop.permute.xlu0 %1013
          %1015 = vrot.lane.b32.xlu0 %v379, 64
          %v1016 = vpop.permute.xlu0 %1015
          %1017 = vrot.lane.b32.xlu0 %v380, 64
          %v1018 = vpop.permute.xlu0 %1017
          %1019 = vrot.lane.b32.xlu0 %v381, 64
          %v1020 = vpop.permute.xlu0 %1019
          %1021 = vrot.lane.b32.xlu0 %v382, 64
          %v1022 = vpop.permute.xlu0 %1021
          %1023 = vrot.lane.b32.xlu0 %v383, 64
          %v1024 = vpop.permute.xlu0 %1023
          %v1041 = vmul.f32 %v723, %v994
          %v1042 = vmul.f32 %v727, %v996
          %v1043 = vmul.f32 %v733, %v998
          %v1044 = vmul.f32 %v737, %v1000
          %v1045 = vmul.f32 %v743, %v1002
          %v1046 = vmul.f32 %v747, %v1004
          %v1047 = vmul.f32 %v753, %v1006
          %v1048 = vmul.f32 %v757, %v1008
          %v1049 = vmul.f32 %v763, %v1010
          %v1050 = vmul.f32 %v767, %v1012
          %v1051 = vmul.f32 %v773, %v1014
          %v1052 = vmul.f32 %v777, %v1016
          %v1053 = vmul.f32 %v783, %v1018
          %v1054 = vmul.f32 %v787, %v1020
          %v1055 = vmul.f32 %v793, %v1022
          %v1056 = vmul.f32 %v797, %v1024
          %v1057 = vmul.f32 %v723, %v384
          %v1058 = vmul.f32 %v727, %v385
          %v1059 = vmul.f32 %v733, %v386
          %v1060 = vmul.f32 %v737, %v387
          %v1061 = vmul.f32 %v743, %v388
          %v1062 = vmul.f32 %v747, %v389
          %v1063 = vmul.f32 %v753, %v390
          %v1064 = vmul.f32 %v757, %v391
          %v1065 = vmul.f32 %v763, %v392
          %v1066 = vmul.f32 %v767, %v393
          %v1067 = vmul.f32 %v773, %v394
          %v1068 = vmul.f32 %v777, %v395
          %v1069 = vmul.f32 %v783, %v396
          %v1070 = vmul.f32 %v787, %v397
          %v1071 = vmul.f32 %v793, %v398
          %v1072 = vmul.f32 %v797, %v399
          %1089 = vrot.lane.b32.xlu0 %v1057, 64
          %v1090 = vpop.permute.xlu0 %1089
          %1091 = vrot.lane.b32.xlu0 %v1058, 64
          %v1092 = vpop.permute.xlu0 %1091
          %1093 = vrot.lane.b32.xlu0 %v1059, 64
          %v1094 = vpop.permute.xlu0 %1093
          %1095 = vrot.lane.b32.xlu0 %v1060, 64
          %v1096 = vpop.permute.xlu0 %1095
          %1097 = vrot.lane.b32.xlu0 %v1061, 64
          %v1098 = vpop.permute.xlu0 %1097
          %1099 = vrot.lane.b32.xlu0 %v1062, 64
          %v1100 = vpop.permute.xlu0 %1099
          %1101 = vrot.lane.b32.xlu0 %v1063, 64
          %v1102 = vpop.permute.xlu0 %1101
          %1103 = vrot.lane.b32.xlu0 %v1064, 64
          %v1104 = vpop.permute.xlu0 %1103
          %1105 = vrot.lane.b32.xlu0 %v1065, 64
          %v1106 = vpop.permute.xlu0 %1105
          %1107 = vrot.lane.b32.xlu0 %v1066, 64
          %v1108 = vpop.permute.xlu0 %1107
          %1109 = vrot.lane.b32.xlu0 %v1067, 64
          %v1110 = vpop.permute.xlu0 %1109
          %1111 = vrot.lane.b32.xlu0 %v1068, 64
          %v1112 = vpop.permute.xlu0 %1111
          %1113 = vrot.lane.b32.xlu0 %v1069, 64
          %v1114 = vpop.permute.xlu0 %1113
          %1115 = vrot.lane.b32.xlu0 %v1070, 64
          %v1116 = vpop.permute.xlu0 %1115
          %1117 = vrot.lane.b32.xlu0 %v1071, 64
          %v1118 = vpop.permute.xlu0 %1117
          %1119 = vrot.lane.b32.xlu0 %v1072, 64
          %v1120 = vpop.permute.xlu0 %1119
          %v1137 = vadd.f32 %v1041, %v1090
          %v1138 = vadd.f32 %v1042, %v1092
          %v1139 = vadd.f32 %v1043, %v1094
          %v1140 = vadd.f32 %v1044, %v1096
          %v1141 = vadd.f32 %v1045, %v1098
          %v1142 = vadd.f32 %v1046, %v1100
          %v1143 = vadd.f32 %v1047, %v1102
          %v1144 = vadd.f32 %v1048, %v1104
          %v1145 = vadd.f32 %v1049, %v1106
          %v1146 = vadd.f32 %v1050, %v1108
          %v1147 = vadd.f32 %v1051, %v1110
          %v1148 = vadd.f32 %v1052, %v1112
          %v1149 = vadd.f32 %v1053, %v1114
          %v1150 = vadd.f32 %v1054, %v1116
          %v1151 = vadd.f32 %v1055, %v1118
          %v1152 = vadd.f32 %v1056, %v1120
          %vm1153 = vcmask 523264
          %v1154 = vsel %vm1153, %v961, %v1137
          %v1155 = vsel %vm1153, %v962, %v1138
          %v1156 = vsel %vm1153, %v963, %v1139
          %v1157 = vsel %vm1153, %v964, %v1140
          %v1158 = vsel %vm1153, %v965, %v1141
          %v1159 = vsel %vm1153, %v966, %v1142
          %v1160 = vsel %vm1153, %v967, %v1143
          %v1161 = vsel %vm1153, %v968, %v1144
          %v1162 = vsel %vm1153, %v969, %v1145
          %v1163 = vsel %vm1153, %v970, %v1146
          %v1164 = vsel %vm1153, %v971, %v1147
          %v1165 = vsel %vm1153, %v972, %v1148
          %v1166 = vsel %vm1153, %v973, %v1149
          %v1167 = vsel %vm1153, %v974, %v1150
          %v1168 = vsel %vm1153, %v975, %v1151
          %v1169 = vsel %vm1153, %v976, %v1152
          %v1170 = vpack.c.bf16 %v1155, %v1154
          %v1171 = vpack.c.bf16 %v1157, %v1156
          %v1172 = vpack.c.bf16 %v1159, %v1158
          %v1173 = vpack.c.bf16 %v1161, %v1160
          %v1174 = vpack.c.bf16 %v1163, %v1162
          %v1175 = vpack.c.bf16 %v1165, %v1164
          %v1176 = vpack.c.bf16 %v1167, %v1166
          %v1177 = vpack.c.bf16 %v1169, %v1168
          %v1186 = vunpack.c.l.b16 %v1170
          %v1187 = vunpack.c.h.b16 %v1170
          %v1188 = vunpack.c.l.b16 %v1171
          %v1189 = vunpack.c.h.b16 %v1171
          %v1190 = vunpack.c.l.b16 %v1172
          %v1191 = vunpack.c.h.b16 %v1172
          %v1192 = vunpack.c.l.b16 %v1173
          %v1193 = vunpack.c.h.b16 %v1173
          %v1194 = vunpack.c.l.b16 %v1174
          %v1195 = vunpack.c.h.b16 %v1174
          %v1196 = vunpack.c.l.b16 %v1175
          %v1197 = vunpack.c.h.b16 %v1175
          %v1198 = vunpack.c.l.b16 %v1176
          %v1199 = vunpack.c.h.b16 %v1176
          %v1200 = vunpack.c.l.b16 %v1177
          %v1201 = vunpack.c.h.b16 %v1177
          %v1202 = vpack.c.b16 %v1186, %v1186
          %v1203 = vpack.c.b16 %v1187, %v1187
          %v1204 = vpack.c.b16 %v1188, %v1188
          %v1205 = vpack.c.b16 %v1189, %v1189
          %v1206 = vpack.c.b16 %v1190, %v1190
          %v1207 = vpack.c.b16 %v1191, %v1191
          %v1208 = vpack.c.b16 %v1192, %v1192
          %v1209 = vpack.c.b16 %v1193, %v1193
          %v1210 = vpack.c.b16 %v1194, %v1194
          %v1211 = vpack.c.b16 %v1195, %v1195
          %v1212 = vpack.c.b16 %v1196, %v1196
          %v1213 = vpack.c.b16 %v1197, %v1197
          %v1214 = vpack.c.b16 %v1198, %v1198
          %v1215 = vpack.c.b16 %v1199, %v1199
          %v1216 = vpack.c.b16 %v1200, %v1200
          %v1217 = vpack.c.b16 %v1201, %v1201
          %1234 = vst [vmem:[#allocation2] sm:$0xf] %v1202
          %1235 = vst [vmem:[#allocation2 + $0x8] sm:$0xf] %v1203
          %1236 = vst [vmem:[#allocation2 + $0x10] sm:$0xf] %v1204
          %1237 = vst [vmem:[#allocation2 + $0x18] sm:$0xf] %v1205
          %1238 = vst [vmem:[#allocation2 + $0x20] sm:$0xf] %v1206
          %1239 = vst [vmem:[#allocation2 + $0x28] sm:$0xf] %v1207
          %1240 = vst [vmem:[#allocation2 + $0x30] sm:$0xf] %v1208
          %1241 = vst [vmem:[#allocation2 + $0x38] sm:$0xf] %v1209
          %1242 = vst [vmem:[#allocation2 + $0x40] sm:$0xf] %v1210
          %1243 = vst [vmem:[#allocation2 + $0x48] sm:$0xf] %v1211
          %1244 = vst [vmem:[#allocation2 + $0x50] sm:$0xf] %v1212
          %1245 = vst [vmem:[#allocation2 + $0x58] sm:$0xf] %v1213
          %1246 = vst [vmem:[#allocation2 + $0x60] sm:$0xf] %v1214
          %1247 = vst [vmem:[#allocation2 + $0x68] sm:$0xf] %v1215
          %1248 = vst [vmem:[#allocation2 + $0x70] sm:$0xf] %v1216
          %1249 = vst [vmem:[#allocation2 + $0x78] sm:$0xf] %v1217
          %v1250 = vmul.f32 %v725, %v368
          %v1251 = vmul.f32 %v729, %v369
          %v1252 = vmul.f32 %v735, %v370
          %v1253 = vmul.f32 %v739, %v371
          %v1254 = vmul.f32 %v745, %v372
          %v1255 = vmul.f32 %v749, %v373
          %v1256 = vmul.f32 %v755, %v374
          %v1257 = vmul.f32 %v759, %v375
          %v1258 = vmul.f32 %v765, %v376
          %v1259 = vmul.f32 %v769, %v377
          %v1260 = vmul.f32 %v775, %v378
          %v1261 = vmul.f32 %v779, %v379
          %v1262 = vmul.f32 %v785, %v380
          %v1263 = vmul.f32 %v789, %v381
          %v1264 = vmul.f32 %v795, %v382
          %v1265 = vmul.f32 %v799, %v383
          %v1266 = vmul.f32 %v725, %v834
          %v1267 = vmul.f32 %v729, %v836
          %v1268 = vmul.f32 %v735, %v838
          %v1269 = vmul.f32 %v739, %v840
          %v1270 = vmul.f32 %v745, %v842
          %v1271 = vmul.f32 %v749, %v844
          %v1272 = vmul.f32 %v755, %v846
          %v1273 = vmul.f32 %v759, %v848
          %v1274 = vmul.f32 %v765, %v850
          %v1275 = vmul.f32 %v769, %v852
          %v1276 = vmul.f32 %v775, %v854
          %v1277 = vmul.f32 %v779, %v856
          %v1278 = vmul.f32 %v785, %v858
          %v1279 = vmul.f32 %v789, %v860
          %v1280 = vmul.f32 %v795, %v862
          %v1281 = vmul.f32 %v799, %v864
          %1298 = vrot.lane.b32.xlu0 %v1266, 64
          %v1299 = vpop.permute.xlu0 %1298
          %1300 = vrot.lane.b32.xlu0 %v1267, 64
          %v1301 = vpop.permute.xlu0 %1300
          %1302 = vrot.lane.b32.xlu0 %v1268, 64
          %v1303 = vpop.permute.xlu0 %1302
          %1304 = vrot.lane.b32.xlu0 %v1269, 64
          %v1305 = vpop.permute.xlu0 %1304
          %1306 = vrot.lane.b32.xlu0 %v1270, 64
          %v1307 = vpop.permute.xlu0 %1306
          %1308 = vrot.lane.b32.xlu0 %v1271, 64
          %v1309 = vpop.permute.xlu0 %1308
          %1310 = vrot.lane.b32.xlu0 %v1272, 64
          %v1311 = vpop.permute.xlu0 %1310
          %1312 = vrot.lane.b32.xlu0 %v1273, 64
          %v1313 = vpop.permute.xlu0 %1312
          %1314 = vrot.lane.b32.xlu0 %v1274, 64
          %v1315 = vpop.permute.xlu0 %1314
          %1316 = vrot.lane.b32.xlu0 %v1275, 64
          %v1317 = vpop.permute.xlu0 %1316
          %1318 = vrot.lane.b32.xlu0 %v1276, 64
          %v1319 = vpop.permute.xlu0 %1318
          %1320 = vrot.lane.b32.xlu0 %v1277, 64
          %v1321 = vpop.permute.xlu0 %1320
          %1322 = vrot.lane.b32.xlu0 %v1278, 64
          %v1323 = vpop.permute.xlu0 %1322
          %1324 = vrot.lane.b32.xlu0 %v1279, 64
          %v1325 = vpop.permute.xlu0 %1324
          %1326 = vrot.lane.b32.xlu0 %v1280, 64
          %v1327 = vpop.permute.xlu0 %1326
          %1328 = vrot.lane.b32.xlu0 %v1281, 64
          %v1329 = vpop.permute.xlu0 %1328
          %v1346 = vsub.f32 %v1250, %v1299
          %v1347 = vsub.f32 %v1251, %v1301
          %v1348 = vsub.f32 %v1252, %v1303
          %v1349 = vsub.f32 %v1253, %v1305
          %v1350 = vsub.f32 %v1254, %v1307
          %v1351 = vsub.f32 %v1255, %v1309
          %v1352 = vsub.f32 %v1256, %v1311
          %v1353 = vsub.f32 %v1257, %v1313
          %v1354 = vsub.f32 %v1258, %v1315
          %v1355 = vsub.f32 %v1259, %v1317
          %v1356 = vsub.f32 %v1260, %v1319
          %v1357 = vsub.f32 %v1261, %v1321
          %v1358 = vsub.f32 %v1262, %v1323
          %v1359 = vsub.f32 %v1263, %v1325
          %v1360 = vsub.f32 %v1264, %v1327
          %v1361 = vsub.f32 %v1265, %v1329
          %v1362 = vmul.f32 %v725, %v994
          %v1363 = vmul.f32 %v729, %v996
          %v1364 = vmul.f32 %v735, %v998
          %v1365 = vmul.f32 %v739, %v1000
          %v1366 = vmul.f32 %v745, %v1002
          %v1367 = vmul.f32 %v749, %v1004
          %v1368 = vmul.f32 %v755, %v1006
          %v1369 = vmul.f32 %v759, %v1008
          %v1370 = vmul.f32 %v765, %v1010
          %v1371 = vmul.f32 %v769, %v1012
          %v1372 = vmul.f32 %v775, %v1014
          %v1373 = vmul.f32 %v779, %v1016
          %v1374 = vmul.f32 %v785, %v1018
          %v1375 = vmul.f32 %v789, %v1020
          %v1376 = vmul.f32 %v795, %v1022
          %v1377 = vmul.f32 %v799, %v1024
          %v1378 = vmul.f32 %v725, %v384
          %v1379 = vmul.f32 %v729, %v385
          %v1380 = vmul.f32 %v735, %v386
          %v1381 = vmul.f32 %v739, %v387
          %v1382 = vmul.f32 %v745, %v388
          %v1383 = vmul.f32 %v749, %v389
          %v1384 = vmul.f32 %v755, %v390
          %v1385 = vmul.f32 %v759, %v391
          %v1386 = vmul.f32 %v765, %v392
          %v1387 = vmul.f32 %v769, %v393
          %v1388 = vmul.f32 %v775, %v394
          %v1389 = vmul.f32 %v779, %v395
          %v1390 = vmul.f32 %v785, %v396
          %v1391 = vmul.f32 %v789, %v397
          %v1392 = vmul.f32 %v795, %v398
          %v1393 = vmul.f32 %v799, %v399
          %1410 = vrot.lane.b32.xlu0 %v1378, 64
          %v1411 = vpop.permute.xlu0 %1410
          %1412 = vrot.lane.b32.xlu0 %v1379, 64
          %v1413 = vpop.permute.xlu0 %1412
          %1414 = vrot.lane.b32.xlu0 %v1380, 64
          %v1415 = vpop.permute.xlu0 %1414
          %1416 = vrot.lane.b32.xlu0 %v1381, 64
          %v1417 = vpop.permute.xlu0 %1416
          %1418 = vrot.lane.b32.xlu0 %v1382, 64
          %v1419 = vpop.permute.xlu0 %1418
          %1420 = vrot.lane.b32.xlu0 %v1383, 64
          %v1421 = vpop.permute.xlu0 %1420
          %1422 = vrot.lane.b32.xlu0 %v1384, 64
          %v1423 = vpop.permute.xlu0 %1422
          %1424 = vrot.lane.b32.xlu0 %v1385, 64
          %v1425 = vpop.permute.xlu0 %1424
          %1426 = vrot.lane.b32.xlu0 %v1386, 64
          %v1427 = vpop.permute.xlu0 %1426
          %1428 = vrot.lane.b32.xlu0 %v1387, 64
          %v1429 = vpop.permute.xlu0 %1428
          %1430 = vrot.lane.b32.xlu0 %v1388, 64
          %v1431 = vpop.permute.xlu0 %1430
          %1432 = vrot.lane.b32.xlu0 %v1389, 64
          %v1433 = vpop.permute.xlu0 %1432
          %1434 = vrot.lane.b32.xlu0 %v1390, 64
          %v1435 = vpop.permute.xlu0 %1434
          %1436 = vrot.lane.b32.xlu0 %v1391, 64
          %v1437 = vpop.permute.xlu0 %1436
          %1438 = vrot.lane.b32.xlu0 %v1392, 64
          %v1439 = vpop.permute.xlu0 %1438
          %1440 = vrot.lane.b32.xlu0 %v1393, 64
          %v1441 = vpop.permute.xlu0 %1440
          %v1458 = vadd.f32 %v1362, %v1411
          %v1459 = vadd.f32 %v1363, %v1413
          %v1460 = vadd.f32 %v1364, %v1415
          %v1461 = vadd.f32 %v1365, %v1417
          %v1462 = vadd.f32 %v1366, %v1419
          %v1463 = vadd.f32 %v1367, %v1421
          %v1464 = vadd.f32 %v1368, %v1423
          %v1465 = vadd.f32 %v1369, %v1425
          %v1466 = vadd.f32 %v1370, %v1427
          %v1467 = vadd.f32 %v1371, %v1429
          %v1468 = vadd.f32 %v1372, %v1431
          %v1469 = vadd.f32 %v1373, %v1433
          %v1470 = vadd.f32 %v1374, %v1435
          %v1471 = vadd.f32 %v1375, %v1437
          %v1472 = vadd.f32 %v1376, %v1439
          %v1473 = vadd.f32 %v1377, %v1441
          %v1474 = vsel %vm1153, %v1346, %v1458
          %v1475 = vsel %vm1153, %v1347, %v1459
          %v1476 = vsel %vm1153, %v1348, %v1460
          %v1477 = vsel %vm1153, %v1349, %v1461
          %v1478 = vsel %vm1153, %v1350, %v1462
          %v1479 = vsel %vm1153, %v1351, %v1463
          %v1480 = vsel %vm1153, %v1352, %v1464
          %v1481 = vsel %vm1153, %v1353, %v1465
          %v1482 = vsel %vm1153, %v1354, %v1466
          %v1483 = vsel %vm1153, %v1355, %v1467
          %v1484 = vsel %vm1153, %v1356, %v1468
          %v1485 = vsel %vm1153, %v1357, %v1469
          %v1486 = vsel %vm1153, %v1358, %v1470
          %v1487 = vsel %vm1153, %v1359, %v1471
          %v1488 = vsel %vm1153, %v1360, %v1472
          %v1489 = vsel %vm1153, %v1361, %v1473
          %v1490 = vpack.c.bf16 %v1475, %v1474
          %v1491 = vpack.c.bf16 %v1477, %v1476
          %v1492 = vpack.c.bf16 %v1479, %v1478
          %v1493 = vpack.c.bf16 %v1481, %v1480
          %v1494 = vpack.c.bf16 %v1483, %v1482
          %v1495 = vpack.c.bf16 %v1485, %v1484
          %v1496 = vpack.c.bf16 %v1487, %v1486
          %v1497 = vpack.c.bf16 %v1489, %v1488
          %v1506 = vunpack.c.l.b16 %v1490
          %v1507 = vunpack.c.h.b16 %v1490
          %v1508 = vunpack.c.l.b16 %v1491
          %v1509 = vunpack.c.h.b16 %v1491
          %v1510 = vunpack.c.l.b16 %v1492
          %v1511 = vunpack.c.h.b16 %v1492
          %v1512 = vunpack.c.l.b16 %v1493
          %v1513 = vunpack.c.h.b16 %v1493
          %v1514 = vunpack.c.l.b16 %v1494
          %v1515 = vunpack.c.h.b16 %v1494
          %v1516 = vunpack.c.l.b16 %v1495
          %v1517 = vunpack.c.h.b16 %v1495
          %v1518 = vunpack.c.l.b16 %v1496
          %v1519 = vunpack.c.h.b16 %v1496
          %v1520 = vunpack.c.l.b16 %v1497
          %v1521 = vunpack.c.h.b16 %v1497
          %v1522 = vpack.c.b16 %v1506, %v1506
          %v1523 = vpack.c.b16 %v1507, %v1507
          %v1524 = vpack.c.b16 %v1508, %v1508
          %v1525 = vpack.c.b16 %v1509, %v1509
          %v1526 = vpack.c.b16 %v1510, %v1510
          %v1527 = vpack.c.b16 %v1511, %v1511
          %v1528 = vpack.c.b16 %v1512, %v1512
          %v1529 = vpack.c.b16 %v1513, %v1513
          %v1530 = vpack.c.b16 %v1514, %v1514
          %v1531 = vpack.c.b16 %v1515, %v1515
          %v1532 = vpack.c.b16 %v1516, %v1516
          %v1533 = vpack.c.b16 %v1517, %v1517
          %v1534 = vpack.c.b16 %v1518, %v1518
          %v1535 = vpack.c.b16 %v1519, %v1519
          %v1536 = vpack.c.b16 %v1520, %v1520
          %v1537 = vpack.c.b16 %v1521, %v1521
          %1554 = vst [vmem:[#allocation2 + $0x4] sm:$0xf] %v1522
          %1555 = vst [vmem:[#allocation2 + $0xc] sm:$0xf] %v1523
          %1556 = vst [vmem:[#allocation2 + $0x14] sm:$0xf] %v1524
          %1557 = vst [vmem:[#allocation2 + $0x1c] sm:$0xf] %v1525
          %1558 = vst [vmem:[#allocation2 + $0x24] sm:$0xf] %v1526
          %1559 = vst [vmem:[#allocation2 + $0x2c] sm:$0xf] %v1527
          %1560 = vst [vmem:[#allocation2 + $0x34] sm:$0xf] %v1528
          %1561 = vst [vmem:[#allocation2 + $0x3c] sm:$0xf] %v1529
          %1562 = vst [vmem:[#allocation2 + $0x44] sm:$0xf] %v1530
          %1563 = vst [vmem:[#allocation2 + $0x4c] sm:$0xf] %v1531
          %1564 = vst [vmem:[#allocation2 + $0x54] sm:$0xf] %v1532
          %1565 = vst [vmem:[#allocation2 + $0x5c] sm:$0xf] %v1533
          %1566 = vst [vmem:[#allocation2 + $0x64] sm:$0xf] %v1534
          %1567 = vst [vmem:[#allocation2 + $0x6c] sm:$0xf] %v1535
          %1568 = vst [vmem:[#allocation2 + $0x74] sm:$0xf] %v1536
          %1569 = vst [vmem:[#allocation2 + $0x7c] sm:$0xf] %v1537
          %vm1570 = vcmask 7168
          %1571 = vst.msk [vmem:[#allocation3] sm:$0xff] %vm1570, -inf
          %1572 = vst.msk [vmem:[#allocation3 + $0x8] sm:$0xff] %vm1570, -inf
          %1573 = vst.msk [vmem:[#allocation3 + $0x10] sm:$0xff] %vm1570, -inf
          %1574 = vst.msk [vmem:[#allocation3 + $0x18] sm:$0xff] %vm1570, -inf
          %1575 = vst.msk [vmem:[#allocation3 + $0x20] sm:$0xff] %vm1570, -inf
          %1576 = vst.msk [vmem:[#allocation3 + $0x28] sm:$0xff] %vm1570, -inf
          %1577 = vst.msk [vmem:[#allocation3 + $0x30] sm:$0xff] %vm1570, -inf
          %1578 = vst.msk [vmem:[#allocation3 + $0x38] sm:$0xff] %vm1570, -inf
          %1579 = vst.msk [vmem:[#allocation3 + $0x40] sm:$0xff] %vm1570, -inf
          %1580 = vst.msk [vmem:[#allocation3 + $0x48] sm:$0xff] %vm1570, -inf
          %1581 = vst.msk [vmem:[#allocation3 + $0x50] sm:$0xff] %vm1570, -inf
          %1582 = vst.msk [vmem:[#allocation3 + $0x58] sm:$0xff] %vm1570, -inf
          %1583 = vst.msk [vmem:[#allocation3 + $0x60] sm:$0xff] %vm1570, -inf
          %1584 = vst.msk [vmem:[#allocation3 + $0x68] sm:$0xff] %vm1570, -inf
          %1585 = vst.msk [vmem:[#allocation3 + $0x70] sm:$0xff] %vm1570, -inf
          %1586 = vst.msk [vmem:[#allocation3 + $0x78] sm:$0xff] %vm1570, -inf
          %1587 = vst.msk [vmem:[#allocation3 + $0x80] sm:$0xff] %vm1570, -inf
          %1588 = vst.msk [vmem:[#allocation3 + $0x88] sm:$0xff] %vm1570, -inf
          %1589 = vst.msk [vmem:[#allocation3 + $0x90] sm:$0xff] %vm1570, -inf
          %1590 = vst.msk [vmem:[#allocation3 + $0x98] sm:$0xff] %vm1570, -inf
          %1591 = vst.msk [vmem:[#allocation3 + $0xa0] sm:$0xff] %vm1570, -inf
          %1592 = vst.msk [vmem:[#allocation3 + $0xa8] sm:$0xff] %vm1570, -inf
          %1593 = vst.msk [vmem:[#allocation3 + $0xb0] sm:$0xff] %vm1570, -inf
          %1594 = vst.msk [vmem:[#allocation3 + $0xb8] sm:$0xff] %vm1570, -inf
          %1595 = vst.msk [vmem:[#allocation3 + $0xc0] sm:$0xff] %vm1570, -inf
          %1596 = vst.msk [vmem:[#allocation3 + $0xc8] sm:$0xff] %vm1570, -inf
          %1597 = vst.msk [vmem:[#allocation3 + $0xd0] sm:$0xff] %vm1570, -inf
          %1598 = vst.msk [vmem:[#allocation3 + $0xd8] sm:$0xff] %vm1570, -inf
          %1599 = vst.msk [vmem:[#allocation3 + $0xe0] sm:$0xff] %vm1570, -inf
          %1600 = vst.msk [vmem:[#allocation3 + $0xe8] sm:$0xff] %vm1570, -inf
          %1601 = vst.msk [vmem:[#allocation3 + $0xf0] sm:$0xff] %vm1570, -inf
          %1602 = vst.msk [vmem:[#allocation3 + $0xf8] sm:$0xff] %vm1570, -inf
          %1603 = vst.msk [vmem:[#allocation4] sm:$0xff] %vm1570, 0.0
          %1604 = vst.msk [vmem:[#allocation4 + $0x8] sm:$0xff] %vm1570, 0.0
          %1605 = vst.msk [vmem:[#allocation4 + $0x10] sm:$0xff] %vm1570, 0.0
          %1606 = vst.msk [vmem:[#allocation4 + $0x18] sm:$0xff] %vm1570, 0.0
          %1607 = vst.msk [vmem:[#allocation4 + $0x20] sm:$0xff] %vm1570, 0.0
          %1608 = vst.msk [vmem:[#allocation4 + $0x28] sm:$0xff] %vm1570, 0.0
          %1609 = vst.msk [vmem:[#allocation4 + $0x30] sm:$0xff] %vm1570, 0.0
          %1610 = vst.msk [vmem:[#allocation4 + $0x38] sm:$0xff] %vm1570, 0.0
          %1611 = vst.msk [vmem:[#allocation4 + $0x40] sm:$0xff] %vm1570, 0.0
          %1612 = vst.msk [vmem:[#allocation4 + $0x48] sm:$0xff] %vm1570, 0.0
          %1613 = vst.msk [vmem:[#allocation4 + $0x50] sm:$0xff] %vm1570, 0.0
          %1614 = vst.msk [vmem:[#allocation4 + $0x58] sm:$0xff] %vm1570, 0.0
          %1615 = vst.msk [vmem:[#allocation4 + $0x60] sm:$0xff] %vm1570, 0.0
          %1616 = vst.msk [vmem:[#allocation4 + $0x68] sm:$0xff] %vm1570, 0.0
          %1617 = vst.msk [vmem:[#allocation4 + $0x70] sm:$0xff] %vm1570, 0.0
          %1618 = vst.msk [vmem:[#allocation4 + $0x78] sm:$0xff] %vm1570, 0.0
          %1619 = vst.msk [vmem:[#allocation4 + $0x80] sm:$0xff] %vm1570, 0.0
          %1620 = vst.msk [vmem:[#allocation4 + $0x88] sm:$0xff] %vm1570, 0.0
          %1621 = vst.msk [vmem:[#allocation4 + $0x90] sm:$0xff] %vm1570, 0.0
          %1622 = vst.msk [vmem:[#allocation4 + $0x98] sm:$0xff] %vm1570, 0.0
          %1623 = vst.msk [vmem:[#allocation4 + $0xa0] sm:$0xff] %vm1570, 0.0
          %1624 = vst.msk [vmem:[#allocation4 + $0xa8] sm:$0xff] %vm1570, 0.0
          %1625 = vst.msk [vmem:[#allocation4 + $0xb0] sm:$0xff] %vm1570, 0.0
          %1626 = vst.msk [vmem:[#allocation4 + $0xb8] sm:$0xff] %vm1570, 0.0
          %1627 = vst.msk [vmem:[#allocation4 + $0xc0] sm:$0xff] %vm1570, 0.0
          %1628 = vst.msk [vmem:[#allocation4 + $0xc8] sm:$0xff] %vm1570, 0.0
          %1629 = vst.msk [vmem:[#allocation4 + $0xd0] sm:$0xff] %vm1570, 0.0
          %1630 = vst.msk [vmem:[#allocation4 + $0xd8] sm:$0xff] %vm1570, 0.0
          %1631 = vst.msk [vmem:[#allocation4 + $0xe0] sm:$0xff] %vm1570, 0.0
          %1632 = vst.msk [vmem:[#allocation4 + $0xe8] sm:$0xff] %vm1570, 0.0
          %1633 = vst.msk [vmem:[#allocation4 + $0xf0] sm:$0xff] %vm1570, 0.0
          %1634 = vst.msk [vmem:[#allocation4 + $0xf8] sm:$0xff] %vm1570, 0.0
          %1635 = vst [vmem:[#allocation5] sm:$0xff] 0.0
          %1636 = vst [vmem:[#allocation5 + $0x8] sm:$0xff] 0.0
          %1637 = vst [vmem:[#allocation5 + $0x10] sm:$0xff] 0.0
          %1638 = vst [vmem:[#allocation5 + $0x18] sm:$0xff] 0.0
          %1639 = vst [vmem:[#allocation5 + $0x20] sm:$0xff] 0.0
          %1640 = vst [vmem:[#allocation5 + $0x28] sm:$0xff] 0.0
          %1641 = vst [vmem:[#allocation5 + $0x30] sm:$0xff] 0.0
          %1642 = vst [vmem:[#allocation5 + $0x38] sm:$0xff] 0.0
          %1643 = vst [vmem:[#allocation5 + $0x40] sm:$0xff] 0.0
          %1644 = vst [vmem:[#allocation5 + $0x48] sm:$0xff] 0.0
          %1645 = vst [vmem:[#allocation5 + $0x50] sm:$0xff] 0.0
          %1646 = vst [vmem:[#allocation5 + $0x58] sm:$0xff] 0.0
          %1647 = vst [vmem:[#allocation5 + $0x60] sm:$0xff] 0.0
          %1648 = vst [vmem:[#allocation5 + $0x68] sm:$0xff] 0.0
          %1649 = vst [vmem:[#allocation5 + $0x70] sm:$0xff] 0.0
          %1650 = vst [vmem:[#allocation5 + $0x78] sm:$0xff] 0.0
          %1651 = vst [vmem:[#allocation5 + $0x80] sm:$0xff] 0.0
          %1652 = vst [vmem:[#allocation5 + $0x88] sm:$0xff] 0.0
          %1653 = vst [vmem:[#allocation5 + $0x90] sm:$0xff] 0.0
          %1654 = vst [vmem:[#allocation5 + $0x98] sm:$0xff] 0.0
          %1655 = vst [vmem:[#allocation5 + $0xa0] sm:$0xff] 0.0
          %1656 = vst [vmem:[#allocation5 + $0xa8] sm:$0xff] 0.0
          %1657 = vst [vmem:[#allocation5 + $0xb0] sm:$0xff] 0.0
          %1658 = vst [vmem:[#allocation5 + $0xb8] sm:$0xff] 0.0
          %1659 = vst [vmem:[#allocation5 + $0xc0] sm:$0xff] 0.0
          %1660 = vst [vmem:[#allocation5 + $0xc8] sm:$0xff] 0.0
          %1661 = vst [vmem:[#allocation5 + $0xd0] sm:$0xff] 0.0
          %1662 = vst [vmem:[#allocation5 + $0xd8] sm:$0xff] 0.0
          %1663 = vst [vmem:[#allocation5 + $0xe0] sm:$0xff] 0.0
          %1664 = vst [vmem:[#allocation5 + $0xe8] sm:$0xff] 0.0
          %1665 = vst [vmem:[#allocation5 + $0xf0] sm:$0xff] 0.0
          %1666 = vst [vmem:[#allocation5 + $0xf8] sm:$0xff] 0.0
        $region60: #{tpu_custom_call.1} parent=43 // pred_fallthru
          _
        %v1667 = vld [vmem:[%s314] sm:$0xff]
        %v1668 = vld [vmem:[%s314 + $0x8] sm:$0xff]
        %v1669 = vld [vmem:[%s314 + $0x10] sm:$0xff]
        %v1670 = vld [vmem:[%s314 + $0x18] sm:$0xff]
        %v1671 = vld [vmem:[%s314 + $0x20] sm:$0xff]
        %v1672 = vld [vmem:[%s314 + $0x28] sm:$0xff]
        %v1673 = vld [vmem:[%s314 + $0x30] sm:$0xff]
        %v1674 = vld [vmem:[%s314 + $0x38] sm:$0xff]
        %v1675 = vld [vmem:[#allocation11] sm:$0xff]
        %v1676 = vld [vmem:[#allocation11 + $0x8] sm:$0xff]
        %v1677 = vld [vmem:[#allocation11 + $0x10] sm:$0xff]
        %v1678 = vld [vmem:[#allocation11 + $0x18] sm:$0xff]
        %v1679 = vld [vmem:[#allocation11 + $0x20] sm:$0xff]
        %v1680 = vld [vmem:[#allocation11 + $0x28] sm:$0xff]
        %v1681 = vld [vmem:[#allocation11 + $0x30] sm:$0xff]
        %v1682 = vld [vmem:[#allocation11 + $0x38] sm:$0xff]
        %v1683 = vld [vmem:[#allocation11 + $0x40] sm:$0xff]
        %v1684 = vld [vmem:[#allocation11 + $0x48] sm:$0xff]
        %v1685 = vld [vmem:[#allocation11 + $0x50] sm:$0xff]
        %v1686 = vld [vmem:[#allocation11 + $0x58] sm:$0xff]
        %v1687 = vld [vmem:[#allocation11 + $0x60] sm:$0xff]
        %v1688 = vld [vmem:[#allocation11 + $0x68] sm:$0xff]
        %v1689 = vld [vmem:[#allocation11 + $0x70] sm:$0xff]
        %v1690 = vld [vmem:[#allocation11 + $0x78] sm:$0xff]
        %v1691 = vld [vmem:[#allocation11 + $0x80] sm:$0xff]
        %v1692 = vld [vmem:[#allocation11 + $0x88] sm:$0xff]
        %v1693 = vld [vmem:[#allocation11 + $0x90] sm:$0xff]
        %v1694 = vld [vmem:[#allocation11 + $0x98] sm:$0xff]
        %v1695 = vld [vmem:[#allocation11 + $0xa0] sm:$0xff]
        %v1696 = vld [vmem:[#allocation11 + $0xa8] sm:$0xff]
        %v1697 = vld [vmem:[#allocation11 + $0xb0] sm:$0xff]
        %v1698 = vld [vmem:[#allocation11 + $0xb8] sm:$0xff]
        %v1699 = vld [vmem:[#allocation11 + $0xc0] sm:$0xff]
        %v1700 = vld [vmem:[#allocation11 + $0xc8] sm:$0xff]
        %v1701 = vld [vmem:[#allocation11 + $0xd0] sm:$0xff]
        %v1702 = vld [vmem:[#allocation11 + $0xd8] sm:$0xff]
        %v1703 = vld [vmem:[#allocation11 + $0xe0] sm:$0xff]
        %v1704 = vld [vmem:[#allocation11 + $0xe8] sm:$0xff]
        %v1705 = vld [vmem:[#allocation11 + $0xf0] sm:$0xff]
        %v1706 = vld [vmem:[#allocation11 + $0xf8] sm:$0xff]
        %v1715 = vunpack.c.l.b16 %v1667
        %v1716 = vunpack.c.h.b16 %v1667
        %v1717 = vunpack.c.l.b16 %v1668
        %v1718 = vunpack.c.h.b16 %v1668
        %v1719 = vunpack.c.l.b16 %v1669
        %v1720 = vunpack.c.h.b16 %v1669
        %v1721 = vunpack.c.l.b16 %v1670
        %v1722 = vunpack.c.h.b16 %v1670
        %v1723 = vunpack.c.l.b16 %v1671
        %v1724 = vunpack.c.h.b16 %v1671
        %v1725 = vunpack.c.l.b16 %v1672
        %v1726 = vunpack.c.h.b16 %v1672
        %v1727 = vunpack.c.l.b16 %v1673
        %v1728 = vunpack.c.h.b16 %v1673
        %v1729 = vunpack.c.l.b16 %v1674
        %v1730 = vunpack.c.h.b16 %v1674
        %v1731 = vpack.c.b16 %v1717, %v1715
        %v1732 = vpack.c.b16 %v1718, %v1716
        %v1733 = vpack.c.b16 %v1721, %v1719
        %v1734 = vpack.c.b16 %v1722, %v1720
        %v1735 = vpack.c.b16 %v1725, %v1723
        %v1736 = vpack.c.b16 %v1726, %v1724
        %v1737 = vpack.c.b16 %v1729, %v1727
        %v1738 = vpack.c.b16 %v1730, %v1728
        %v1779 = vunpack.c.l.b16 %v1675
        %v1780 = vunpack.c.h.b16 %v1675
        %v1781 = vunpack.c.l.b16 %v1676
        %v1782 = vunpack.c.h.b16 %v1676
        %v1783 = vunpack.c.l.b16 %v1677
        %v1784 = vunpack.c.h.b16 %v1677
        %v1785 = vunpack.c.l.b16 %v1678
        %v1786 = vunpack.c.h.b16 %v1678
        %v1787 = vunpack.c.l.b16 %v1679
        %v1788 = vunpack.c.h.b16 %v1679
        %v1789 = vunpack.c.l.b16 %v1680
        %v1790 = vunpack.c.h.b16 %v1680
        %v1791 = vunpack.c.l.b16 %v1681
        %v1792 = vunpack.c.h.b16 %v1681
        %v1793 = vunpack.c.l.b16 %v1682
        %v1794 = vunpack.c.h.b16 %v1682
        %v1795 = vunpack.c.l.b16 %v1683
        %v1796 = vunpack.c.h.b16 %v1683
        %v1797 = vunpack.c.l.b16 %v1684
        %v1798 = vunpack.c.h.b16 %v1684
        %v1799 = vunpack.c.l.b16 %v1685
        %v1800 = vunpack.c.h.b16 %v1685
        %v1801 = vunpack.c.l.b16 %v1686
        %v1802 = vunpack.c.h.b16 %v1686
        %v1803 = vunpack.c.l.b16 %v1687
        %v1804 = vunpack.c.h.b16 %v1687
        %v1805 = vunpack.c.l.b16 %v1688
        %v1806 = vunpack.c.h.b16 %v1688
        %v1807 = vunpack.c.l.b16 %v1689
        %v1808 = vunpack.c.h.b16 %v1689
        %v1809 = vunpack.c.l.b16 %v1690
        %v1810 = vunpack.c.h.b16 %v1690
        %v1811 = vunpack.c.l.b16 %v1691
        %v1812 = vunpack.c.h.b16 %v1691
        %v1813 = vunpack.c.l.b16 %v1692
        %v1814 = vunpack.c.h.b16 %v1692
        %v1815 = vunpack.c.l.b16 %v1693
        %v1816 = vunpack.c.h.b16 %v1693
        %v1817 = vunpack.c.l.b16 %v1694
        %v1818 = vunpack.c.h.b16 %v1694
        %v1819 = vunpack.c.l.b16 %v1695
        %v1820 = vunpack.c.h.b16 %v1695
        %v1821 = vunpack.c.l.b16 %v1696
        %v1822 = vunpack.c.h.b16 %v1696
        %v1823 = vunpack.c.l.b16 %v1697
        %v1824 = vunpack.c.h.b16 %v1697
        %v1825 = vunpack.c.l.b16 %v1698
        %v1826 = vunpack.c.h.b16 %v1698
        %v1827 = vunpack.c.l.b16 %v1699
        %v1828 = vunpack.c.h.b16 %v1699
        %v1829 = vunpack.c.l.b16 %v1700
        %v1830 = vunpack.c.h.b16 %v1700
        %v1831 = vunpack.c.l.b16 %v1701
        %v1832 = vunpack.c.h.b16 %v1701
        %v1833 = vunpack.c.l.b16 %v1702
        %v1834 = vunpack.c.h.b16 %v1702
        %v1835 = vunpack.c.l.b16 %v1703
        %v1836 = vunpack.c.h.b16 %v1703
        %v1837 = vunpack.c.l.b16 %v1704
        %v1838 = vunpack.c.h.b16 %v1704
        %v1839 = vunpack.c.l.b16 %v1705
        %v1840 = vunpack.c.h.b16 %v1705
        %v1841 = vunpack.c.l.b16 %v1706
        %v1842 = vunpack.c.h.b16 %v1706
        %v1843 = vpack.c.b16 %v1781, %v1779
        %v1844 = vpack.c.b16 %v1782, %v1780
        %v1845 = vpack.c.b16 %v1785, %v1783
        %v1846 = vpack.c.b16 %v1786, %v1784
        %v1847 = vpack.c.b16 %v1789, %v1787
        %v1848 = vpack.c.b16 %v1790, %v1788
        %v1849 = vpack.c.b16 %v1793, %v1791
        %v1850 = vpack.c.b16 %v1794, %v1792
        %v1851 = vpack.c.b16 %v1797, %v1795
        %v1852 = vpack.c.b16 %v1798, %v1796
        %v1853 = vpack.c.b16 %v1801, %v1799
        %v1854 = vpack.c.b16 %v1802, %v1800
        %v1855 = vpack.c.b16 %v1805, %v1803
        %v1856 = vpack.c.b16 %v1806, %v1804
        %v1857 = vpack.c.b16 %v1809, %v1807
        %v1858 = vpack.c.b16 %v1810, %v1808
        %v1859 = vpack.c.b16 %v1813, %v1811
        %v1860 = vpack.c.b16 %v1814, %v1812
        %v1861 = vpack.c.b16 %v1817, %v1815
        %v1862 = vpack.c.b16 %v1818, %v1816
        %v1863 = vpack.c.b16 %v1821, %v1819
        %v1864 = vpack.c.b16 %v1822, %v1820
        %v1865 = vpack.c.b16 %v1825, %v1823
        %v1866 = vpack.c.b16 %v1826, %v1824
        %v1867 = vpack.c.b16 %v1829, %v1827
        %v1868 = vpack.c.b16 %v1830, %v1828
        %v1869 = vpack.c.b16 %v1833, %v1831
        %v1870 = vpack.c.b16 %v1834, %v1832
        %v1871 = vpack.c.b16 %v1837, %v1835
        %v1872 = vpack.c.b16 %v1838, %v1836
        %v1873 = vpack.c.b16 %v1841, %v1839
        %v1874 = vpack.c.b16 %v1842, %v1840
        %1907 = vmatprep.subr.bf16.mxu0 %v1858
        %1908 = vmatpush1.bf16.msra.mxu0 %v1857
        %1909 = vmatprep.subr.bf16.mxu0 %v1856
        %1910 = vmatpush1.bf16.msra.mxu0 %v1855
        %1911 = vmatprep.subr.bf16.mxu0 %v1854
        %1912 = vmatpush1.bf16.msra.mxu0 %v1853
        %1913 = vmatprep.subr.bf16.mxu0 %v1852
        %1914 = vmatpush1.bf16.msra.mxu0 %v1851
        %1915 = vmatprep.subr.bf16.mxu0 %v1850
        %1916 = vmatpush1.bf16.msra.mxu0 %v1849
        %1917 = vmatprep.subr.bf16.mxu0 %v1848
        %1918 = vmatpush1.bf16.msra.mxu0 %v1847
        %1919 = vmatprep.subr.bf16.mxu0 %v1846
        %1920 = vmatpush1.bf16.msra.mxu0 %v1845
        %1921 = vmatprep.subr.bf16.mxu0 %v1844
        %1922 = vmatpush1.bf16.msra.mxu0 %v1843
        %1923 = vmatprep.subr.bf16.mxu0 %v1874
        %1924 = vmatpush2.bf16.msra.mxu0 %v1873
        %1925 = vmatprep.subr.bf16.mxu0 %v1872
        %1926 = vmatpush2.bf16.msra.mxu0 %v1871
        %1927 = vmatprep.subr.bf16.mxu0 %v1870
        %1928 = vmatpush2.bf16.msra.mxu0 %v1869
        %1929 = vmatprep.subr.bf16.mxu0 %v1868
        %1930 = vmatpush2.bf16.msra.mxu0 %v1867
        %1931 = vmatprep.subr.bf16.mxu0 %v1866
        %1932 = vmatpush2.bf16.msra.mxu0 %v1865
        %1933 = vmatprep.subr.bf16.mxu0 %v1864
        %1934 = vmatpush2.bf16.msra.mxu0 %v1863
        %1935 = vmatprep.subr.bf16.mxu0 %v1862
        %1936 = vmatpush2.bf16.msra.mxu0 %v1861
        %1937 = vmatprep.subr.bf16.mxu0 %v1860
        %1938 = vmatpush2.bf16.msra.mxu0 %v1859
        %1939 = vmatprep.mubr.bf16.mxu0 %v1732
        %1940 = vmatmul.mubr.bf16.gmra.mxu0 %v1731
        %v1941 = vpop.f32.mrf.mxu0
        %v1942 = vadd.f32 0.0, %v1941
        %v1943 = vpop.f32.mrf.mxu0
        %v1944 = vadd.f32 0.0, %v1943
        %v1945 = vpop.f32.mrf.mxu0
        %v1946 = vadd.f32 0.0, %v1945
        %v1947 = vpop.f32.mrf.mxu0
        %v1948 = vadd.f32 0.0, %v1947
        %1949 = vmatprep.mubr.bf16.mxu0 %v1734
        %1950 = vmatmul.mubr.bf16.gmra.mxu0 %v1733
        %v1951 = vpop.f32.mrf.mxu0
        %v1952 = vadd.f32 0.0, %v1951
        %v1953 = vpop.f32.mrf.mxu0
        %v1954 = vadd.f32 0.0, %v1953
        %v1955 = vpop.f32.mrf.mxu0
        %v1956 = vadd.f32 0.0, %v1955
        %v1957 = vpop.f32.mrf.mxu0
        %v1958 = vadd.f32 0.0, %v1957
        %1959 = vmatprep.mubr.bf16.mxu0 %v1736
        %1960 = vmatmul.mubr.bf16.gmra.mxu0 %v1735
        %v1961 = vpop.f32.mrf.mxu0
        %v1962 = vadd.f32 0.0, %v1961
        %v1963 = vpop.f32.mrf.mxu0
        %v1964 = vadd.f32 0.0, %v1963
        %v1965 = vpop.f32.mrf.mxu0
        %v1966 = vadd.f32 0.0, %v1965
        %v1967 = vpop.f32.mrf.mxu0
        %v1968 = vadd.f32 0.0, %v1967
        %1969 = vmatprep.mubr.bf16.mxu0 %v1738
        %1970 = vmatmul.mubr.bf16.gmra.mxu0 %v1737
        %v1971 = vpop.f32.mrf.mxu0
        %v1972 = vadd.f32 0.0, %v1971
        %v1973 = vpop.f32.mrf.mxu0
        %v1974 = vadd.f32 0.0, %v1973
        %v1975 = vpop.f32.mrf.mxu0
        %v1976 = vadd.f32 0.0, %v1975
        %v1977 = vpop.f32.mrf.mxu0
        %v1978 = vadd.f32 0.0, %v1977
        %1979 = vdwg.mxu0
        %s1980 = smul.u32 %s31, 64
        %s1981 = scalar_lea.vmem %s4, %s1980
        %v1982 = vld [vmem:[%s1981] sm:$0xff]
        %v1983 = vld [vmem:[%s1981 + $0x8] sm:$0xff]
        %v1984 = vld [vmem:[%s1981 + $0x10] sm:$0xff]
        %v1985 = vld [vmem:[%s1981 + $0x18] sm:$0xff]
        %v1986 = vld [vmem:[%s1981 + $0x20] sm:$0xff]
        %v1987 = vld [vmem:[%s1981 + $0x28] sm:$0xff]
        %v1988 = vld [vmem:[%s1981 + $0x30] sm:$0xff]
        %v1989 = vld [vmem:[%s1981 + $0x38] sm:$0xff]
        %s1990 = scalar_lea.vmem %s5, %s1980
        %v1991 = vld [vmem:[%s1990] sm:$0xff]
        %v1992 = vld [vmem:[%s1990 + $0x8] sm:$0xff]
        %v1993 = vld [vmem:[%s1990 + $0x10] sm:$0xff]
        %v1994 = vld [vmem:[%s1990 + $0x18] sm:$0xff]
        %v1995 = vld [vmem:[%s1990 + $0x20] sm:$0xff]
        %v1996 = vld [vmem:[%s1990 + $0x28] sm:$0xff]
        %v1997 = vld [vmem:[%s1990 + $0x30] sm:$0xff]
        %v1998 = vld [vmem:[%s1990 + $0x38] sm:$0xff]
        %v1999 = vmul.f32 %v1942, %v1982
        %v2000 = vmul.f32 %v1946, %v1983
        %v2001 = vmul.f32 %v1952, %v1984
        %v2002 = vmul.f32 %v1956, %v1985
        %v2003 = vmul.f32 %v1962, %v1986
        %v2004 = vmul.f32 %v1966, %v1987
        %v2005 = vmul.f32 %v1972, %v1988
        %v2006 = vmul.f32 %v1976, %v1989
        %2015 = vrot.lane.b32.xlu0 %v1991, 64
        %v2016 = vpop.permute.xlu0 %2015
        %2017 = vrot.lane.b32.xlu0 %v1992, 64
        %v2018 = vpop.permute.xlu0 %2017
        %2019 = vrot.lane.b32.xlu0 %v1993, 64
        %v2020 = vpop.permute.xlu0 %2019
        %2021 = vrot.lane.b32.xlu0 %v1994, 64
        %v2022 = vpop.permute.xlu0 %2021
        %2023 = vrot.lane.b32.xlu0 %v1995, 64
        %v2024 = vpop.permute.xlu0 %2023
        %2025 = vrot.lane.b32.xlu0 %v1996, 64
        %v2026 = vpop.permute.xlu0 %2025
        %2027 = vrot.lane.b32.xlu0 %v1997, 64
        %v2028 = vpop.permute.xlu0 %2027
        %2029 = vrot.lane.b32.xlu0 %v1998, 64
        %v2030 = vpop.permute.xlu0 %2029
        %v2039 = vmul.f32 %v1942, %v2016
        %v2040 = vmul.f32 %v1946, %v2018
        %v2041 = vmul.f32 %v1952, %v2020
        %v2042 = vmul.f32 %v1956, %v2022
        %v2043 = vmul.f32 %v1962, %v2024
        %v2044 = vmul.f32 %v1966, %v2026
        %v2045 = vmul.f32 %v1972, %v2028
        %v2046 = vmul.f32 %v1976, %v2030
        %2055 = vrot.lane.b32.xlu0 %v2039, 64
        %v2056 = vpop.permute.xlu0 %2055
        %2057 = vrot.lane.b32.xlu0 %v2040, 64
        %v2058 = vpop.permute.xlu0 %2057
        %2059 = vrot.lane.b32.xlu0 %v2041, 64
        %v2060 = vpop.permute.xlu0 %2059
        %2061 = vrot.lane.b32.xlu0 %v2042, 64
        %v2062 = vpop.permute.xlu0 %2061
        %2063 = vrot.lane.b32.xlu0 %v2043, 64
        %v2064 = vpop.permute.xlu0 %2063
        %2065 = vrot.lane.b32.xlu0 %v2044, 64
        %v2066 = vpop.permute.xlu0 %2065
        %2067 = vrot.lane.b32.xlu0 %v2045, 64
        %v2068 = vpop.permute.xlu0 %2067
        %2069 = vrot.lane.b32.xlu0 %v2046, 64
        %v2070 = vpop.permute.xlu0 %2069
        %v2079 = vsub.f32 %v1999, %v2056
        %v2080 = vsub.f32 %v2000, %v2058
        %v2081 = vsub.f32 %v2001, %v2060
        %v2082 = vsub.f32 %v2002, %v2062
        %v2083 = vsub.f32 %v2003, %v2064
        %v2084 = vsub.f32 %v2004, %v2066
        %v2085 = vsub.f32 %v2005, %v2068
        %v2086 = vsub.f32 %v2006, %v2070
        %2095 = vrot.lane.b32.xlu0 %v1982, 64
        %v2096 = vpop.permute.xlu0 %2095
        %2097 = vrot.lane.b32.xlu0 %v1983, 64
        %v2098 = vpop.permute.xlu0 %2097
        %2099 = vrot.lane.b32.xlu0 %v1984, 64
        %v2100 = vpop.permute.xlu0 %2099
        %2101 = vrot.lane.b32.xlu0 %v1985, 64
        %v2102 = vpop.permute.xlu0 %2101
        %2103 = vrot.lane.b32.xlu0 %v1986, 64
        %v2104 = vpop.permute.xlu0 %2103
        %2105 = vrot.lane.b32.xlu0 %v1987, 64
        %v2106 = vpop.permute.xlu0 %2105
        %2107 = vrot.lane.b32.xlu0 %v1988, 64
        %v2108 = vpop.permute.xlu0 %2107
        %2109 = vrot.lane.b32.xlu0 %v1989, 64
        %v2110 = vpop.permute.xlu0 %2109
        %v2119 = vmul.f32 %v1942, %v2096
        %v2120 = vmul.f32 %v1946, %v2098
        %v2121 = vmul.f32 %v1952, %v2100
        %v2122 = vmul.f32 %v1956, %v2102
        %v2123 = vmul.f32 %v1962, %v2104
        %v2124 = vmul.f32 %v1966, %v2106
        %v2125 = vmul.f32 %v1972, %v2108
        %v2126 = vmul.f32 %v1976, %v2110
        %v2127 = vmul.f32 %v1942, %v1991
        %v2128 = vmul.f32 %v1946, %v1992
        %v2129 = vmul.f32 %v1952, %v1993
        %v2130 = vmul.f32 %v1956, %v1994
        %v2131 = vmul.f32 %v1962, %v1995
        %v2132 = vmul.f32 %v1966, %v1996
        %v2133 = vmul.f32 %v1972, %v1997
        %v2134 = vmul.f32 %v1976, %v1998
        %2143 = vrot.lane.b32.xlu0 %v2127, 64
        %v2144 = vpop.permute.xlu0 %2143
        %2145 = vrot.lane.b32.xlu0 %v2128, 64
        %v2146 = vpop.permute.xlu0 %2145
        %2147 = vrot.lane.b32.xlu0 %v2129, 64
        %v2148 = vpop.permute.xlu0 %2147
        %2149 = vrot.lane.b32.xlu0 %v2130, 64
        %v2150 = vpop.permute.xlu0 %2149
        %2151 = vrot.lane.b32.xlu0 %v2131, 64
        %v2152 = vpop.permute.xlu0 %2151
        %2153 = vrot.lane.b32.xlu0 %v2132, 64
        %v2154 = vpop.permute.xlu0 %2153
        %2155 = vrot.lane.b32.xlu0 %v2133, 64
        %v2156 = vpop.permute.xlu0 %2155
        %2157 = vrot.lane.b32.xlu0 %v2134, 64
        %v2158 = vpop.permute.xlu0 %2157
        %v2167 = vadd.f32 %v2119, %v2144
        %v2168 = vadd.f32 %v2120, %v2146
        %v2169 = vadd.f32 %v2121, %v2148
        %v2170 = vadd.f32 %v2122, %v2150
        %v2171 = vadd.f32 %v2123, %v2152
        %v2172 = vadd.f32 %v2124, %v2154
        %v2173 = vadd.f32 %v2125, %v2156
        %v2174 = vadd.f32 %v2126, %v2158
        %vm2175 = vcmask 523264
        %v2176 = vsel %vm2175, %v2079, %v2167
        %v2177 = vsel %vm2175, %v2080, %v2168
        %v2178 = vsel %vm2175, %v2081, %v2169
        %v2179 = vsel %vm2175, %v2082, %v2170
        %v2180 = vsel %vm2175, %v2083, %v2171
        %v2181 = vsel %vm2175, %v2084, %v2172
        %v2182 = vsel %vm2175, %v2085, %v2173
        %v2183 = vsel %vm2175, %v2086, %v2174
        %v2184 = vpack.c.bf16 %v2177, %v2176
        %v2185 = vpack.c.bf16 %v2179, %v2178
        %v2186 = vpack.c.bf16 %v2181, %v2180
        %v2187 = vpack.c.bf16 %v2183, %v2182
        %v2188 = vpack.c.bf16 %v1948, %v1944
        %v2189 = vpack.c.bf16 %v1958, %v1954
        %v2190 = vpack.c.bf16 %v1968, %v1964
        %v2191 = vpack.c.bf16 %v1978, %v1974
        %v2192 = vld [vmem:[#allocation2] sm:$0xf]
        %v2193 = vld [vmem:[#allocation2 + $0x8] sm:$0xf]
        %v2194 = vld [vmem:[#allocation2 + $0x10] sm:$0xf]
        %v2195 = vld [vmem:[#allocation2 + $0x18] sm:$0xf]
        %v2196 = vld [vmem:[#allocation2 + $0x20] sm:$0xf]
        %v2197 = vld [vmem:[#allocation2 + $0x28] sm:$0xf]
        %v2198 = vld [vmem:[#allocation2 + $0x30] sm:$0xf]
        %v2199 = vld [vmem:[#allocation2 + $0x38] sm:$0xf]
        %v2200 = vld [vmem:[#allocation2 + $0x40] sm:$0xf]
        %v2201 = vld [vmem:[#allocation2 + $0x48] sm:$0xf]
        %v2202 = vld [vmem:[#allocation2 + $0x50] sm:$0xf]
        %v2203 = vld [vmem:[#allocation2 + $0x58] sm:$0xf]
        %v2204 = vld [vmem:[#allocation2 + $0x60] sm:$0xf]
        %v2205 = vld [vmem:[#allocation2 + $0x68] sm:$0xf]
        %v2206 = vld [vmem:[#allocation2 + $0x70] sm:$0xf]
        %v2207 = vld [vmem:[#allocation2 + $0x78] sm:$0xf]
        %v2224 = vunpack.c.l.b16 %v2192
        %v2225 = vunpack.c.l.b16 %v2193
        %v2226 = vunpack.c.l.b16 %v2194
        %v2227 = vunpack.c.l.b16 %v2195
        %v2228 = vunpack.c.l.b16 %v2196
        %v2229 = vunpack.c.l.b16 %v2197
        %v2230 = vunpack.c.l.b16 %v2198
        %v2231 = vunpack.c.l.b16 %v2199
        %v2232 = vunpack.c.l.b16 %v2200
        %v2233 = vunpack.c.l.b16 %v2201
        %v2234 = vunpack.c.l.b16 %v2202
        %v2235 = vunpack.c.l.b16 %v2203
        %v2236 = vunpack.c.l.b16 %v2204
        %v2237 = vunpack.c.l.b16 %v2205
        %v2238 = vunpack.c.l.b16 %v2206
        %v2239 = vunpack.c.l.b16 %v2207
        %v2240 = vpack.c.b16 %v2225, %v2224
        %v2241 = vpack.c.b16 %v2227, %v2226
        %v2242 = vpack.c.b16 %v2229, %v2228
        %v2243 = vpack.c.b16 %v2231, %v2230
        %v2244 = vpack.c.b16 %v2233, %v2232
        %v2245 = vpack.c.b16 %v2235, %v2234
        %v2246 = vpack.c.b16 %v2237, %v2236
        %v2247 = vpack.c.b16 %v2239, %v2238
        %2256 = vmatprep.subr.bf16.mxu0 0
        %2257 = vmatpush1.bf16.xpose.msra.mxu0 0
        %2258 = vmatprep.subr.bf16.mxu0 0
        %2259 = vmatpush1.bf16.xpose.msra.mxu0 0
        %2260 = vmatprep.subr.bf16.mxu0 0
        %2261 = vmatpush1.bf16.xpose.msra.mxu0 0
        %2262 = vmatprep.subr.bf16.mxu0 0
        %2263 = vmatpush1.bf16.xpose.msra.mxu0 0
        %2264 = vmatprep.subr.bf16.mxu0 0
        %2265 = vmatpush1.bf16.xpose.msra.mxu0 %v2187
        %2266 = vmatprep.subr.bf16.mxu0 0
        %2267 = vmatpush1.bf16.xpose.msra.mxu0 %v2186
        %2268 = vmatprep.subr.bf16.mxu0 0
        %2269 = vmatpush1.bf16.xpose.msra.mxu0 %v2185
        %2270 = vmatprep.subr.bf16.mxu0 0
        %2271 = vmatpush1.bf16.xpose.msra.mxu0 %v2184
        %2272 = vmatprep.subr.bf16.mxu0 0
        %2273 = vmatpush2.bf16.xpose.msra.mxu0 0
        %2274 = vmatprep.subr.bf16.mxu0 0
        %2275 = vmatpush2.bf16.xpose.msra.mxu0 0
        %2276 = vmatprep.subr.bf16.mxu0 0
        %2277 = vmatpush2.bf16.xpose.msra.mxu0 0
        %2278 = vmatprep.subr.bf16.mxu0 0
        %2279 = vmatpush2.bf16.xpose.msra.mxu0 0
        %2280 = vmatprep.subr.bf16.mxu0 0
        %2281 = vmatpush2.bf16.xpose.msra.mxu0 0
        %2282 = vmatprep.subr.bf16.mxu0 0
        %2283 = vmatpush2.bf16.xpose.msra.mxu0 0
        %2284 = vmatprep.subr.bf16.mxu0 0
        %2285 = vmatpush2.bf16.xpose.msra.mxu0 0
        %2286 = vmatprep.subr.bf16.mxu0 0
        %2287 = vmatpush2.bf16.xpose.msra.mxu0 0
        %2288 = vmatprep.mubr.bf16.mxu0 0
        %2289 = vmatmul.mubr.bf16.gmra.mxu0 %v2240
        %v2290 = vpop.f32.mrf.mxu0
        %v2291 = vadd.f32 0.0, %v2290
        %v2292 = vpop.f32.mrf.mxu0
        %v2293 = vpop.f32.mrf.mxu0
        %v2294 = vadd.f32 0.0, %v2293
        %v2295 = vpop.f32.mrf.mxu0
        %2296 = vmatprep.mubr.bf16.mxu0 0
        %2297 = vmatmul.mubr.bf16.gmra.mxu0 %v2241
        %v2298 = vpop.f32.mrf.mxu0
        %v2299 = vadd.f32 0.0, %v2298
        %v2300 = vpop.f32.mrf.mxu0
        %v2301 = vpop.f32.mrf.mxu0
        %v2302 = vadd.f32 0.0, %v2301
        %v2303 = vpop.f32.mrf.mxu0
        %2304 = vmatprep.mubr.bf16.mxu0 0
        %2305 = vmatmul.mubr.bf16.gmra.mxu0 %v2242
        %v2306 = vpop.f32.mrf.mxu0
        %v2307 = vadd.f32 0.0, %v2306
        %v2308 = vpop.f32.mrf.mxu0
        %v2309 = vpop.f32.mrf.mxu0
        %v2310 = vadd.f32 0.0, %v2309
        %v2311 = vpop.f32.mrf.mxu0
        %2312 = vmatprep.mubr.bf16.mxu0 0
        %2313 = vmatmul.mubr.bf16.gmra.mxu0 %v2243
        %v2314 = vpop.f32.mrf.mxu0
        %v2315 = vadd.f32 0.0, %v2314
        %v2316 = vpop.f32.mrf.mxu0
        %v2317 = vpop.f32.mrf.mxu0
        %v2318 = vadd.f32 0.0, %v2317
        %v2319 = vpop.f32.mrf.mxu0
        %2320 = vmatprep.mubr.bf16.mxu0 0
        %2321 = vmatmul.mubr.bf16.gmra.mxu0 %v2244
        %v2322 = vpop.f32.mrf.mxu0
        %v2323 = vadd.f32 0.0, %v2322
        %v2324 = vpop.f32.mrf.mxu0
        %v2325 = vpop.f32.mrf.mxu0
        %v2326 = vadd.f32 0.0, %v2325
        %v2327 = vpop.f32.mrf.mxu0
        %2328 = vmatprep.mubr.bf16.mxu0 0
        %2329 = vmatmul.mubr.bf16.gmra.mxu0 %v2245
        %v2330 = vpop.f32.mrf.mxu0
        %v2331 = vadd.f32 0.0, %v2330
        %v2332 = vpop.f32.mrf.mxu0
        %v2333 = vpop.f32.mrf.mxu0
        %v2334 = vadd.f32 0.0, %v2333
        %v2335 = vpop.f32.mrf.mxu0
        %2336 = vmatprep.mubr.bf16.mxu0 0
        %2337 = vmatmul.mubr.bf16.gmra.mxu0 %v2246
        %v2338 = vpop.f32.mrf.mxu0
        %v2339 = vadd.f32 0.0, %v2338
        %v2340 = vpop.f32.mrf.mxu0
        %v2341 = vpop.f32.mrf.mxu0
        %v2342 = vadd.f32 0.0, %v2341
        %v2343 = vpop.f32.mrf.mxu0
        %2344 = vmatprep.mubr.bf16.mxu0 0
        %2345 = vmatmul.mubr.bf16.gmra.mxu0 %v2247
        %v2346 = vpop.f32.mrf.mxu0
        %v2347 = vadd.f32 0.0, %v2346
        %v2348 = vpop.f32.mrf.mxu0
        %v2349 = vpop.f32.mrf.mxu0
        %v2350 = vadd.f32 0.0, %v2349
        %v2351 = vpop.f32.mrf.mxu0
        %2352 = vdwg.mxu0
        %v2353 = vld [vmem:[#allocation3] sm:$0xff]
        %v2354 = vld [vmem:[#allocation3 + $0x8] sm:$0xff]
        %v2355 = vld [vmem:[#allocation3 + $0x10] sm:$0xff]
        %v2356 = vld [vmem:[#allocation3 + $0x18] sm:$0xff]
        %v2357 = vld [vmem:[#allocation3 + $0x20] sm:$0xff]
        %v2358 = vld [vmem:[#allocation3 + $0x28] sm:$0xff]
        %v2359 = vld [vmem:[#allocation3 + $0x30] sm:$0xff]
        %v2360 = vld [vmem:[#allocation3 + $0x38] sm:$0xff]
        %v2361 = vld [vmem:[#allocation3 + $0x40] sm:$0xff]
        %v2362 = vld [vmem:[#allocation3 + $0x48] sm:$0xff]
        %v2363 = vld [vmem:[#allocation3 + $0x50] sm:$0xff]
        %v2364 = vld [vmem:[#allocation3 + $0x58] sm:$0xff]
        %v2365 = vld [vmem:[#allocation3 + $0x60] sm:$0xff]
        %v2366 = vld [vmem:[#allocation3 + $0x68] sm:$0xff]
        %v2367 = vld [vmem:[#allocation3 + $0x70] sm:$0xff]
        %v2368 = vld [vmem:[#allocation3 + $0x78] sm:$0xff]
        %v2369 = vsel %vm2175, %v2291, -inf
        %2370 = vmax.xlane.f32.xlu0 %v2369
        %v2371 = vpop.xlane.xlu0 %2370
        %v2372 = vsel %vm2175, %v2294, -inf
        %2373 = vmax.xlane.f32.xlu0 %v2372
        %v2374 = vpop.xlane.xlu0 %2373
        %v2375 = vsel %vm2175, %v2299, -inf
        %2376 = vmax.xlane.f32.xlu0 %v2375
        %v2377 = vpop.xlane.xlu0 %2376
        %v2378 = vsel %vm2175, %v2302, -inf
        %2379 = vmax.xlane.f32.xlu0 %v2378
        %v2380 = vpop.xlane.xlu0 %2379
        %v2381 = vsel %vm2175, %v2307, -inf
        %2382 = vmax.xlane.f32.xlu0 %v2381
        %v2383 = vpop.xlane.xlu0 %2382
        %v2384 = vsel %vm2175, %v2310, -inf
        %2385 = vmax.xlane.f32.xlu0 %v2384
        %v2386 = vpop.xlane.xlu0 %2385
        %v2387 = vsel %vm2175, %v2315, -inf
        %2388 = vmax.xlane.f32.xlu0 %v2387
        %v2389 = vpop.xlane.xlu0 %2388
        %v2390 = vsel %vm2175, %v2318, -inf
        %2391 = vmax.xlane.f32.xlu0 %v2390
        %v2392 = vpop.xlane.xlu0 %2391
        %v2393 = vsel %vm2175, %v2323, -inf
        %2394 = vmax.xlane.f32.xlu0 %v2393
        %v2395 = vpop.xlane.xlu0 %2394
        %v2396 = vsel %vm2175, %v2326, -inf
        %2397 = vmax.xlane.f32.xlu0 %v2396
        %v2398 = vpop.xlane.xlu0 %2397
        %v2399 = vsel %vm2175, %v2331, -inf
        %2400 = vmax.xlane.f32.xlu0 %v2399
        %v2401 = vpop.xlane.xlu0 %2400
        %v2402 = vsel %vm2175, %v2334, -inf
        %2403 = vmax.xlane.f32.xlu0 %v2402
        %v2404 = vpop.xlane.xlu0 %2403
        %v2405 = vsel %vm2175, %v2339, -inf
        %2406 = vmax.xlane.f32.xlu0 %v2405
        %v2407 = vpop.xlane.xlu0 %2406
        %v2408 = vsel %vm2175, %v2342, -inf
        %2409 = vmax.xlane.f32.xlu0 %v2408
        %v2410 = vpop.xlane.xlu0 %2409
        %v2411 = vsel %vm2175, %v2347, -inf
        %2412 = vmax.xlane.f32.xlu0 %v2411
        %v2413 = vpop.xlane.xlu0 %2412
        %v2414 = vsel %vm2175, %v2350, -inf
        %2415 = vmax.xlane.f32.xlu0 %v2414
        %v2416 = vpop.xlane.xlu0 %2415
        %v2417 = vmax.f32 %v2353, %v2371
        %v2418 = vmax.f32 %v2354, %v2374
        %v2419 = vmax.f32 %v2355, %v2377
        %v2420 = vmax.f32 %v2356, %v2380
        %v2421 = vmax.f32 %v2357, %v2383
        %v2422 = vmax.f32 %v2358, %v2386
        %v2423 = vmax.f32 %v2359, %v2389
        %v2424 = vmax.f32 %v2360, %v2392
        %v2425 = vmax.f32 %v2361, %v2395
        %v2426 = vmax.f32 %v2362, %v2398
        %v2427 = vmax.f32 %v2363, %v2401
        %v2428 = vmax.f32 %v2364, %v2404
        %v2429 = vmax.f32 %v2365, %v2407
        %v2430 = vmax.f32 %v2366, %v2410
        %v2431 = vmax.f32 %v2367, %v2413
        %v2432 = vmax.f32 %v2368, %v2416
        %v2433 = vsub.f32 %v2353, %v2417
        %v2434 = vsub.f32 %v2354, %v2418
        %v2435 = vsub.f32 %v2355, %v2419
        %v2436 = vsub.f32 %v2356, %v2420
        %v2437 = vsub.f32 %v2357, %v2421
        %v2438 = vsub.f32 %v2358, %v2422
        %v2439 = vsub.f32 %v2359, %v2423
        %v2440 = vsub.f32 %v2360, %v2424
        %v2441 = vsub.f32 %v2361, %v2425
        %v2442 = vsub.f32 %v2362, %v2426
        %v2443 = vsub.f32 %v2363, %v2427
        %v2444 = vsub.f32 %v2364, %v2428
        %v2445 = vsub.f32 %v2365, %v2429
        %v2446 = vsub.f32 %v2366, %v2430
        %v2447 = vsub.f32 %v2367, %v2431
        %v2448 = vsub.f32 %v2368, %v2432
        %v2449 = vmul.f32 %v2433, 1.442695
        %v2450 = vpow.pop %v2449
        %v2451 = vmul.f32 %v2434, 1.442695
        %v2452 = vpow.pop %v2451
        %v2453 = vmul.f32 %v2435, 1.442695
        %v2454 = vpow.pop %v2453
        %v2455 = vmul.f32 %v2436, 1.442695
        %v2456 = vpow.pop %v2455
        %v2457 = vmul.f32 %v2437, 1.442695
        %v2458 = vpow.pop %v2457
        %v2459 = vmul.f32 %v2438, 1.442695
        %v2460 = vpow.pop %v2459
        %v2461 = vmul.f32 %v2439, 1.442695
        %v2462 = vpow.pop %v2461
        %v2463 = vmul.f32 %v2440, 1.442695
        %v2464 = vpow.pop %v2463
        %v2465 = vmul.f32 %v2441, 1.442695
        %v2466 = vpow.pop %v2465
        %v2467 = vmul.f32 %v2442, 1.442695
        %v2468 = vpow.pop %v2467
        %v2469 = vmul.f32 %v2443, 1.442695
        %v2470 = vpow.pop %v2469
        %v2471 = vmul.f32 %v2444, 1.442695
        %v2472 = vpow.pop %v2471
        %v2473 = vmul.f32 %v2445, 1.442695
        %v2474 = vpow.pop %v2473
        %v2475 = vmul.f32 %v2446, 1.442695
        %v2476 = vpow.pop %v2475
        %v2477 = vmul.f32 %v2447, 1.442695
        %v2478 = vpow.pop %v2477
        %v2479 = vmul.f32 %v2448, 1.442695
        %v2480 = vpow.pop %v2479
        %2482 = vset.pattern.permute.xlu0 0
        %2483 = vperm.xlu0 %2482, %v2417
        %v2484 = vpop.permute.xlu0 %2483
        %2487 = vset.pattern.permute.xlu0 0
        %2488 = vperm.xlu0 %2487, %v2418
        %v2489 = vpop.permute.xlu0 %2488
        %2492 = vset.pattern.permute.xlu0 0
        %2493 = vperm.xlu0 %2492, %v2419
        %v2494 = vpop.permute.xlu0 %2493
        %2497 = vset.pattern.permute.xlu0 0
        %2498 = vperm.xlu0 %2497, %v2420
        %v2499 = vpop.permute.xlu0 %2498
        %2502 = vset.pattern.permute.xlu0 0
        %2503 = vperm.xlu0 %2502, %v2421
        %v2504 = vpop.permute.xlu0 %2503
        %2507 = vset.pattern.permute.xlu0 0
        %2508 = vperm.xlu0 %2507, %v2422
        %v2509 = vpop.permute.xlu0 %2508
        %2512 = vset.pattern.permute.xlu0 0
        %2513 = vperm.xlu0 %2512, %v2423
        %v2514 = vpop.permute.xlu0 %2513
        %2517 = vset.pattern.permute.xlu0 0
        %2518 = vperm.xlu0 %2517, %v2424
        %v2519 = vpop.permute.xlu0 %2518
        %2522 = vset.pattern.permute.xlu0 0
        %2523 = vperm.xlu0 %2522, %v2425
        %v2524 = vpop.permute.xlu0 %2523
        %2527 = vset.pattern.permute.xlu0 0
        %2528 = vperm.xlu0 %2527, %v2426
        %v2529 = vpop.permute.xlu0 %2528
        %2532 = vset.pattern.permute.xlu0 0
        %2533 = vperm.xlu0 %2532, %v2427
        %v2534 = vpop.permute.xlu0 %2533
        %2537 = vset.pattern.permute.xlu0 0
        %2538 = vperm.xlu0 %2537, %v2428
        %v2539 = vpop.permute.xlu0 %2538
        %2542 = vset.pattern.permute.xlu0 0
        %2543 = vperm.xlu0 %2542, %v2429
        %v2544 = vpop.permute.xlu0 %2543
        %2547 = vset.pattern.permute.xlu0 0
        %2548 = vperm.xlu0 %2547, %v2430
        %v2549 = vpop.permute.xlu0 %2548
        %2552 = vset.pattern.permute.xlu0 0
        %2553 = vperm.xlu0 %2552, %v2431
        %v2554 = vpop.permute.xlu0 %2553
        %2557 = vset.pattern.permute.xlu0 0
        %2558 = vperm.xlu0 %2557, %v2432
        %v2559 = vpop.permute.xlu0 %2558
        %v2561 = vsub.f32 %v2291, %v2484
        %v2562 = vsub.f32 %v2294, %v2489
        %v2563 = vsub.f32 %v2299, %v2494
        %v2564 = vsub.f32 %v2302, %v2499
        %v2565 = vsub.f32 %v2307, %v2504
        %v2566 = vsub.f32 %v2310, %v2509
        %v2567 = vsub.f32 %v2315, %v2514
        %v2568 = vsub.f32 %v2318, %v2519
        %v2569 = vsub.f32 %v2323, %v2524
        %v2570 = vsub.f32 %v2326, %v2529
        %v2571 = vsub.f32 %v2331, %v2534
        %v2572 = vsub.f32 %v2334, %v2539
        %v2573 = vsub.f32 %v2339, %v2544
        %v2574 = vsub.f32 %v2342, %v2549
        %v2575 = vsub.f32 %v2347, %v2554
        %v2576 = vsub.f32 %v2350, %v2559
        %v2577 = vmul.f32 %v2561, 1.442695
        %v2578 = vpow.pop %v2577
        %v2579 = vmul.f32 %v2562, 1.442695
        %v2580 = vpow.pop %v2579
        %v2581 = vmul.f32 %v2563, 1.442695
        %v2582 = vpow.pop %v2581
        %v2583 = vmul.f32 %v2564, 1.442695
        %v2584 = vpow.pop %v2583
        %v2585 = vmul.f32 %v2565, 1.442695
        %v2586 = vpow.pop %v2585
        %v2587 = vmul.f32 %v2566, 1.442695
        %v2588 = vpow.pop %v2587
        %v2589 = vmul.f32 %v2567, 1.442695
        %v2590 = vpow.pop %v2589
        %v2591 = vmul.f32 %v2568, 1.442695
        %v2592 = vpow.pop %v2591
        %v2593 = vmul.f32 %v2569, 1.442695
        %v2594 = vpow.pop %v2593
        %v2595 = vmul.f32 %v2570, 1.442695
        %v2596 = vpow.pop %v2595
        %v2597 = vmul.f32 %v2571, 1.442695
        %v2598 = vpow.pop %v2597
        %v2599 = vmul.f32 %v2572, 1.442695
        %v2600 = vpow.pop %v2599
        %v2601 = vmul.f32 %v2573, 1.442695
        %v2602 = vpow.pop %v2601
        %v2603 = vmul.f32 %v2574, 1.442695
        %v2604 = vpow.pop %v2603
        %v2605 = vmul.f32 %v2575, 1.442695
        %v2606 = vpow.pop %v2605
        %v2607 = vmul.f32 %v2576, 1.442695
        %v2608 = vpow.pop %v2607
        %v2609 = vld [vmem:[#allocation4] sm:$0xff]
        %v2610 = vld [vmem:[#allocation4 + $0x8] sm:$0xff]
        %v2611 = vld [vmem:[#allocation4 + $0x10] sm:$0xff]
        %v2612 = vld [vmem:[#allocation4 + $0x18] sm:$0xff]
        %v2613 = vld [vmem:[#allocation4 + $0x20] sm:$0xff]
        %v2614 = vld [vmem:[#allocation4 + $0x28] sm:$0xff]
        %v2615 = vld [vmem:[#allocation4 + $0x30] sm:$0xff]
        %v2616 = vld [vmem:[#allocation4 + $0x38] sm:$0xff]
        %v2617 = vld [vmem:[#allocation4 + $0x40] sm:$0xff]
        %v2618 = vld [vmem:[#allocation4 + $0x48] sm:$0xff]
        %v2619 = vld [vmem:[#allocation4 + $0x50] sm:$0xff]
        %v2620 = vld [vmem:[#allocation4 + $0x58] sm:$0xff]
        %v2621 = vld [vmem:[#allocation4 + $0x60] sm:$0xff]
        %v2622 = vld [vmem:[#allocation4 + $0x68] sm:$0xff]
        %v2623 = vld [vmem:[#allocation4 + $0x70] sm:$0xff]
        %v2624 = vld [vmem:[#allocation4 + $0x78] sm:$0xff]
        %v2625 = vmul.f32 %v2450, %v2609
        %v2626 = vmul.f32 %v2452, %v2610
        %v2627 = vmul.f32 %v2454, %v2611
        %v2628 = vmul.f32 %v2456, %v2612
        %v2629 = vmul.f32 %v2458, %v2613
        %v2630 = vmul.f32 %v2460, %v2614
        %v2631 = vmul.f32 %v2462, %v2615
        %v2632 = vmul.f32 %v2464, %v2616
        %v2633 = vmul.f32 %v2466, %v2617
        %v2634 = vmul.f32 %v2468, %v2618
        %v2635 = vmul.f32 %v2470, %v2619
        %v2636 = vmul.f32 %v2472, %v2620
        %v2637 = vmul.f32 %v2474, %v2621
        %v2638 = vmul.f32 %v2476, %v2622
        %v2639 = vmul.f32 %v2478, %v2623
        %v2640 = vmul.f32 %v2480, %v2624
        %v2641 = vsel %vm2175, %v2578, 0.0
        %2642 = vadd.xlane.f32.xlu0 %v2641
        %v2643 = vpop.xlane.xlu0 %2642
        %v2644 = vsel %vm2175, %v2580, 0.0
        %2645 = vadd.xlane.f32.xlu0 %v2644
        %v2646 = vpop.xlane.xlu0 %2645
        %v2647 = vsel %vm2175, %v2582, 0.0
        %2648 = vadd.xlane.f32.xlu0 %v2647
        %v2649 = vpop.xlane.xlu0 %2648
        %v2650 = vsel %vm2175, %v2584, 0.0
        %2651 = vadd.xlane.f32.xlu0 %v2650
        %v2652 = vpop.xlane.xlu0 %2651
        %v2653 = vsel %vm2175, %v2586, 0.0
        %2654 = vadd.xlane.f32.xlu0 %v2653
        %v2655 = vpop.xlane.xlu0 %2654
        %v2656 = vsel %vm2175, %v2588, 0.0
        %2657 = vadd.xlane.f32.xlu0 %v2656
        %v2658 = vpop.xlane.xlu0 %2657
        %v2659 = vsel %vm2175, %v2590, 0.0
        %2660 = vadd.xlane.f32.xlu0 %v2659
        %v2661 = vpop.xlane.xlu0 %2660
        %v2662 = vsel %vm2175, %v2592, 0.0
        %2663 = vadd.xlane.f32.xlu0 %v2662
        %v2664 = vpop.xlane.xlu0 %2663
        %v2665 = vsel %vm2175, %v2594, 0.0
        %2666 = vadd.xlane.f32.xlu0 %v2665
        %v2667 = vpop.xlane.xlu0 %2666
        %v2668 = vsel %vm2175, %v2596, 0.0
        %2669 = vadd.xlane.f32.xlu0 %v2668
        %v2670 = vpop.xlane.xlu0 %2669
        %v2671 = vsel %vm2175, %v2598, 0.0
        %2672 = vadd.xlane.f32.xlu0 %v2671
        %v2673 = vpop.xlane.xlu0 %2672
        %v2674 = vsel %vm2175, %v2600, 0.0
        %2675 = vadd.xlane.f32.xlu0 %v2674
        %v2676 = vpop.xlane.xlu0 %2675
        %v2677 = vsel %vm2175, %v2602, 0.0
        %2678 = vadd.xlane.f32.xlu0 %v2677
        %v2679 = vpop.xlane.xlu0 %2678
        %v2680 = vsel %vm2175, %v2604, 0.0
        %2681 = vadd.xlane.f32.xlu0 %v2680
        %v2682 = vpop.xlane.xlu0 %2681
        %v2683 = vsel %vm2175, %v2606, 0.0
        %2684 = vadd.xlane.f32.xlu0 %v2683
        %v2685 = vpop.xlane.xlu0 %2684
        %v2686 = vsel %vm2175, %v2608, 0.0
        %2687 = vadd.xlane.f32.xlu0 %v2686
        %v2688 = vpop.xlane.xlu0 %2687
        %v2689 = vadd.f32 %v2625, %v2643
        %v2690 = vadd.f32 %v2626, %v2646
        %v2691 = vadd.f32 %v2627, %v2649
        %v2692 = vadd.f32 %v2628, %v2652
        %v2693 = vadd.f32 %v2629, %v2655
        %v2694 = vadd.f32 %v2630, %v2658
        %v2695 = vadd.f32 %v2631, %v2661
        %v2696 = vadd.f32 %v2632, %v2664
        %v2697 = vadd.f32 %v2633, %v2667
        %v2698 = vadd.f32 %v2634, %v2670
        %v2699 = vadd.f32 %v2635, %v2673
        %v2700 = vadd.f32 %v2636, %v2676
        %v2701 = vadd.f32 %v2637, %v2679
        %v2702 = vadd.f32 %v2638, %v2682
        %v2703 = vadd.f32 %v2639, %v2685
        %v2704 = vadd.f32 %v2640, %v2688
        %vm2705 = vcmask 7168
        %2706 = vst.msk [vmem:[#allocation4] sm:$0xff] %vm2705, %v2689
        %2707 = vst.msk [vmem:[#allocation4 + $0x8] sm:$0xff] %vm2705, %v2690
        %2708 = vst.msk [vmem:[#allocation4 + $0x10] sm:$0xff] %vm2705, %v2691
        %2709 = vst.msk [vmem:[#allocation4 + $0x18] sm:$0xff] %vm2705, %v2692
        %2710 = vst.msk [vmem:[#allocation4 + $0x20] sm:$0xff] %vm2705, %v2693
        %2711 = vst.msk [vmem:[#allocation4 + $0x28] sm:$0xff] %vm2705, %v2694
        %2712 = vst.msk [vmem:[#allocation4 + $0x30] sm:$0xff] %vm2705, %v2695
        %2713 = vst.msk [vmem:[#allocation4 + $0x38] sm:$0xff] %vm2705, %v2696
        %2714 = vst.msk [vmem:[#allocation4 + $0x40] sm:$0xff] %vm2705, %v2697
        %2715 = vst.msk [vmem:[#allocation4 + $0x48] sm:$0xff] %vm2705, %v2698
        %2716 = vst.msk [vmem:[#allocation4 + $0x50] sm:$0xff] %vm2705, %v2699
        %2717 = vst.msk [vmem:[#allocation4 + $0x58] sm:$0xff] %vm2705, %v2700
        %2718 = vst.msk [vmem:[#allocation4 + $0x60] sm:$0xff] %vm2705, %v2701
        %2719 = vst.msk [vmem:[#allocation4 + $0x68] sm:$0xff] %vm2705, %v2702
        %2720 = vst.msk [vmem:[#allocation4 + $0x70] sm:$0xff] %vm2705, %v2703
        %2721 = vst.msk [vmem:[#allocation4 + $0x78] sm:$0xff] %vm2705, %v2704
        %v2722 = vld [vmem:[#allocation5] sm:$0xff]
        %v2723 = vld [vmem:[#allocation5 + $0x8] sm:$0xff]
        %v2724 = vld [vmem:[#allocation5 + $0x10] sm:$0xff]
        %v2725 = vld [vmem:[#allocation5 + $0x18] sm:$0xff]
        %v2726 = vld [vmem:[#allocation5 + $0x20] sm:$0xff]
        %v2727 = vld [vmem:[#allocation5 + $0x28] sm:$0xff]
        %v2728 = vld [vmem:[#allocation5 + $0x30] sm:$0xff]
        %v2729 = vld [vmem:[#allocation5 + $0x38] sm:$0xff]
        %v2730 = vld [vmem:[#allocation5 + $0x40] sm:$0xff]
        %v2731 = vld [vmem:[#allocation5 + $0x48] sm:$0xff]
        %v2732 = vld [vmem:[#allocation5 + $0x50] sm:$0xff]
        %v2733 = vld [vmem:[#allocation5 + $0x58] sm:$0xff]
        %v2734 = vld [vmem:[#allocation5 + $0x60] sm:$0xff]
        %v2735 = vld [vmem:[#allocation5 + $0x68] sm:$0xff]
        %v2736 = vld [vmem:[#allocation5 + $0x70] sm:$0xff]
        %v2737 = vld [vmem:[#allocation5 + $0x78] sm:$0xff]
        %2739 = vset.pattern.permute.xlu0 0
        %2740 = vperm.xlu0 %2739, %v2450
        %v2741 = vpop.permute.xlu0 %2740
        %2744 = vset.pattern.permute.xlu0 0
        %2745 = vperm.xlu0 %2744, %v2452
        %v2746 = vpop.permute.xlu0 %2745
        %2749 = vset.pattern.permute.xlu0 0
        %2750 = vperm.xlu0 %2749, %v2454
        %v2751 = vpop.permute.xlu0 %2750
        %2754 = vset.pattern.permute.xlu0 0
        %2755 = vperm.xlu0 %2754, %v2456
        %v2756 = vpop.permute.xlu0 %2755
        %2759 = vset.pattern.permute.xlu0 0
        %2760 = vperm.xlu0 %2759, %v2458
        %v2761 = vpop.permute.xlu0 %2760
        %2764 = vset.pattern.permute.xlu0 0
        %2765 = vperm.xlu0 %2764, %v2460
        %v2766 = vpop.permute.xlu0 %2765
        %2769 = vset.pattern.permute.xlu0 0
        %2770 = vperm.xlu0 %2769, %v2462
        %v2771 = vpop.permute.xlu0 %2770
        %2774 = vset.pattern.permute.xlu0 0
        %2775 = vperm.xlu0 %2774, %v2464
        %v2776 = vpop.permute.xlu0 %2775
        %2779 = vset.pattern.permute.xlu0 0
        %2780 = vperm.xlu0 %2779, %v2466
        %v2781 = vpop.permute.xlu0 %2780
        %2784 = vset.pattern.permute.xlu0 0
        %2785 = vperm.xlu0 %2784, %v2468
        %v2786 = vpop.permute.xlu0 %2785
        %2789 = vset.pattern.permute.xlu0 0
        %2790 = vperm.xlu0 %2789, %v2470
        %v2791 = vpop.permute.xlu0 %2790
        %2794 = vset.pattern.permute.xlu0 0
        %2795 = vperm.xlu0 %2794, %v2472
        %v2796 = vpop.permute.xlu0 %2795
        %2799 = vset.pattern.permute.xlu0 0
        %2800 = vperm.xlu0 %2799, %v2474
        %v2801 = vpop.permute.xlu0 %2800
        %2804 = vset.pattern.permute.xlu0 0
        %2805 = vperm.xlu0 %2804, %v2476
        %v2806 = vpop.permute.xlu0 %2805
        %2809 = vset.pattern.permute.xlu0 0
        %2810 = vperm.xlu0 %2809, %v2478
        %v2811 = vpop.permute.xlu0 %2810
        %2814 = vset.pattern.permute.xlu0 0
        %2815 = vperm.xlu0 %2814, %v2480
        %v2816 = vpop.permute.xlu0 %2815
        %v2818 = vmul.f32 %v2741, %v2722
        %v2819 = vmul.f32 %v2746, %v2723
        %v2820 = vmul.f32 %v2751, %v2724
        %v2821 = vmul.f32 %v2756, %v2725
        %v2822 = vmul.f32 %v2761, %v2726
        %v2823 = vmul.f32 %v2766, %v2727
        %v2824 = vmul.f32 %v2771, %v2728
        %v2825 = vmul.f32 %v2776, %v2729
        %v2826 = vmul.f32 %v2781, %v2730
        %v2827 = vmul.f32 %v2786, %v2731
        %v2828 = vmul.f32 %v2791, %v2732
        %v2829 = vmul.f32 %v2796, %v2733
        %v2830 = vmul.f32 %v2801, %v2734
        %v2831 = vmul.f32 %v2806, %v2735
        %v2832 = vmul.f32 %v2811, %v2736
        %v2833 = vmul.f32 %v2816, %v2737
        %v2834 = vpack.c.bf16 %v2580, %v2578
        %v2835 = vpack.c.bf16 %v2584, %v2582
        %v2836 = vpack.c.bf16 %v2588, %v2586
        %v2837 = vpack.c.bf16 %v2592, %v2590
        %v2838 = vpack.c.bf16 %v2596, %v2594
        %v2839 = vpack.c.bf16 %v2600, %v2598
        %v2840 = vpack.c.bf16 %v2604, %v2602
        %v2841 = vpack.c.bf16 %v2608, %v2606
        %v2843 = vsel %vm2175, %v2834, 0
        %v2846 = vsel %vm2175, %v2835, 0
        %v2849 = vsel %vm2175, %v2836, 0
        %v2852 = vsel %vm2175, %v2837, 0
        %v2855 = vsel %vm2175, %v2838, 0
        %v2858 = vsel %vm2175, %v2839, 0
        %v2861 = vsel %vm2175, %v2840, 0
        %v2864 = vsel %vm2175, %v2841, 0
        %2866 = vmatprep.subr.bf16.mxu0 0
        %2867 = vmatpush1.bf16.msra.mxu0 0
        %2868 = vmatprep.subr.bf16.mxu0 0
        %2869 = vmatpush1.bf16.msra.mxu0 0
        %2870 = vmatprep.subr.bf16.mxu0 0
        %2871 = vmatpush1.bf16.msra.mxu0 0
        %2872 = vmatprep.subr.bf16.mxu0 0
        %2873 = vmatpush1.bf16.msra.mxu0 0
        %2874 = vmatprep.subr.bf16.mxu0 0
        %2875 = vmatpush1.bf16.msra.mxu0 %v2191
        %2876 = vmatprep.subr.bf16.mxu0 0
        %2877 = vmatpush1.bf16.msra.mxu0 %v2190
        %2878 = vmatprep.subr.bf16.mxu0 0
        %2879 = vmatpush1.bf16.msra.mxu0 %v2189
        %2880 = vmatprep.subr.bf16.mxu0 0
        %2881 = vmatpush1.bf16.msra.mxu0 %v2188
        %2882 = vmatprep.subr.bf16.mxu0 0
        %2883 = vmatpush2.bf16.msra.mxu0 0
        %2884 = vmatprep.subr.bf16.mxu0 0
        %2885 = vmatpush2.bf16.msra.mxu0 0
        %2886 = vmatprep.subr.bf16.mxu0 0
        %2887 = vmatpush2.bf16.msra.mxu0 0
        %2888 = vmatprep.subr.bf16.mxu0 0
        %2889 = vmatpush2.bf16.msra.mxu0 0
        %2890 = vmatprep.subr.bf16.mxu0 0
        %2891 = vmatpush2.bf16.msra.mxu0 0
        %2892 = vmatprep.subr.bf16.mxu0 0
        %2893 = vmatpush2.bf16.msra.mxu0 0
        %2894 = vmatprep.subr.bf16.mxu0 0
        %2895 = vmatpush2.bf16.msra.mxu0 0
        %2896 = vmatprep.subr.bf16.mxu0 0
        %2897 = vmatpush2.bf16.msra.mxu0 0
        %2898 = vmatprep.mubr.bf16.mxu0 0
        %2899 = vmatmul.mubr.bf16.gmra.mxu0 %v2843
        %v2900 = vpop.f32.mrf.mxu0
        %v2901 = vadd.f32 0.0, %v2900
        %v2902 = vpop.f32.mrf.mxu0
        %v2903 = vpop.f32.mrf.mxu0
        %v2904 = vadd.f32 0.0, %v2903
        %v2905 = vpop.f32.mrf.mxu0
        %2906 = vmatprep.mubr.bf16.mxu0 0
        %2907 = vmatmul.mubr.bf16.gmra.mxu0 %v2846
        %v2908 = vpop.f32.mrf.mxu0
        %v2909 = vadd.f32 0.0, %v2908
        %v2910 = vpop.f32.mrf.mxu0
        %v2911 = vpop.f32.mrf.mxu0
        %v2912 = vadd.f32 0.0, %v2911
        %v2913 = vpop.f32.mrf.mxu0
        %2914 = vmatprep.mubr.bf16.mxu0 0
        %2915 = vmatmul.mubr.bf16.gmra.mxu0 %v2849
        %v2916 = vpop.f32.mrf.mxu0
        %v2917 = vadd.f32 0.0, %v2916
        %v2918 = vpop.f32.mrf.mxu0
        %v2919 = vpop.f32.mrf.mxu0
        %v2920 = vadd.f32 0.0, %v2919
        %v2921 = vpop.f32.mrf.mxu0
        %2922 = vmatprep.mubr.bf16.mxu0 0
        %2923 = vmatmul.mubr.bf16.gmra.mxu0 %v2852
        %v2924 = vpop.f32.mrf.mxu0
        %v2925 = vadd.f32 0.0, %v2924
        %v2926 = vpop.f32.mrf.mxu0
        %v2927 = vpop.f32.mrf.mxu0
        %v2928 = vadd.f32 0.0, %v2927
        %v2929 = vpop.f32.mrf.mxu0
        %2930 = vmatprep.mubr.bf16.mxu0 0
        %2931 = vmatmul.mubr.bf16.gmra.mxu0 %v2855
        %v2932 = vpop.f32.mrf.mxu0
        %v2933 = vadd.f32 0.0, %v2932
        %v2934 = vpop.f32.mrf.mxu0
        %v2935 = vpop.f32.mrf.mxu0
        %v2936 = vadd.f32 0.0, %v2935
        %v2937 = vpop.f32.mrf.mxu0
        %2938 = vmatprep.mubr.bf16.mxu0 0
        %2939 = vmatmul.mubr.bf16.gmra.mxu0 %v2858
        %v2940 = vpop.f32.mrf.mxu0
        %v2941 = vadd.f32 0.0, %v2940
        %v2942 = vpop.f32.mrf.mxu0
        %v2943 = vpop.f32.mrf.mxu0
        %v2944 = vadd.f32 0.0, %v2943
        %v2945 = vpop.f32.mrf.mxu0
        %2946 = vmatprep.mubr.bf16.mxu0 0
        %2947 = vmatmul.mubr.bf16.gmra.mxu0 %v2861
        %v2948 = vpop.f32.mrf.mxu0
        %v2949 = vadd.f32 0.0, %v2948
        %v2950 = vpop.f32.mrf.mxu0
        %v2951 = vpop.f32.mrf.mxu0
        %v2952 = vadd.f32 0.0, %v2951
        %v2953 = vpop.f32.mrf.mxu0
        %2954 = vmatprep.mubr.bf16.mxu0 0
        %2955 = vmatmul.mubr.bf16.gmra.mxu0 %v2864
        %v2956 = vpop.f32.mrf.mxu0
        %v2957 = vadd.f32 0.0, %v2956
        %v2958 = vpop.f32.mrf.mxu0
        %v2959 = vpop.f32.mrf.mxu0
        %v2960 = vadd.f32 0.0, %v2959
        %v2961 = vpop.f32.mrf.mxu0
        %2962 = vdwg.mxu0
        %v2963 = vadd.f32 %v2818, %v2901
        %v2964 = vadd.f32 %v2819, %v2904
        %v2965 = vadd.f32 %v2820, %v2909
        %v2966 = vadd.f32 %v2821, %v2912
        %v2967 = vadd.f32 %v2822, %v2917
        %v2968 = vadd.f32 %v2823, %v2920
        %v2969 = vadd.f32 %v2824, %v2925
        %v2970 = vadd.f32 %v2825, %v2928
        %v2971 = vadd.f32 %v2826, %v2933
        %v2972 = vadd.f32 %v2827, %v2936
        %v2973 = vadd.f32 %v2828, %v2941
        %v2974 = vadd.f32 %v2829, %v2944
        %v2975 = vadd.f32 %v2830, %v2949
        %v2976 = vadd.f32 %v2831, %v2952
        %v2977 = vadd.f32 %v2832, %v2957
        %v2978 = vadd.f32 %v2833, %v2960
        %2979 = vst [vmem:[#allocation5] sm:$0xff] %v2963
        %2980 = vst [vmem:[#allocation5 + $0x8] sm:$0xff] %v2964
        %2981 = vst [vmem:[#allocation5 + $0x10] sm:$0xff] %v2965
        %2982 = vst [vmem:[#allocation5 + $0x18] sm:$0xff] %v2966
        %2983 = vst [vmem:[#allocation5 + $0x20] sm:$0xff] %v2967
        %2984 = vst [vmem:[#allocation5 + $0x28] sm:$0xff] %v2968
        %2985 = vst [vmem:[#allocation5 + $0x30] sm:$0xff] %v2969
        %2986 = vst [vmem:[#allocation5 + $0x38] sm:$0xff] %v2970
        %2987 = vst [vmem:[#allocation5 + $0x40] sm:$0xff] %v2971
        %2988 = vst [vmem:[#allocation5 + $0x48] sm:$0xff] %v2972
        %2989 = vst [vmem:[#allocation5 + $0x50] sm:$0xff] %v2973
        %2990 = vst [vmem:[#allocation5 + $0x58] sm:$0xff] %v2974
        %2991 = vst [vmem:[#allocation5 + $0x60] sm:$0xff] %v2975
        %2992 = vst [vmem:[#allocation5 + $0x68] sm:$0xff] %v2976
        %2993 = vst [vmem:[#allocation5 + $0x70] sm:$0xff] %v2977
        %2994 = vst [vmem:[#allocation5 + $0x78] sm:$0xff] %v2978
        %2995 = vst.msk [vmem:[#allocation3] sm:$0xff] %vm2705, %v2417
        %2996 = vst.msk [vmem:[#allocation3 + $0x8] sm:$0xff] %vm2705, %v2418
        %2997 = vst.msk [vmem:[#allocation3 + $0x10] sm:$0xff] %vm2705, %v2419
        %2998 = vst.msk [vmem:[#allocation3 + $0x18] sm:$0xff] %vm2705, %v2420
        %2999 = vst.msk [vmem:[#allocation3 + $0x20] sm:$0xff] %vm2705, %v2421
        %3000 = vst.msk [vmem:[#allocation3 + $0x28] sm:$0xff] %vm2705, %v2422
        %3001 = vst.msk [vmem:[#allocation3 + $0x30] sm:$0xff] %vm2705, %v2423
        %3002 = vst.msk [vmem:[#allocation3 + $0x38] sm:$0xff] %vm2705, %v2424
        %3003 = vst.msk [vmem:[#allocation3 + $0x40] sm:$0xff] %vm2705, %v2425
        %3004 = vst.msk [vmem:[#allocation3 + $0x48] sm:$0xff] %vm2705, %v2426
        %3005 = vst.msk [vmem:[#allocation3 + $0x50] sm:$0xff] %vm2705, %v2427
        %3006 = vst.msk [vmem:[#allocation3 + $0x58] sm:$0xff] %vm2705, %v2428
        %3007 = vst.msk [vmem:[#allocation3 + $0x60] sm:$0xff] %vm2705, %v2429
        %3008 = vst.msk [vmem:[#allocation3 + $0x68] sm:$0xff] %vm2705, %v2430
        %3009 = vst.msk [vmem:[#allocation3 + $0x70] sm:$0xff] %vm2705, %v2431
        %3010 = vst.msk [vmem:[#allocation3 + $0x78] sm:$0xff] %vm2705, %v2432
        %v3011 = vld [vmem:[#allocation2 + $0x4] sm:$0xf]
        %v3012 = vld [vmem:[#allocation2 + $0xc] sm:$0xf]
        %v3013 = vld [vmem:[#allocation2 + $0x14] sm:$0xf]
        %v3014 = vld [vmem:[#allocation2 + $0x1c] sm:$0xf]
        %v3015 = vld [vmem:[#allocation2 + $0x24] sm:$0xf]
        %v3016 = vld [vmem:[#allocation2 + $0x2c] sm:$0xf]
        %v3017 = vld [vmem:[#allocation2 + $0x34] sm:$0xf]
        %v3018 = vld [vmem:[#allocation2 + $0x3c] sm:$0xf]
        %v3019 = vld [vmem:[#allocation2 + $0x44] sm:$0xf]
        %v3020 = vld [vmem:[#allocation2 + $0x4c] sm:$0xf]
        %v3021 = vld [vmem:[#allocation2 + $0x54] sm:$0xf]
        %v3022 = vld [vmem:[#allocation2 + $0x5c] sm:$0xf]
        %v3023 = vld [vmem:[#allocation2 + $0x64] sm:$0xf]
        %v3024 = vld [vmem:[#allocation2 + $0x6c] sm:$0xf]
        %v3025 = vld [vmem:[#allocation2 + $0x74] sm:$0xf]
        %v3026 = vld [vmem:[#allocation2 + $0x7c] sm:$0xf]
        %v3043 = vunpack.c.l.b16 %v3011
        %v3044 = vunpack.c.l.b16 %v3012
        %v3045 = vunpack.c.l.b16 %v3013
        %v3046 = vunpack.c.l.b16 %v3014
        %v3047 = vunpack.c.l.b16 %v3015
        %v3048 = vunpack.c.l.b16 %v3016
        %v3049 = vunpack.c.l.b16 %v3017
        %v3050 = vunpack.c.l.b16 %v3018
        %v3051 = vunpack.c.l.b16 %v3019
        %v3052 = vunpack.c.l.b16 %v3020
        %v3053 = vunpack.c.l.b16 %v3021
        %v3054 = vunpack.c.l.b16 %v3022
        %v3055 = vunpack.c.l.b16 %v3023
        %v3056 = vunpack.c.l.b16 %v3024
        %v3057 = vunpack.c.l.b16 %v3025
        %v3058 = vunpack.c.l.b16 %v3026
        %v3059 = vpack.c.b16 %v3044, %v3043
        %v3060 = vpack.c.b16 %v3046, %v3045
        %v3061 = vpack.c.b16 %v3048, %v3047
        %v3062 = vpack.c.b16 %v3050, %v3049
        %v3063 = vpack.c.b16 %v3052, %v3051
        %v3064 = vpack.c.b16 %v3054, %v3053
        %v3065 = vpack.c.b16 %v3056, %v3055
        %v3066 = vpack.c.b16 %v3058, %v3057
        %3075 = vmatprep.subr.bf16.mxu0 0
        %3076 = vmatpush1.bf16.xpose.msra.mxu0 0
        %3077 = vmatprep.subr.bf16.mxu0 0
        %3078 = vmatpush1.bf16.xpose.msra.mxu0 0
        %3079 = vmatprep.subr.bf16.mxu0 0
        %3080 = vmatpush1.bf16.xpose.msra.mxu0 0
        %3081 = vmatprep.subr.bf16.mxu0 0
        %3082 = vmatpush1.bf16.xpose.msra.mxu0 0
        %3083 = vmatprep.subr.bf16.mxu0 0
        %3084 = vmatpush1.bf16.xpose.msra.mxu0 %v2187
        %3085 = vmatprep.subr.bf16.mxu0 0
        %3086 = vmatpush1.bf16.xpose.msra.mxu0 %v2186
        %3087 = vmatprep.subr.bf16.mxu0 0
        %3088 = vmatpush1.bf16.xpose.msra.mxu0 %v2185
        %3089 = vmatprep.subr.bf16.mxu0 0
        %3090 = vmatpush1.bf16.xpose.msra.mxu0 %v2184
        %3091 = vmatprep.subr.bf16.mxu0 0
        %3092 = vmatpush2.bf16.xpose.msra.mxu0 0
        %3093 = vmatprep.subr.bf16.mxu0 0
        %3094 = vmatpush2.bf16.xpose.msra.mxu0 0
        %3095 = vmatprep.subr.bf16.mxu0 0
        %3096 = vmatpush2.bf16.xpose.msra.mxu0 0
        %3097 = vmatprep.subr.bf16.mxu0 0
        %3098 = vmatpush2.bf16.xpose.msra.mxu0 0
        %3099 = vmatprep.subr.bf16.mxu0 0
        %3100 = vmatpush2.bf16.xpose.msra.mxu0 0
        %3101 = vmatprep.subr.bf16.mxu0 0
        %3102 = vmatpush2.bf16.xpose.msra.mxu0 0
        %3103 = vmatprep.subr.bf16.mxu0 0
        %3104 = vmatpush2.bf16.xpose.msra.mxu0 0
        %3105 = vmatprep.subr.bf16.mxu0 0
        %3106 = vmatpush2.bf16.xpose.msra.mxu0 0
        %3107 = vmatprep.mubr.bf16.mxu0 0
        %3108 = vmatmul.mubr.bf16.gmra.mxu0 %v3059
        %v3109 = vpop.f32.mrf.mxu0
        %v3110 = vadd.f32 0.0, %v3109
        %v3111 = vpop.f32.mrf.mxu0
        %v3112 = vpop.f32.mrf.mxu0
        %v3113 = vadd.f32 0.0, %v3112
        %v3114 = vpop.f32.mrf.mxu0
        %3115 = vmatprep.mubr.bf16.mxu0 0
        %3116 = vmatmul.mubr.bf16.gmra.mxu0 %v3060
        %v3117 = vpop.f32.mrf.mxu0
        %v3118 = vadd.f32 0.0, %v3117
        %v3119 = vpop.f32.mrf.mxu0
        %v3120 = vpop.f32.mrf.mxu0
        %v3121 = vadd.f32 0.0, %v3120
        %v3122 = vpop.f32.mrf.mxu0
        %3123 = vmatprep.mubr.bf16.mxu0 0
        %3124 = vmatmul.mubr.bf16.gmra.mxu0 %v3061
        %v3125 = vpop.f32.mrf.mxu0
        %v3126 = vadd.f32 0.0, %v3125
        %v3127 = vpop.f32.mrf.mxu0
        %v3128 = vpop.f32.mrf.mxu0
        %v3129 = vadd.f32 0.0, %v3128
        %v3130 = vpop.f32.mrf.mxu0
        %3131 = vmatprep.mubr.bf16.mxu0 0
        %3132 = vmatmul.mubr.bf16.gmra.mxu0 %v3062
        %v3133 = vpop.f32.mrf.mxu0
        %v3134 = vadd.f32 0.0, %v3133
        %v3135 = vpop.f32.mrf.mxu0
        %v3136 = vpop.f32.mrf.mxu0
        %v3137 = vadd.f32 0.0, %v3136
        %v3138 = vpop.f32.mrf.mxu0
        %3139 = vmatprep.mubr.bf16.mxu0 0
        %3140 = vmatmul.mubr.bf16.gmra.mxu0 %v3063
        %v3141 = vpop.f32.mrf.mxu0
        %v3142 = vadd.f32 0.0, %v3141
        %v3143 = vpop.f32.mrf.mxu0
        %v3144 = vpop.f32.mrf.mxu0
        %v3145 = vadd.f32 0.0, %v3144
        %v3146 = vpop.f32.mrf.mxu0
        %3147 = vmatprep.mubr.bf16.mxu0 0
        %3148 = vmatmul.mubr.bf16.gmra.mxu0 %v3064
        %v3149 = vpop.f32.mrf.mxu0
        %v3150 = vadd.f32 0.0, %v3149
        %v3151 = vpop.f32.mrf.mxu0
        %v3152 = vpop.f32.mrf.mxu0
        %v3153 = vadd.f32 0.0, %v3152
        %v3154 = vpop.f32.mrf.mxu0
        %3155 = vmatprep.mubr.bf16.mxu0 0
        %3156 = vmatmul.mubr.bf16.gmra.mxu0 %v3065
        %v3157 = vpop.f32.mrf.mxu0
        %v3158 = vadd.f32 0.0, %v3157
        %v3159 = vpop.f32.mrf.mxu0
        %v3160 = vpop.f32.mrf.mxu0
        %v3161 = vadd.f32 0.0, %v3160
        %v3162 = vpop.f32.mrf.mxu0
        %3163 = vmatprep.mubr.bf16.mxu0 0
        %3164 = vmatmul.mubr.bf16.gmra.mxu0 %v3066
        %v3165 = vpop.f32.mrf.mxu0
        %v3166 = vadd.f32 0.0, %v3165
        %v3167 = vpop.f32.mrf.mxu0
        %v3168 = vpop.f32.mrf.mxu0
        %v3169 = vadd.f32 0.0, %v3168
        %v3170 = vpop.f32.mrf.mxu0
        %3171 = vdwg.mxu0
        %s3172 = scalar_lea.vmem [#allocation3], 128
        %v3173 = vld [vmem:[%s3172] sm:$0xff]
        %v3174 = vld [vmem:[%s3172 + $0x8] sm:$0xff]
        %v3175 = vld [vmem:[%s3172 + $0x10] sm:$0xff]
        %v3176 = vld [vmem:[%s3172 + $0x18] sm:$0xff]
        %v3177 = vld [vmem:[%s3172 + $0x20] sm:$0xff]
        %v3178 = vld [vmem:[%s3172 + $0x28] sm:$0xff]
        %v3179 = vld [vmem:[%s3172 + $0x30] sm:$0xff]
        %v3180 = vld [vmem:[%s3172 + $0x38] sm:$0xff]
        %v3181 = vld [vmem:[%s3172 + $0x40] sm:$0xff]
        %v3182 = vld [vmem:[%s3172 + $0x48] sm:$0xff]
        %v3183 = vld [vmem:[%s3172 + $0x50] sm:$0xff]
        %v3184 = vld [vmem:[%s3172 + $0x58] sm:$0xff]
        %v3185 = vld [vmem:[%s3172 + $0x60] sm:$0xff]
        %v3186 = vld [vmem:[%s3172 + $0x68] sm:$0xff]
        %v3187 = vld [vmem:[%s3172 + $0x70] sm:$0xff]
        %v3188 = vld [vmem:[%s3172 + $0x78] sm:$0xff]
        %v3189 = vsel %vm2175, %v3110, -inf
        %3190 = vmax.xlane.f32.xlu0 %v3189
        %v3191 = vpop.xlane.xlu0 %3190
        %v3192 = vsel %vm2175, %v3113, -inf
        %3193 = vmax.xlane.f32.xlu0 %v3192
        %v3194 = vpop.xlane.xlu0 %3193
        %v3195 = vsel %vm2175, %v3118, -inf
        %3196 = vmax.xlane.f32.xlu0 %v3195
        %v3197 = vpop.xlane.xlu0 %3196
        %v3198 = vsel %vm2175, %v3121, -inf
        %3199 = vmax.xlane.f32.xlu0 %v3198
        %v3200 = vpop.xlane.xlu0 %3199
        %v3201 = vsel %vm2175, %v3126, -inf
        %3202 = vmax.xlane.f32.xlu0 %v3201
        %v3203 = vpop.xlane.xlu0 %3202
        %v3204 = vsel %vm2175, %v3129, -inf
        %3205 = vmax.xlane.f32.xlu0 %v3204
        %v3206 = vpop.xlane.xlu0 %3205
        %v3207 = vsel %vm2175, %v3134, -inf
        %3208 = vmax.xlane.f32.xlu0 %v3207
        %v3209 = vpop.xlane.xlu0 %3208
        %v3210 = vsel %vm2175, %v3137, -inf
        %3211 = vmax.xlane.f32.xlu0 %v3210
        %v3212 = vpop.xlane.xlu0 %3211
        %v3213 = vsel %vm2175, %v3142, -inf
        %3214 = vmax.xlane.f32.xlu0 %v3213
        %v3215 = vpop.xlane.xlu0 %3214
        %v3216 = vsel %vm2175, %v3145, -inf
        %3217 = vmax.xlane.f32.xlu0 %v3216
        %v3218 = vpop.xlane.xlu0 %3217
        %v3219 = vsel %vm2175, %v3150, -inf
        %3220 = vmax.xlane.f32.xlu0 %v3219
        %v3221 = vpop.xlane.xlu0 %3220
        %v3222 = vsel %vm2175, %v3153, -inf
        %3223 = vmax.xlane.f32.xlu0 %v3222
        %v3224 = vpop.xlane.xlu0 %3223
        %v3225 = vsel %vm2175, %v3158, -inf
        %3226 = vmax.xlane.f32.xlu0 %v3225
        %v3227 = vpop.xlane.xlu0 %3226
        %v3228 = vsel %vm2175, %v3161, -inf
        %3229 = vmax.xlane.f32.xlu0 %v3228
        %v3230 = vpop.xlane.xlu0 %3229
        %v3231 = vsel %vm2175, %v3166, -inf
        %3232 = vmax.xlane.f32.xlu0 %v3231
        %v3233 = vpop.xlane.xlu0 %3232
        %v3234 = vsel %vm2175, %v3169, -inf
        %3235 = vmax.xlane.f32.xlu0 %v3234
        %v3236 = vpop.xlane.xlu0 %3235
        %v3237 = vmax.f32 %v3173, %v3191
        %v3238 = vmax.f32 %v3174, %v3194
        %v3239 = vmax.f32 %v3175, %v3197
        %v3240 = vmax.f32 %v3176, %v3200
        %v3241 = vmax.f32 %v3177, %v3203
        %v3242 = vmax.f32 %v3178, %v3206
        %v3243 = vmax.f32 %v3179, %v3209
        %v3244 = vmax.f32 %v3180, %v3212
        %v3245 = vmax.f32 %v3181, %v3215
        %v3246 = vmax.f32 %v3182, %v3218
        %v3247 = vmax.f32 %v3183, %v3221
        %v3248 = vmax.f32 %v3184, %v3224
        %v3249 = vmax.f32 %v3185, %v3227
        %v3250 = vmax.f32 %v3186, %v3230
        %v3251 = vmax.f32 %v3187, %v3233
        %v3252 = vmax.f32 %v3188, %v3236
        %v3253 = vsub.f32 %v3173, %v3237
        %v3254 = vsub.f32 %v3174, %v3238
        %v3255 = vsub.f32 %v3175, %v3239
        %v3256 = vsub.f32 %v3176, %v3240
        %v3257 = vsub.f32 %v3177, %v3241
        %v3258 = vsub.f32 %v3178, %v3242
        %v3259 = vsub.f32 %v3179, %v3243
        %v3260 = vsub.f32 %v3180, %v3244
        %v3261 = vsub.f32 %v3181, %v3245
        %v3262 = vsub.f32 %v3182, %v3246
        %v3263 = vsub.f32 %v3183, %v3247
        %v3264 = vsub.f32 %v3184, %v3248
        %v3265 = vsub.f32 %v3185, %v3249
        %v3266 = vsub.f32 %v3186, %v3250
        %v3267 = vsub.f32 %v3187, %v3251
        %v3268 = vsub.f32 %v3188, %v3252
        %v3269 = vmul.f32 %v3253, 1.442695
        %v3270 = vpow.pop %v3269
        %v3271 = vmul.f32 %v3254, 1.442695
        %v3272 = vpow.pop %v3271
        %v3273 = vmul.f32 %v3255, 1.442695
        %v3274 = vpow.pop %v3273
        %v3275 = vmul.f32 %v3256, 1.442695
        %v3276 = vpow.pop %v3275
        %v3277 = vmul.f32 %v3257, 1.442695
        %v3278 = vpow.pop %v3277
        %v3279 = vmul.f32 %v3258, 1.442695
        %v3280 = vpow.pop %v3279
        %v3281 = vmul.f32 %v3259, 1.442695
        %v3282 = vpow.pop %v3281
        %v3283 = vmul.f32 %v3260, 1.442695
        %v3284 = vpow.pop %v3283
        %v3285 = vmul.f32 %v3261, 1.442695
        %v3286 = vpow.pop %v3285
        %v3287 = vmul.f32 %v3262, 1.442695
        %v3288 = vpow.pop %v3287
        %v3289 = vmul.f32 %v3263, 1.442695
        %v3290 = vpow.pop %v3289
        %v3291 = vmul.f32 %v3264, 1.442695
        %v3292 = vpow.pop %v3291
        %v3293 = vmul.f32 %v3265, 1.442695
        %v3294 = vpow.pop %v3293
        %v3295 = vmul.f32 %v3266, 1.442695
        %v3296 = vpow.pop %v3295
        %v3297 = vmul.f32 %v3267, 1.442695
        %v3298 = vpow.pop %v3297
        %v3299 = vmul.f32 %v3268, 1.442695
        %v3300 = vpow.pop %v3299
        %3302 = vset.pattern.permute.xlu0 0
        %3303 = vperm.xlu0 %3302, %v3237
        %v3304 = vpop.permute.xlu0 %3303
        %3307 = vset.pattern.permute.xlu0 0
        %3308 = vperm.xlu0 %3307, %v3238
        %v3309 = vpop.permute.xlu0 %3308
        %3312 = vset.pattern.permute.xlu0 0
        %3313 = vperm.xlu0 %3312, %v3239
        %v3314 = vpop.permute.xlu0 %3313
        %3317 = vset.pattern.permute.xlu0 0
        %3318 = vperm.xlu0 %3317, %v3240
        %v3319 = vpop.permute.xlu0 %3318
        %3322 = vset.pattern.permute.xlu0 0
        %3323 = vperm.xlu0 %3322, %v3241
        %v3324 = vpop.permute.xlu0 %3323
        %3327 = vset.pattern.permute.xlu0 0
        %3328 = vperm.xlu0 %3327, %v3242
        %v3329 = vpop.permute.xlu0 %3328
        %3332 = vset.pattern.permute.xlu0 0
        %3333 = vperm.xlu0 %3332, %v3243
        %v3334 = vpop.permute.xlu0 %3333
        %3337 = vset.pattern.permute.xlu0 0
        %3338 = vperm.xlu0 %3337, %v3244
        %v3339 = vpop.permute.xlu0 %3338
        %3342 = vset.pattern.permute.xlu0 0
        %3343 = vperm.xlu0 %3342, %v3245
        %v3344 = vpop.permute.xlu0 %3343
        %3347 = vset.pattern.permute.xlu0 0
        %3348 = vperm.xlu0 %3347, %v3246
        %v3349 = vpop.permute.xlu0 %3348
        %3352 = vset.pattern.permute.xlu0 0
        %3353 = vperm.xlu0 %3352, %v3247
        %v3354 = vpop.permute.xlu0 %3353
        %3357 = vset.pattern.permute.xlu0 0
        %3358 = vperm.xlu0 %3357, %v3248
        %v3359 = vpop.permute.xlu0 %3358
        %3362 = vset.pattern.permute.xlu0 0
        %3363 = vperm.xlu0 %3362, %v3249
        %v3364 = vpop.permute.xlu0 %3363
        %3367 = vset.pattern.permute.xlu0 0
        %3368 = vperm.xlu0 %3367, %v3250
        %v3369 = vpop.permute.xlu0 %3368
        %3372 = vset.pattern.permute.xlu0 0
        %3373 = vperm.xlu0 %3372, %v3251
        %v3374 = vpop.permute.xlu0 %3373
        %3377 = vset.pattern.permute.xlu0 0
        %3378 = vperm.xlu0 %3377, %v3252
        %v3379 = vpop.permute.xlu0 %3378
        %v3381 = vsub.f32 %v3110, %v3304
        %v3382 = vsub.f32 %v3113, %v3309
        %v3383 = vsub.f32 %v3118, %v3314
        %v3384 = vsub.f32 %v3121, %v3319
        %v3385 = vsub.f32 %v3126, %v3324
        %v3386 = vsub.f32 %v3129, %v3329
        %v3387 = vsub.f32 %v3134, %v3334
        %v3388 = vsub.f32 %v3137, %v3339
        %v3389 = vsub.f32 %v3142, %v3344
        %v3390 = vsub.f32 %v3145, %v3349
        %v3391 = vsub.f32 %v3150, %v3354
        %v3392 = vsub.f32 %v3153, %v3359
        %v3393 = vsub.f32 %v3158, %v3364
        %v3394 = vsub.f32 %v3161, %v3369
        %v3395 = vsub.f32 %v3166, %v3374
        %v3396 = vsub.f32 %v3169, %v3379
        %v3397 = vmul.f32 %v3381, 1.442695
        %v3398 = vpow.pop %v3397
        %v3399 = vmul.f32 %v3382, 1.442695
        %v3400 = vpow.pop %v3399
        %v3401 = vmul.f32 %v3383, 1.442695
        %v3402 = vpow.pop %v3401
        %v3403 = vmul.f32 %v3384, 1.442695
        %v3404 = vpow.pop %v3403
        %v3405 = vmul.f32 %v3385, 1.442695
        %v3406 = vpow.pop %v3405
        %v3407 = vmul.f32 %v3386, 1.442695
        %v3408 = vpow.pop %v3407
        %v3409 = vmul.f32 %v3387, 1.442695
        %v3410 = vpow.pop %v3409
        %v3411 = vmul.f32 %v3388, 1.442695
        %v3412 = vpow.pop %v3411
        %v3413 = vmul.f32 %v3389, 1.442695
        %v3414 = vpow.pop %v3413
        %v3415 = vmul.f32 %v3390, 1.442695
        %v3416 = vpow.pop %v3415
        %v3417 = vmul.f32 %v3391, 1.442695
        %v3418 = vpow.pop %v3417
        %v3419 = vmul.f32 %v3392, 1.442695
        %v3420 = vpow.pop %v3419
        %v3421 = vmul.f32 %v3393, 1.442695
        %v3422 = vpow.pop %v3421
        %v3423 = vmul.f32 %v3394, 1.442695
        %v3424 = vpow.pop %v3423
        %v3425 = vmul.f32 %v3395, 1.442695
        %v3426 = vpow.pop %v3425
        %v3427 = vmul.f32 %v3396, 1.442695
        %v3428 = vpow.pop %v3427
        %s3429 = scalar_lea.vmem [#allocation4], 128
        %v3430 = vld [vmem:[%s3429] sm:$0xff]
        %v3431 = vld [vmem:[%s3429 + $0x8] sm:$0xff]
        %v3432 = vld [vmem:[%s3429 + $0x10] sm:$0xff]
        %v3433 = vld [vmem:[%s3429 + $0x18] sm:$0xff]
        %v3434 = vld [vmem:[%s3429 + $0x20] sm:$0xff]
        %v3435 = vld [vmem:[%s3429 + $0x28] sm:$0xff]
        %v3436 = vld [vmem:[%s3429 + $0x30] sm:$0xff]
        %v3437 = vld [vmem:[%s3429 + $0x38] sm:$0xff]
        %v3438 = vld [vmem:[%s3429 + $0x40] sm:$0xff]
        %v3439 = vld [vmem:[%s3429 + $0x48] sm:$0xff]
        %v3440 = vld [vmem:[%s3429 + $0x50] sm:$0xff]
        %v3441 = vld [vmem:[%s3429 + $0x58] sm:$0xff]
        %v3442 = vld [vmem:[%s3429 + $0x60] sm:$0xff]
        %v3443 = vld [vmem:[%s3429 + $0x68] sm:$0xff]
        %v3444 = vld [vmem:[%s3429 + $0x70] sm:$0xff]
        %v3445 = vld [vmem:[%s3429 + $0x78] sm:$0xff]
        %v3446 = vmul.f32 %v3270, %v3430
        %v3447 = vmul.f32 %v3272, %v3431
        %v3448 = vmul.f32 %v3274, %v3432
        %v3449 = vmul.f32 %v3276, %v3433
        %v3450 = vmul.f32 %v3278, %v3434
        %v3451 = vmul.f32 %v3280, %v3435
        %v3452 = vmul.f32 %v3282, %v3436
        %v3453 = vmul.f32 %v3284, %v3437
        %v3454 = vmul.f32 %v3286, %v3438
        %v3455 = vmul.f32 %v3288, %v3439
        %v3456 = vmul.f32 %v3290, %v3440
        %v3457 = vmul.f32 %v3292, %v3441
        %v3458 = vmul.f32 %v3294, %v3442
        %v3459 = vmul.f32 %v3296, %v3443
        %v3460 = vmul.f32 %v3298, %v3444
        %v3461 = vmul.f32 %v3300, %v3445
        %v3462 = vsel %vm2175, %v3398, 0.0
        %3463 = vadd.xlane.f32.xlu0 %v3462
        %v3464 = vpop.xlane.xlu0 %3463
        %v3465 = vsel %vm2175, %v3400, 0.0
        %3466 = vadd.xlane.f32.xlu0 %v3465
        %v3467 = vpop.xlane.xlu0 %3466
        %v3468 = vsel %vm2175, %v3402, 0.0
        %3469 = vadd.xlane.f32.xlu0 %v3468
        %v3470 = vpop.xlane.xlu0 %3469
        %v3471 = vsel %vm2175, %v3404, 0.0
        %3472 = vadd.xlane.f32.xlu0 %v3471
        %v3473 = vpop.xlane.xlu0 %3472
        %v3474 = vsel %vm2175, %v3406, 0.0
        %3475 = vadd.xlane.f32.xlu0 %v3474
        %v3476 = vpop.xlane.xlu0 %3475
        %v3477 = vsel %vm2175, %v3408, 0.0
        %3478 = vadd.xlane.f32.xlu0 %v3477
        %v3479 = vpop.xlane.xlu0 %3478
        %v3480 = vsel %vm2175, %v3410, 0.0
        %3481 = vadd.xlane.f32.xlu0 %v3480
        %v3482 = vpop.xlane.xlu0 %3481
        %v3483 = vsel %vm2175, %v3412, 0.0
        %3484 = vadd.xlane.f32.xlu0 %v3483
        %v3485 = vpop.xlane.xlu0 %3484
        %v3486 = vsel %vm2175, %v3414, 0.0
        %3487 = vadd.xlane.f32.xlu0 %v3486
        %v3488 = vpop.xlane.xlu0 %3487
        %v3489 = vsel %vm2175, %v3416, 0.0
        %3490 = vadd.xlane.f32.xlu0 %v3489
        %v3491 = vpop.xlane.xlu0 %3490
        %v3492 = vsel %vm2175, %v3418, 0.0
        %3493 = vadd.xlane.f32.xlu0 %v3492
        %v3494 = vpop.xlane.xlu0 %3493
        %v3495 = vsel %vm2175, %v3420, 0.0
        %3496 = vadd.xlane.f32.xlu0 %v3495
        %v3497 = vpop.xlane.xlu0 %3496
        %v3498 = vsel %vm2175, %v3422, 0.0
        %3499 = vadd.xlane.f32.xlu0 %v3498
        %v3500 = vpop.xlane.xlu0 %3499
        %v3501 = vsel %vm2175, %v3424, 0.0
        %3502 = vadd.xlane.f32.xlu0 %v3501
        %v3503 = vpop.xlane.xlu0 %3502
        %v3504 = vsel %vm2175, %v3426, 0.0
        %3505 = vadd.xlane.f32.xlu0 %v3504
        %v3506 = vpop.xlane.xlu0 %3505
        %v3507 = vsel %vm2175, %v3428, 0.0
        %3508 = vadd.xlane.f32.xlu0 %v3507
        %v3509 = vpop.xlane.xlu0 %3508
        %v3510 = vadd.f32 %v3446, %v3464
        %v3511 = vadd.f32 %v3447, %v3467
        %v3512 = vadd.f32 %v3448, %v3470
        %v3513 = vadd.f32 %v3449, %v3473
        %v3514 = vadd.f32 %v3450, %v3476
        %v3515 = vadd.f32 %v3451, %v3479
        %v3516 = vadd.f32 %v3452, %v3482
        %v3517 = vadd.f32 %v3453, %v3485
        %v3518 = vadd.f32 %v3454, %v3488
        %v3519 = vadd.f32 %v3455, %v3491
        %v3520 = vadd.f32 %v3456, %v3494
        %v3521 = vadd.f32 %v3457, %v3497
        %v3522 = vadd.f32 %v3458, %v3500
        %v3523 = vadd.f32 %v3459, %v3503
        %v3524 = vadd.f32 %v3460, %v3506
        %v3525 = vadd.f32 %v3461, %v3509
        %3526 = vst.msk [vmem:[%s3429] sm:$0xff] %vm2705, %v3510
        %3527 = vst.msk [vmem:[%s3429 + $0x8] sm:$0xff] %vm2705, %v3511
        %3528 = vst.msk [vmem:[%s3429 + $0x10] sm:$0xff] %vm2705, %v3512
        %3529 = vst.msk [vmem:[%s3429 + $0x18] sm:$0xff] %vm2705, %v3513
        %3530 = vst.msk [vmem:[%s3429 + $0x20] sm:$0xff] %vm2705, %v3514
        %3531 = vst.msk [vmem:[%s3429 + $0x28] sm:$0xff] %vm2705, %v3515
        %3532 = vst.msk [vmem:[%s3429 + $0x30] sm:$0xff] %vm2705, %v3516
        %3533 = vst.msk [vmem:[%s3429 + $0x38] sm:$0xff] %vm2705, %v3517
        %3534 = vst.msk [vmem:[%s3429 + $0x40] sm:$0xff] %vm2705, %v3518
        %3535 = vst.msk [vmem:[%s3429 + $0x48] sm:$0xff] %vm2705, %v3519
        %3536 = vst.msk [vmem:[%s3429 + $0x50] sm:$0xff] %vm2705, %v3520
        %3537 = vst.msk [vmem:[%s3429 + $0x58] sm:$0xff] %vm2705, %v3521
        %3538 = vst.msk [vmem:[%s3429 + $0x60] sm:$0xff] %vm2705, %v3522
        %3539 = vst.msk [vmem:[%s3429 + $0x68] sm:$0xff] %vm2705, %v3523
        %3540 = vst.msk [vmem:[%s3429 + $0x70] sm:$0xff] %vm2705, %v3524
        %3541 = vst.msk [vmem:[%s3429 + $0x78] sm:$0xff] %vm2705, %v3525
        %s3542 = scalar_lea.vmem [#allocation5], 128
        %v3543 = vld [vmem:[%s3542] sm:$0xff]
        %v3544 = vld [vmem:[%s3542 + $0x8] sm:$0xff]
        %v3545 = vld [vmem:[%s3542 + $0x10] sm:$0xff]
        %v3546 = vld [vmem:[%s3542 + $0x18] sm:$0xff]
        %v3547 = vld [vmem:[%s3542 + $0x20] sm:$0xff]
        %v3548 = vld [vmem:[%s3542 + $0x28] sm:$0xff]
        %v3549 = vld [vmem:[%s3542 + $0x30] sm:$0xff]
        %v3550 = vld [vmem:[%s3542 + $0x38] sm:$0xff]
        %v3551 = vld [vmem:[%s3542 + $0x40] sm:$0xff]
        %v3552 = vld [vmem:[%s3542 + $0x48] sm:$0xff]
        %v3553 = vld [vmem:[%s3542 + $0x50] sm:$0xff]
        %v3554 = vld [vmem:[%s3542 + $0x58] sm:$0xff]
        %v3555 = vld [vmem:[%s3542 + $0x60] sm:$0xff]
        %v3556 = vld [vmem:[%s3542 + $0x68] sm:$0xff]
        %v3557 = vld [vmem:[%s3542 + $0x70] sm:$0xff]
        %v3558 = vld [vmem:[%s3542 + $0x78] sm:$0xff]
        %3560 = vset.pattern.permute.xlu0 0
        %3561 = vperm.xlu0 %3560, %v3270
        %v3562 = vpop.permute.xlu0 %3561
        %3565 = vset.pattern.permute.xlu0 0
        %3566 = vperm.xlu0 %3565, %v3272
        %v3567 = vpop.permute.xlu0 %3566
        %3570 = vset.pattern.permute.xlu0 0
        %3571 = vperm.xlu0 %3570, %v3274
        %v3572 = vpop.permute.xlu0 %3571
        %3575 = vset.pattern.permute.xlu0 0
        %3576 = vperm.xlu0 %3575, %v3276
        %v3577 = vpop.permute.xlu0 %3576
        %3580 = vset.pattern.permute.xlu0 0
        %3581 = vperm.xlu0 %3580, %v3278
        %v3582 = vpop.permute.xlu0 %3581
        %3585 = vset.pattern.permute.xlu0 0
        %3586 = vperm.xlu0 %3585, %v3280
        %v3587 = vpop.permute.xlu0 %3586
        %3590 = vset.pattern.permute.xlu0 0
        %3591 = vperm.xlu0 %3590, %v3282
        %v3592 = vpop.permute.xlu0 %3591
        %3595 = vset.pattern.permute.xlu0 0
        %3596 = vperm.xlu0 %3595, %v3284
        %v3597 = vpop.permute.xlu0 %3596
        %3600 = vset.pattern.permute.xlu0 0
        %3601 = vperm.xlu0 %3600, %v3286
        %v3602 = vpop.permute.xlu0 %3601
        %3605 = vset.pattern.permute.xlu0 0
        %3606 = vperm.xlu0 %3605, %v3288
        %v3607 = vpop.permute.xlu0 %3606
        %3610 = vset.pattern.permute.xlu0 0
        %3611 = vperm.xlu0 %3610, %v3290
        %v3612 = vpop.permute.xlu0 %3611
        %3615 = vset.pattern.permute.xlu0 0
        %3616 = vperm.xlu0 %3615, %v3292
        %v3617 = vpop.permute.xlu0 %3616
        %3620 = vset.pattern.permute.xlu0 0
        %3621 = vperm.xlu0 %3620, %v3294
        %v3622 = vpop.permute.xlu0 %3621
        %3625 = vset.pattern.permute.xlu0 0
        %3626 = vperm.xlu0 %3625, %v3296
        %v3627 = vpop.permute.xlu0 %3626
        %3630 = vset.pattern.permute.xlu0 0
        %3631 = vperm.xlu0 %3630, %v3298
        %v3632 = vpop.permute.xlu0 %3631
        %3635 = vset.pattern.permute.xlu0 0
        %3636 = vperm.xlu0 %3635, %v3300
        %v3637 = vpop.permute.xlu0 %3636
        %v3639 = vmul.f32 %v3562, %v3543
        %v3640 = vmul.f32 %v3567, %v3544
        %v3641 = vmul.f32 %v3572, %v3545
        %v3642 = vmul.f32 %v3577, %v3546
        %v3643 = vmul.f32 %v3582, %v3547
        %v3644 = vmul.f32 %v3587, %v3548
        %v3645 = vmul.f32 %v3592, %v3549
        %v3646 = vmul.f32 %v3597, %v3550
        %v3647 = vmul.f32 %v3602, %v3551
        %v3648 = vmul.f32 %v3607, %v3552
        %v3649 = vmul.f32 %v3612, %v3553
        %v3650 = vmul.f32 %v3617, %v3554
        %v3651 = vmul.f32 %v3622, %v3555
        %v3652 = vmul.f32 %v3627, %v3556
        %v3653 = vmul.f32 %v3632, %v3557
        %v3654 = vmul.f32 %v3637, %v3558
        %v3655 = vpack.c.bf16 %v3400, %v3398
        %v3656 = vpack.c.bf16 %v3404, %v3402
        %v3657 = vpack.c.bf16 %v3408, %v3406
        %v3658 = vpack.c.bf16 %v3412, %v3410
        %v3659 = vpack.c.bf16 %v3416, %v3414
        %v3660 = vpack.c.bf16 %v3420, %v3418
        %v3661 = vpack.c.bf16 %v3424, %v3422
        %v3662 = vpack.c.bf16 %v3428, %v3426
        %v3664 = vsel %vm2175, %v3655, 0
        %v3667 = vsel %vm2175, %v3656, 0
        %v3670 = vsel %vm2175, %v3657, 0
        %v3673 = vsel %vm2175, %v3658, 0
        %v3676 = vsel %vm2175, %v3659, 0
        %v3679 = vsel %vm2175, %v3660, 0
        %v3682 = vsel %vm2175, %v3661, 0
        %v3685 = vsel %vm2175, %v3662, 0
        %3687 = vmatprep.subr.bf16.mxu0 0
        %3688 = vmatpush1.bf16.msra.mxu0 0
        %3689 = vmatprep.subr.bf16.mxu0 0
        %3690 = vmatpush1.bf16.msra.mxu0 0
        %3691 = vmatprep.subr.bf16.mxu0 0
        %3692 = vmatpush1.bf16.msra.mxu0 0
        %3693 = vmatprep.subr.bf16.mxu0 0
        %3694 = vmatpush1.bf16.msra.mxu0 0
        %3695 = vmatprep.subr.bf16.mxu0 0
        %3696 = vmatpush1.bf16.msra.mxu0 %v2191
        %3697 = vmatprep.subr.bf16.mxu0 0
        %3698 = vmatpush1.bf16.msra.mxu0 %v2190
        %3699 = vmatprep.subr.bf16.mxu0 0
        %3700 = vmatpush1.bf16.msra.mxu0 %v2189
        %3701 = vmatprep.subr.bf16.mxu0 0
        %3702 = vmatpush1.bf16.msra.mxu0 %v2188
        %3703 = vmatprep.subr.bf16.mxu0 0
        %3704 = vmatpush2.bf16.msra.mxu0 0
        %3705 = vmatprep.subr.bf16.mxu0 0
        %3706 = vmatpush2.bf16.msra.mxu0 0
        %3707 = vmatprep.subr.bf16.mxu0 0
        %3708 = vmatpush2.bf16.msra.mxu0 0
        %3709 = vmatprep.subr.bf16.mxu0 0
        %3710 = vmatpush2.bf16.msra.mxu0 0
        %3711 = vmatprep.subr.bf16.mxu0 0
        %3712 = vmatpush2.bf16.msra.mxu0 0
        %3713 = vmatprep.subr.bf16.mxu0 0
        %3714 = vmatpush2.bf16.msra.mxu0 0
        %3715 = vmatprep.subr.bf16.mxu0 0
        %3716 = vmatpush2.bf16.msra.mxu0 0
        %3717 = vmatprep.subr.bf16.mxu0 0
        %3718 = vmatpush2.bf16.msra.mxu0 0
        %3719 = vmatprep.mubr.bf16.mxu0 0
        %3720 = vmatmul.mubr.bf16.gmra.mxu0 %v3664
        %v3721 = vpop.f32.mrf.mxu0
        %v3722 = vadd.f32 0.0, %v3721
        %v3723 = vpop.f32.mrf.mxu0
        %v3724 = vpop.f32.mrf.mxu0
        %v3725 = vadd.f32 0.0, %v3724
        %v3726 = vpop.f32.mrf.mxu0
        %3727 = vmatprep.mubr.bf16.mxu0 0
        %3728 = vmatmul.mubr.bf16.gmra.mxu0 %v3667
        %v3729 = vpop.f32.mrf.mxu0
        %v3730 = vadd.f32 0.0, %v3729
        %v3731 = vpop.f32.mrf.mxu0
        %v3732 = vpop.f32.mrf.mxu0
        %v3733 = vadd.f32 0.0, %v3732
        %v3734 = vpop.f32.mrf.mxu0
        %3735 = vmatprep.mubr.bf16.mxu0 0
        %3736 = vmatmul.mubr.bf16.gmra.mxu0 %v3670
        %v3737 = vpop.f32.mrf.mxu0
        %v3738 = vadd.f32 0.0, %v3737
        %v3739 = vpop.f32.mrf.mxu0
        %v3740 = vpop.f32.mrf.mxu0
        %v3741 = vadd.f32 0.0, %v3740
        %v3742 = vpop.f32.mrf.mxu0
        %3743 = vmatprep.mubr.bf16.mxu0 0
        %3744 = vmatmul.mubr.bf16.gmra.mxu0 %v3673
        %v3745 = vpop.f32.mrf.mxu0
        %v3746 = vadd.f32 0.0, %v3745
        %v3747 = vpop.f32.mrf.mxu0
        %v3748 = vpop.f32.mrf.mxu0
        %v3749 = vadd.f32 0.0, %v3748
        %v3750 = vpop.f32.mrf.mxu0
        %3751 = vmatprep.mubr.bf16.mxu0 0
        %3752 = vmatmul.mubr.bf16.gmra.mxu0 %v3676
        %v3753 = vpop.f32.mrf.mxu0
        %v3754 = vadd.f32 0.0, %v3753
        %v3755 = vpop.f32.mrf.mxu0
        %v3756 = vpop.f32.mrf.mxu0
        %v3757 = vadd.f32 0.0, %v3756
        %v3758 = vpop.f32.mrf.mxu0
        %3759 = vmatprep.mubr.bf16.mxu0 0
        %3760 = vmatmul.mubr.bf16.gmra.mxu0 %v3679
        %v3761 = vpop.f32.mrf.mxu0
        %v3762 = vadd.f32 0.0, %v3761
        %v3763 = vpop.f32.mrf.mxu0
        %v3764 = vpop.f32.mrf.mxu0
        %v3765 = vadd.f32 0.0, %v3764
        %v3766 = vpop.f32.mrf.mxu0
        %3767 = vmatprep.mubr.bf16.mxu0 0
        %3768 = vmatmul.mubr.bf16.gmra.mxu0 %v3682
        %v3769 = vpop.f32.mrf.mxu0
        %v3770 = vadd.f32 0.0, %v3769
        %v3771 = vpop.f32.mrf.mxu0
        %v3772 = vpop.f32.mrf.mxu0
        %v3773 = vadd.f32 0.0, %v3772
        %v3774 = vpop.f32.mrf.mxu0
        %3775 = vmatprep.mubr.bf16.mxu0 0
        %3776 = vmatmul.mubr.bf16.gmra.mxu0 %v3685
        %v3777 = vpop.f32.mrf.mxu0
        %v3778 = vadd.f32 0.0, %v3777
        %v3779 = vpop.f32.mrf.mxu0
        %v3780 = vpop.f32.mrf.mxu0
        %v3781 = vadd.f32 0.0, %v3780
        %v3782 = vpop.f32.mrf.mxu0
        %3783 = vdwg.mxu0
        %v3784 = vadd.f32 %v3639, %v3722
        %v3785 = vadd.f32 %v3640, %v3725
        %v3786 = vadd.f32 %v3641, %v3730
        %v3787 = vadd.f32 %v3642, %v3733
        %v3788 = vadd.f32 %v3643, %v3738
        %v3789 = vadd.f32 %v3644, %v3741
        %v3790 = vadd.f32 %v3645, %v3746
        %v3791 = vadd.f32 %v3646, %v3749
        %v3792 = vadd.f32 %v3647, %v3754
        %v3793 = vadd.f32 %v3648, %v3757
        %v3794 = vadd.f32 %v3649, %v3762
        %v3795 = vadd.f32 %v3650, %v3765
        %v3796 = vadd.f32 %v3651, %v3770
        %v3797 = vadd.f32 %v3652, %v3773
        %v3798 = vadd.f32 %v3653, %v3778
        %v3799 = vadd.f32 %v3654, %v3781
        %3800 = vst [vmem:[%s3542] sm:$0xff] %v3784
        %3801 = vst [vmem:[%s3542 + $0x8] sm:$0xff] %v3785
        %3802 = vst [vmem:[%s3542 + $0x10] sm:$0xff] %v3786
        %3803 = vst [vmem:[%s3542 + $0x18] sm:$0xff] %v3787
        %3804 = vst [vmem:[%s3542 + $0x20] sm:$0xff] %v3788
        %3805 = vst [vmem:[%s3542 + $0x28] sm:$0xff] %v3789
        %3806 = vst [vmem:[%s3542 + $0x30] sm:$0xff] %v3790
        %3807 = vst [vmem:[%s3542 + $0x38] sm:$0xff] %v3791
        %3808 = vst [vmem:[%s3542 + $0x40] sm:$0xff] %v3792
        %3809 = vst [vmem:[%s3542 + $0x48] sm:$0xff] %v3793
        %3810 = vst [vmem:[%s3542 + $0x50] sm:$0xff] %v3794
        %3811 = vst [vmem:[%s3542 + $0x58] sm:$0xff] %v3795
        %3812 = vst [vmem:[%s3542 + $0x60] sm:$0xff] %v3796
        %3813 = vst [vmem:[%s3542 + $0x68] sm:$0xff] %v3797
        %3814 = vst [vmem:[%s3542 + $0x70] sm:$0xff] %v3798
        %3815 = vst [vmem:[%s3542 + $0x78] sm:$0xff] %v3799
        %3816 = vst.msk [vmem:[%s3172] sm:$0xff] %vm2705, %v3237
        %3817 = vst.msk [vmem:[%s3172 + $0x8] sm:$0xff] %vm2705, %v3238
        %3818 = vst.msk [vmem:[%s3172 + $0x10] sm:$0xff] %vm2705, %v3239
        %3819 = vst.msk [vmem:[%s3172 + $0x18] sm:$0xff] %vm2705, %v3240
        %3820 = vst.msk [vmem:[%s3172 + $0x20] sm:$0xff] %vm2705, %v3241
        %3821 = vst.msk [vmem:[%s3172 + $0x28] sm:$0xff] %vm2705, %v3242
        %3822 = vst.msk [vmem:[%s3172 + $0x30] sm:$0xff] %vm2705, %v3243
        %3823 = vst.msk [vmem:[%s3172 + $0x38] sm:$0xff] %vm2705, %v3244
        %3824 = vst.msk [vmem:[%s3172 + $0x40] sm:$0xff] %vm2705, %v3245
        %3825 = vst.msk [vmem:[%s3172 + $0x48] sm:$0xff] %vm2705, %v3246
        %3826 = vst.msk [vmem:[%s3172 + $0x50] sm:$0xff] %vm2705, %v3247
        %3827 = vst.msk [vmem:[%s3172 + $0x58] sm:$0xff] %vm2705, %v3248
        %3828 = vst.msk [vmem:[%s3172 + $0x60] sm:$0xff] %vm2705, %v3249
        %3829 = vst.msk [vmem:[%s3172 + $0x68] sm:$0xff] %vm2705, %v3250
        %3830 = vst.msk [vmem:[%s3172 + $0x70] sm:$0xff] %vm2705, %v3251
        %3831 = vst.msk [vmem:[%s3172 + $0x78] sm:$0xff] %vm2705, %v3252
        %p3832 = scmp.eq.s32.totalorder %s31, 1
        // Predicated region
        $region61: #{tpu_custom_call.1} parent=43 // pred_check
          %p3833 = pneg %p3832
        $region62: #{tpu_custom_call.1} parent=43 // pred_check_branch
          %3835 = sbr.rel (%p3833) target = $region64
        $region63: #{tpu_custom_call.1} parent=43 // pred_region
          %v3836 = vld [vmem:[#allocation4] sm:$0xff]
          %v3837 = vld [vmem:[#allocation4 + $0x8] sm:$0xff]
          %v3838 = vld [vmem:[#allocation4 + $0x10] sm:$0xff]
          %v3839 = vld [vmem:[#allocation4 + $0x18] sm:$0xff]
          %v3840 = vld [vmem:[#allocation4 + $0x20] sm:$0xff]
          %v3841 = vld [vmem:[#allocation4 + $0x28] sm:$0xff]
          %v3842 = vld [vmem:[#allocation4 + $0x30] sm:$0xff]
          %v3843 = vld [vmem:[#allocation4 + $0x38] sm:$0xff]
          %v3844 = vld [vmem:[#allocation4 + $0x40] sm:$0xff]
          %v3845 = vld [vmem:[#allocation4 + $0x48] sm:$0xff]
          %v3846 = vld [vmem:[#allocation4 + $0x50] sm:$0xff]
          %v3847 = vld [vmem:[#allocation4 + $0x58] sm:$0xff]
          %v3848 = vld [vmem:[#allocation4 + $0x60] sm:$0xff]
          %v3849 = vld [vmem:[#allocation4 + $0x68] sm:$0xff]
          %v3850 = vld [vmem:[#allocation4 + $0x70] sm:$0xff]
          %v3851 = vld [vmem:[#allocation4 + $0x78] sm:$0xff]
          %v3852 = vrcp.pop %v3836
          %v3853 = vrcp.pop %v3837
          %v3854 = vrcp.pop %v3838
          %v3855 = vrcp.pop %v3839
          %v3856 = vrcp.pop %v3840
          %v3857 = vrcp.pop %v3841
          %v3858 = vrcp.pop %v3842
          %v3859 = vrcp.pop %v3843
          %v3860 = vrcp.pop %v3844
          %v3861 = vrcp.pop %v3845
          %v3862 = vrcp.pop %v3846
          %v3863 = vrcp.pop %v3847
          %v3864 = vrcp.pop %v3848
          %v3865 = vrcp.pop %v3849
          %v3866 = vrcp.pop %v3850
          %v3867 = vrcp.pop %v3851
          %v3868 = vld [vmem:[#allocation5] sm:$0xff]
          %v3869 = vld [vmem:[#allocation5 + $0x8] sm:$0xff]
          %v3870 = vld [vmem:[#allocation5 + $0x10] sm:$0xff]
          %v3871 = vld [vmem:[#allocation5 + $0x18] sm:$0xff]
          %v3872 = vld [vmem:[#allocation5 + $0x20] sm:$0xff]
          %v3873 = vld [vmem:[#allocation5 + $0x28] sm:$0xff]
          %v3874 = vld [vmem:[#allocation5 + $0x30] sm:$0xff]
          %v3875 = vld [vmem:[#allocation5 + $0x38] sm:$0xff]
          %v3876 = vld [vmem:[#allocation5 + $0x40] sm:$0xff]
          %v3877 = vld [vmem:[#allocation5 + $0x48] sm:$0xff]
          %v3878 = vld [vmem:[#allocation5 + $0x50] sm:$0xff]
          %v3879 = vld [vmem:[#allocation5 + $0x58] sm:$0xff]
          %v3880 = vld [vmem:[#allocation5 + $0x60] sm:$0xff]
          %v3881 = vld [vmem:[#allocation5 + $0x68] sm:$0xff]
          %v3882 = vld [vmem:[#allocation5 + $0x70] sm:$0xff]
          %v3883 = vld [vmem:[#allocation5 + $0x78] sm:$0xff]
          %3885 = vset.pattern.permute.xlu0 0
          %3886 = vperm.xlu0 %3885, %v3852
          %v3887 = vpop.permute.xlu0 %3886
          %3890 = vset.pattern.permute.xlu0 0
          %3891 = vperm.xlu0 %3890, %v3853
          %v3892 = vpop.permute.xlu0 %3891
          %3895 = vset.pattern.permute.xlu0 0
          %3896 = vperm.xlu0 %3895, %v3854
          %v3897 = vpop.permute.xlu0 %3896
          %3900 = vset.pattern.permute.xlu0 0
          %3901 = vperm.xlu0 %3900, %v3855
          %v3902 = vpop.permute.xlu0 %3901
          %3905 = vset.pattern.permute.xlu0 0
          %3906 = vperm.xlu0 %3905, %v3856
          %v3907 = vpop.permute.xlu0 %3906
          %3910 = vset.pattern.permute.xlu0 0
          %3911 = vperm.xlu0 %3910, %v3857
          %v3912 = vpop.permute.xlu0 %3911
          %3915 = vset.pattern.permute.xlu0 0
          %3916 = vperm.xlu0 %3915, %v3858
          %v3917 = vpop.permute.xlu0 %3916
          %3920 = vset.pattern.permute.xlu0 0
          %3921 = vperm.xlu0 %3920, %v3859
          %v3922 = vpop.permute.xlu0 %3921
          %3925 = vset.pattern.permute.xlu0 0
          %3926 = vperm.xlu0 %3925, %v3860
          %v3927 = vpop.permute.xlu0 %3926
          %3930 = vset.pattern.permute.xlu0 0
          %3931 = vperm.xlu0 %3930, %v3861
          %v3932 = vpop.permute.xlu0 %3931
          %3935 = vset.pattern.permute.xlu0 0
          %3936 = vperm.xlu0 %3935, %v3862
          %v3937 = vpop.permute.xlu0 %3936
          %3940 = vset.pattern.permute.xlu0 0
          %3941 = vperm.xlu0 %3940, %v3863
          %v3942 = vpop.permute.xlu0 %3941
          %3945 = vset.pattern.permute.xlu0 0
          %3946 = vperm.xlu0 %3945, %v3864
          %v3947 = vpop.permute.xlu0 %3946
          %3950 = vset.pattern.permute.xlu0 0
          %3951 = vperm.xlu0 %3950, %v3865
          %v3952 = vpop.permute.xlu0 %3951
          %3955 = vset.pattern.permute.xlu0 0
          %3956 = vperm.xlu0 %3955, %v3866
          %v3957 = vpop.permute.xlu0 %3956
          %3960 = vset.pattern.permute.xlu0 0
          %3961 = vperm.xlu0 %3960, %v3867
          %v3962 = vpop.permute.xlu0 %3961
          %v3964 = vmul.f32 %v3868, %v3887
          %v3965 = vmul.f32 %v3869, %v3892
          %v3966 = vmul.f32 %v3870, %v3897
          %v3967 = vmul.f32 %v3871, %v3902
          %v3968 = vmul.f32 %v3872, %v3907
          %v3969 = vmul.f32 %v3873, %v3912
          %v3970 = vmul.f32 %v3874, %v3917
          %v3971 = vmul.f32 %v3875, %v3922
          %v3972 = vmul.f32 %v3876, %v3927
          %v3973 = vmul.f32 %v3877, %v3932
          %v3974 = vmul.f32 %v3878, %v3937
          %v3975 = vmul.f32 %v3879, %v3942
          %v3976 = vmul.f32 %v3880, %v3947
          %v3977 = vmul.f32 %v3881, %v3952
          %v3978 = vmul.f32 %v3882, %v3957
          %v3979 = vmul.f32 %v3883, %v3962
          %v3980 = vld [vmem:[%s3429] sm:$0xff]
          %v3981 = vld [vmem:[%s3429 + $0x8] sm:$0xff]
          %v3982 = vld [vmem:[%s3429 + $0x10] sm:$0xff]
          %v3983 = vld [vmem:[%s3429 + $0x18] sm:$0xff]
          %v3984 = vld [vmem:[%s3429 + $0x20] sm:$0xff]
          %v3985 = vld [vmem:[%s3429 + $0x28] sm:$0xff]
          %v3986 = vld [vmem:[%s3429 + $0x30] sm:$0xff]
          %v3987 = vld [vmem:[%s3429 + $0x38] sm:$0xff]
          %v3988 = vld [vmem:[%s3429 + $0x40] sm:$0xff]
          %v3989 = vld [vmem:[%s3429 + $0x48] sm:$0xff]
          %v3990 = vld [vmem:[%s3429 + $0x50] sm:$0xff]
          %v3991 = vld [vmem:[%s3429 + $0x58] sm:$0xff]
          %v3992 = vld [vmem:[%s3429 + $0x60] sm:$0xff]
          %v3993 = vld [vmem:[%s3429 + $0x68] sm:$0xff]
          %v3994 = vld [vmem:[%s3429 + $0x70] sm:$0xff]
          %v3995 = vld [vmem:[%s3429 + $0x78] sm:$0xff]
          %v3996 = vrcp.pop %v3980
          %v3997 = vrcp.pop %v3981
          %v3998 = vrcp.pop %v3982
          %v3999 = vrcp.pop %v3983
          %v4000 = vrcp.pop %v3984
          %v4001 = vrcp.pop %v3985
          %v4002 = vrcp.pop %v3986
          %v4003 = vrcp.pop %v3987
          %v4004 = vrcp.pop %v3988
          %v4005 = vrcp.pop %v3989
          %v4006 = vrcp.pop %v3990
          %v4007 = vrcp.pop %v3991
          %v4008 = vrcp.pop %v3992
          %v4009 = vrcp.pop %v3993
          %v4010 = vrcp.pop %v3994
          %v4011 = vrcp.pop %v3995
          %v4012 = vld [vmem:[%s3542] sm:$0xff]
          %v4013 = vld [vmem:[%s3542 + $0x8] sm:$0xff]
          %v4014 = vld [vmem:[%s3542 + $0x10] sm:$0xff]
          %v4015 = vld [vmem:[%s3542 + $0x18] sm:$0xff]
          %v4016 = vld [vmem:[%s3542 + $0x20] sm:$0xff]
          %v4017 = vld [vmem:[%s3542 + $0x28] sm:$0xff]
          %v4018 = vld [vmem:[%s3542 + $0x30] sm:$0xff]
          %v4019 = vld [vmem:[%s3542 + $0x38] sm:$0xff]
          %v4020 = vld [vmem:[%s3542 + $0x40] sm:$0xff]
          %v4021 = vld [vmem:[%s3542 + $0x48] sm:$0xff]
          %v4022 = vld [vmem:[%s3542 + $0x50] sm:$0xff]
          %v4023 = vld [vmem:[%s3542 + $0x58] sm:$0xff]
          %v4024 = vld [vmem:[%s3542 + $0x60] sm:$0xff]
          %v4025 = vld [vmem:[%s3542 + $0x68] sm:$0xff]
          %v4026 = vld [vmem:[%s3542 + $0x70] sm:$0xff]
          %v4027 = vld [vmem:[%s3542 + $0x78] sm:$0xff]
          %4029 = vset.pattern.permute.xlu0 0
          %4030 = vperm.xlu0 %4029, %v3996
          %v4031 = vpop.permute.xlu0 %4030
          %4034 = vset.pattern.permute.xlu0 0
          %4035 = vperm.xlu0 %4034, %v3997
          %v4036 = vpop.permute.xlu0 %4035
          %4039 = vset.pattern.permute.xlu0 0
          %4040 = vperm.xlu0 %4039, %v3998
          %v4041 = vpop.permute.xlu0 %4040
          %4044 = vset.pattern.permute.xlu0 0
          %4045 = vperm.xlu0 %4044, %v3999
          %v4046 = vpop.permute.xlu0 %4045
          %4049 = vset.pattern.permute.xlu0 0
          %4050 = vperm.xlu0 %4049, %v4000
          %v4051 = vpop.permute.xlu0 %4050
          %4054 = vset.pattern.permute.xlu0 0
          %4055 = vperm.xlu0 %4054, %v4001
          %v4056 = vpop.permute.xlu0 %4055
          %4059 = vset.pattern.permute.xlu0 0
          %4060 = vperm.xlu0 %4059, %v4002
          %v4061 = vpop.permute.xlu0 %4060
          %4064 = vset.pattern.permute.xlu0 0
          %4065 = vperm.xlu0 %4064, %v4003
          %v4066 = vpop.permute.xlu0 %4065
          %4069 = vset.pattern.permute.xlu0 0
          %4070 = vperm.xlu0 %4069, %v4004
          %v4071 = vpop.permute.xlu0 %4070
          %4074 = vset.pattern.permute.xlu0 0
          %4075 = vperm.xlu0 %4074, %v4005
          %v4076 = vpop.permute.xlu0 %4075
          %4079 = vset.pattern.permute.xlu0 0
          %4080 = vperm.xlu0 %4079, %v4006
          %v4081 = vpop.permute.xlu0 %4080
          %4084 = vset.pattern.permute.xlu0 0
          %4085 = vperm.xlu0 %4084, %v4007
          %v4086 = vpop.permute.xlu0 %4085
          %4089 = vset.pattern.permute.xlu0 0
          %4090 = vperm.xlu0 %4089, %v4008
          %v4091 = vpop.permute.xlu0 %4090
          %4094 = vset.pattern.permute.xlu0 0
          %4095 = vperm.xlu0 %4094, %v4009
          %v4096 = vpop.permute.xlu0 %4095
          %4099 = vset.pattern.permute.xlu0 0
          %4100 = vperm.xlu0 %4099, %v4010
          %v4101 = vpop.permute.xlu0 %4100
          %4104 = vset.pattern.permute.xlu0 0
          %4105 = vperm.xlu0 %4104, %v4011
          %v4106 = vpop.permute.xlu0 %4105
          %v4108 = vmul.f32 %v4012, %v4031
          %v4109 = vmul.f32 %v4013, %v4036
          %v4110 = vmul.f32 %v4014, %v4041
          %v4111 = vmul.f32 %v4015, %v4046
          %v4112 = vmul.f32 %v4016, %v4051
          %v4113 = vmul.f32 %v4017, %v4056
          %v4114 = vmul.f32 %v4018, %v4061
          %v4115 = vmul.f32 %v4019, %v4066
          %v4116 = vmul.f32 %v4020, %v4071
          %v4117 = vmul.f32 %v4021, %v4076
          %v4118 = vmul.f32 %v4022, %v4081
          %v4119 = vmul.f32 %v4023, %v4086
          %v4120 = vmul.f32 %v4024, %v4091
          %v4121 = vmul.f32 %v4025, %v4096
          %v4122 = vmul.f32 %v4026, %v4101
          %v4123 = vmul.f32 %v4027, %v4106
          %v4124 = vpack.c.bf16 %v3965, %v3964
          %v4125 = vpack.c.bf16 %v4109, %v4108
          %v4126 = vpack.c.bf16 %v3967, %v3966
          %v4127 = vpack.c.bf16 %v4111, %v4110
          %v4128 = vpack.c.bf16 %v3969, %v3968
          %v4129 = vpack.c.bf16 %v4113, %v4112
          %v4130 = vpack.c.bf16 %v3971, %v3970
          %v4131 = vpack.c.bf16 %v4115, %v4114
          %v4132 = vpack.c.bf16 %v3973, %v3972
          %v4133 = vpack.c.bf16 %v4117, %v4116
          %v4134 = vpack.c.bf16 %v3975, %v3974
          %v4135 = vpack.c.bf16 %v4119, %v4118
          %v4136 = vpack.c.bf16 %v3977, %v3976
          %v4137 = vpack.c.bf16 %v4121, %v4120
          %v4138 = vpack.c.bf16 %v3979, %v3978
          %v4139 = vpack.c.bf16 %v4123, %v4122
          %v4156 = vunpack.c.l.b16 %v4124
          %v4157 = vunpack.c.l.b16 %v4125
          %v4158 = vunpack.c.h.b16 %v4124
          %v4159 = vunpack.c.h.b16 %v4125
          %v4160 = vunpack.c.l.b16 %v4126
          %v4161 = vunpack.c.l.b16 %v4127
          %v4162 = vunpack.c.h.b16 %v4126
          %v4163 = vunpack.c.h.b16 %v4127
          %v4164 = vunpack.c.l.b16 %v4128
          %v4165 = vunpack.c.l.b16 %v4129
          %v4166 = vunpack.c.h.b16 %v4128
          %v4167 = vunpack.c.h.b16 %v4129
          %v4168 = vunpack.c.l.b16 %v4130
          %v4169 = vunpack.c.l.b16 %v4131
          %v4170 = vunpack.c.h.b16 %v4130
          %v4171 = vunpack.c.h.b16 %v4131
          %v4172 = vunpack.c.l.b16 %v4132
          %v4173 = vunpack.c.l.b16 %v4133
          %v4174 = vunpack.c.h.b16 %v4132
          %v4175 = vunpack.c.h.b16 %v4133
          %v4176 = vunpack.c.l.b16 %v4134
          %v4177 = vunpack.c.l.b16 %v4135
          %v4178 = vunpack.c.h.b16 %v4134
          %v4179 = vunpack.c.h.b16 %v4135
          %v4180 = vunpack.c.l.b16 %v4136
          %v4181 = vunpack.c.l.b16 %v4137
          %v4182 = vunpack.c.h.b16 %v4136
          %v4183 = vunpack.c.h.b16 %v4137
          %v4184 = vunpack.c.l.b16 %v4138
          %v4185 = vunpack.c.l.b16 %v4139
          %v4186 = vunpack.c.h.b16 %v4138
          %v4187 = vunpack.c.h.b16 %v4139
          %v4188 = vpack.c.b16 %v4157, %v4156
          %v4189 = vpack.c.b16 %v4159, %v4158
          %v4190 = vpack.c.b16 %v4161, %v4160
          %v4191 = vpack.c.b16 %v4163, %v4162
          %v4192 = vpack.c.b16 %v4165, %v4164
          %v4193 = vpack.c.b16 %v4167, %v4166
          %v4194 = vpack.c.b16 %v4169, %v4168
          %v4195 = vpack.c.b16 %v4171, %v4170
          %v4196 = vpack.c.b16 %v4173, %v4172
          %v4197 = vpack.c.b16 %v4175, %v4174
          %v4198 = vpack.c.b16 %v4177, %v4176
          %v4199 = vpack.c.b16 %v4179, %v4178
          %v4200 = vpack.c.b16 %v4181, %v4180
          %v4201 = vpack.c.b16 %v4183, %v4182
          %v4202 = vpack.c.b16 %v4185, %v4184
          %v4203 = vpack.c.b16 %v4187, %v4186
          %4220 = vst [vmem:[%s355] sm:$0xff] %v4188
          %4221 = vst [vmem:[%s355 + $0x8] sm:$0xff] %v4189
          %4222 = vst [vmem:[%s355 + $0x10] sm:$0xff] %v4190
          %4223 = vst [vmem:[%s355 + $0x18] sm:$0xff] %v4191
          %4224 = vst [vmem:[%s355 + $0x20] sm:$0xff] %v4192
          %4225 = vst [vmem:[%s355 + $0x28] sm:$0xff] %v4193
          %4226 = vst [vmem:[%s355 + $0x30] sm:$0xff] %v4194
          %4227 = vst [vmem:[%s355 + $0x38] sm:$0xff] %v4195
          %4228 = vst [vmem:[%s355 + $0x40] sm:$0xff] %v4196
          %4229 = vst [vmem:[%s355 + $0x48] sm:$0xff] %v4197
          %4230 = vst [vmem:[%s355 + $0x50] sm:$0xff] %v4198
          %4231 = vst [vmem:[%s355 + $0x58] sm:$0xff] %v4199
          %4232 = vst [vmem:[%s355 + $0x60] sm:$0xff] %v4200
          %4233 = vst [vmem:[%s355 + $0x68] sm:$0xff] %v4201
          %4234 = vst [vmem:[%s355 + $0x70] sm:$0xff] %v4202
          %4235 = vst [vmem:[%s355 + $0x78] sm:$0xff] %v4203
        $region64: #{tpu_custom_call.1} parent=43 // pred_fallthru
          _
        %s4236 = sand.u32 %s201, 1
        %s4237 = scalar_lea.sflag [#allocation8], %s4236
        %s4238 = sand.u32 %s201, 1
        %s4239 = smul.addr %s4238, 128
        %s4240 = scalar_lea.vmem [#allocation12], %s4239
        // Predicated region
        $region65: #{tpu_custom_call.1} parent=43 // pred_check
          %p4241 = pneg %p211
        $region66: #{tpu_custom_call.1} parent=43 // pred_check_branch
          %4243 = sbr.rel (%p4241) target = $region68
        $region67: #{tpu_custom_call.1} parent=43 // pred_region
          %s4244 = smul.u32 2, %s30
          %s4246 = ssub.s32 2048, 2048
          %4247 = vsyncadd %s4237, %s4246
          %s4248 = smul.addr %s29, 32
          %s4249 = sadd.s32 %s4244, %s4248
          %s4250 = smul.addr %s4249, 64
          %s4251 = scalar_lea.hbm %s6, %s4250
          %s4252 = sshll.u32 %s4240, 4
          %s4253 = int_to_ptr.vmem [resolvable:$true] %s4252
          %4258 = dma.vmem_to_hbm [thread:$0]  %s4253, 2048, %s4251, %s4237, 128, 128, 8
        $region68: #{tpu_custom_call.1} parent=43 // pred_fallthru
          _
      $region44: #{tpu_custom_call.1} parent=5 // pred_fallthru
        _
      %p4259 = scmp.le.s32.totalorder 2, %s19
      // Predicated region
      $region69: #{tpu_custom_call.1} parent=5 // pred_check
        %p4260 = pneg %p4259
      $region70: #{tpu_custom_call.1} parent=5 // pred_check_branch
        %4262 = sbr.rel (%p4260) target = $region72
      $region71: #{tpu_custom_call.1} parent=5 // pred_region
        %s4263 = ssub.s32 %s19, 2
        // Predicated region
        $region73: #{tpu_custom_call.1} parent=71 // pred_check
          %p4264 = pneg %p217
        $region74: #{tpu_custom_call.1} parent=71 // pred_check_branch
          %4266 = sbr.rel (%p4264) target = $region76
        $region75: #{tpu_custom_call.1} parent=71 // pred_region
          %s4267 = sand.u32 %s202, 1
          %s4268 = scalar_lea.sflag [#allocation8], %s4267
          %s4269 = sand.u32 %s202, 1
          %s4270 = smul.addr %s4269, 128
          %s4271 = scalar_lea.vmem [#allocation12], %s4270
          %4272 = dma.done %s4268, 2048
        $region76: #{tpu_custom_call.1} parent=71 // pred_fallthru
          _
      $region72: #{tpu_custom_call.1} parent=5 // pred_fallthru
        _
    $region6: #{tpu_custom_call.1} parent=1 // loop_footer
      %s23 = sadd.s32 1, %s19
    $region7: #{tpu_custom_call.1} parent=1 // loop_footer_branch
      %18 = sbr.rel target = $region3
    $region8: #{tpu_custom_call.1} parent=1 // loop_exit
      _
    %4273 = vsyncpa [#allocation7], 1
    %s4274 = scalar_lea.sflag [#allocation7], 1
    %4275 = vsyncpa %s4274, 1
    %4276 = vsyncpa [#allocation10], 1
    %4277 = vsyncpa [#allocation8], 1
    %s4278 = scalar_lea.sflag [#allocation8], 1
    %4279 = vsyncpa %s4278, 1

</llo_original>
